<compile_context>
chip_gen: v7x
topology: tpu7x:2x2x1
jax: 0.10.0
libtpu: 0.0.40
codegen_flags: <defaults>
</compile_context>

<pallas_src>
import numpy as np
import jax
import jax.numpy as jnp
from jax.experimental import pallas as pl
from jax.experimental.pallas import tpu as pltpu


POOLED = 7                 # cfg.POOLING_SIZE
SPATIAL_SCALE = 1.0 / 16.0
SAMPLING = 2               # TODO(synk): original RCNN_roi_align uses sampling_ratio=0 (adaptive,
                           # data-dependent sample count); fixed sampling_ratio=2 used here.
MASK_SIZE = 27
ROI_BLOCK = 8              # ROIs per grid step -> MXU M dim = 8*49 = 392 (>=256 and /8 aligned)
PAIR_BLOCK = 128           # pairs per grid step in the spatial-mask kernel (lane width)


# ---------------------------------------------------------------------------
# shared helpers (used by the kernel body and by the pure-JAX reference check)
# ---------------------------------------------------------------------------
def _fold_valid(c, size):
    """Clamp a sample coordinate to [0, size-1]; invalid samples (outside [-1, size])
    are pushed to -2 so their triangular hat against any grid point >= 0 is exactly 0.
    This folds the 'valid' mask into the coordinate (saves one (M, H*W) multiply/hat)."""
    valid = (c >= -1.0) & (c <= size)
    return jnp.where(valid, jnp.clip(c, 0.0, size - 1.0), -2.0)


def _hat(c, grid):
    """Triangular bilinear weight of (pre-clamped) coordinate c against an integer grid."""
    return jnp.maximum(0.0, 1.0 - jnp.abs(c - grid))


def _roi_sample_coords(rois):
    """Per-output-bin bilinear sample coordinates.

    rois: (R, 5) [frame, x1, y1, x2, y2] in scaled-image coords.
    returns (R, 49, 4) f32 rows: [ys0, ys1, xs0, xs1] for each pooled bin (p, q).
    """
    x1 = rois[:, 1] * SPATIAL_SCALE
    y1 = rois[:, 2] * SPATIAL_SCALE
    x2 = rois[:, 3] * SPATIAL_SCALE
    y2 = rois[:, 4] * SPATIAL_SCALE
    roi_w = jnp.maximum(x2 - x1, 1.0)
    roi_h = jnp.maximum(y2 - y1, 1.0)
    bin_w = roi_w / POOLED
    bin_h = roi_h / POOLED
    p = jnp.arange(POOLED, dtype=jnp.float32)
    s = (jnp.arange(SAMPLING, dtype=jnp.float32) + 0.5) / SAMPLING
    ys = y1[:, None, None] + (p[None, :, None] + s[None, None, :]) * bin_h[:, None, None]  # (R,7,S)
    xs = x1[:, None, None] + (p[None, :, None] + s[None, None, :]) * bin_w[:, None, None]  # (R,7,S)
    R = rois.shape[0]
    ys_e = jnp.broadcast_to(ys[:, :, None, :], (R, POOLED, POOLED, SAMPLING))
    xs_e = jnp.broadcast_to(xs[:, None, :, :], (R, POOLED, POOLED, SAMPLING))
    out = jnp.concatenate([ys_e, xs_e], axis=-1)
    return out.reshape(R, POOLED * POOLED, 2 * SAMPLING).astype(jnp.float32)


# ---------------------------------------------------------------------------
# Kernel 1: ROI Align as a frame-grouped, ROI-batched MXU matmul
# ---------------------------------------------------------------------------
def roi_align_grouped(fmaps_nchw, rois, block_frame, valid_slots, rb=ROI_BLOCK):
    """ROI Align of `rois` on `fmaps_nchw`, with ROIs grouped & padded per frame.

    fmaps_nchw : (T, C, H, W) f32 base feature maps (NCHW)
    rois       : (R, 5) [frame, x1, y1, x2, y2], sorted by frame
    block_frame: (num_blocks,) int32 frame index of every rb-ROI block (scalar prefetch)
    valid_slots: (R,) int32 padded slot of every real ROI
    returns    : (R, C, 7, 7) f32
    """
    T, C, H, W = fmaps_nchw.shape
    R = rois.shape[0]
    num_blocks = int(block_frame.shape[0])
    r_pad = num_blocks * rb
    m = rb * POOLED * POOLED                  # MXU M dimension per grid step (392 for rb=8)
    hw = H * W
    hf, wf = float(H), float(W)

    # (T, H*W, C): channels-last so C sits on the lane axis; bf16 MXU operand (halves DMA).
    feat = jnp.transpose(fmaps_nchw, (0, 2, 3, 1)).reshape(T, hw, C).astype(jnp.bfloat16)

    # per-output-bin sample coords scattered into frame-padded slots (tiny: 4 floats/bin)
    slots = jnp.asarray(valid_slots, jnp.int32)
    params = _roi_sample_coords(rois)                                           # (R, 49, 4)
    params_pad = jnp.zeros((r_pad, POOLED * POOLED, 2 * SAMPLING), jnp.float32)
    params_pad = params_pad.at[slots].set(params)
    params_pad = params_pad.reshape(r_pad * POOLED * POOLED, 2 * SAMPLING)      # (r_pad*49, 4)

    # flat spatial index -> (h, w) lookup rows; constant block, stays resident in VMEM
    n = jnp.arange(hw, dtype=jnp.int32)
    hw_maps = jnp.stack([(n // W).astype(jnp.float32),
                         (n % W).astype(jnp.float32)])                          # (2, H*W)

    def kernel(bf_ref, params_ref, maps_ref, f_ref, o_ref):
        del bf_ref                                    # only used by the index_maps
        h_map = maps_ref[0:1, :]                      # (1, HW)
        w_map = maps_ref[1:2, :]                      # (1, HW)
        pr = params_ref[...]                          # (M, 4) f32
        # Per-row (M, 1) coordinate prep: cheap, valid-mask folded into the coordinate.
        ys0 = _fold_valid(pr[:, 0:1], hf)
        ys1 = _fold_valid(pr[:, 1:2], hf)
        xs0 = _fold_valid(pr[:, 2:3], wf)
        xs1 = _fold_valid(pr[:, 3:4], wf)
        # Build the sparse (M, HW) interpolation-weight tile on the VPU (never in HBM);
        # elementwise math stays f32 (v5e-safe), only the MXU operands are bf16.
        wy = _hat(ys0, h_map) + _hat(ys1, h_map)      # (M, HW)
        wx = _hat(xs0, w_map) + _hat(xs1, w_map)      # (M, HW)
        wmat = (0.25 * (wy * wx)).astype(jnp.bfloat16)
        o_ref[...] = jnp.dot(wmat, f_ref[0], preferred_element_type=jnp.float32)

    out = pl.pallas_call(
        kernel,
        out_shape=jax.ShapeDtypeStruct((r_pad * POOLED * POOLED, C), jnp.float32),
        grid_spec=pltpu.PrefetchScalarGridSpec(
            num_scalar_prefetch=1,
            grid=(num_blocks,),
            in_specs=[
                pl.BlockSpec((m, 2 * SAMPLING), lambda i, bf: (i, 0)),
                pl.BlockSpec((2, hw), lambda i, bf: (0, 0)),            # resident constant
                pl.BlockSpec((1, hw, C), lambda i, bf: (bf[i], 0, 0)),  # per-frame feature gather;
                                                                        # reused while consecutive
                                                                        # blocks share a frame
            ],
            out_specs=pl.BlockSpec((m, C), lambda i, bf: (i, 0)),
        ),
        compiler_params=pltpu.CompilerParams(
            dimension_semantics=("parallel",),        # distinct output blocks -> shard across TCs (v7x)
            vmem_limit_bytes=48 * 1024 * 1024,        # explicit budget, fits v7x 64 MiB physical
        ),
        # TODO(synk): for extreme (C, H*W) that overflow 48 MiB VMEM, add a channel grid axis
        # (c tile 256/512) with the weight tile cached in VMEM scratch across channel steps.
    )(jnp.asarray(block_frame, jnp.int32), params_pad, hw_maps, feat)

    out = out.reshape(r_pad, POOLED * POOLED, C)[slots]                # (R, 49, C)
    return jnp.transpose(out.reshape(R, POOLED, POOLED, C), (0, 3, 1, 2))


def _roi_align_reference(fmaps_nchw, rois):
    """Plain-JAX f32 dense-weight reference (only for a numerical sanity check)."""
    T, C, H, W = fmaps_nchw.shape
    feat = jnp.transpose(fmaps_nchw, (0, 2, 3, 1)).reshape(T, H * W, C)
    params = _roi_sample_coords(rois)                                  # (R, 49, 4)
    n = jnp.arange(H * W, dtype=jnp.int32)
    hm = (n // W).astype(jnp.float32)[None, None, :]
    wm = (n % W).astype(jnp.float32)[None, None, :]
    wy = (_hat(_fold_valid(params[..., 0:1], float(H)), hm) +
          _hat(_fold_valid(params[..., 1:2], float(H)), hm))
    wx = (_hat(_fold_valid(params[..., 2:3], float(W)), wm) +
          _hat(_fold_valid(params[..., 3:4], float(W)), wm))
    wmat = 0.25 * wy * wx                                              # (R, 49, H*W)
    batch = rois[:, 0].astype(jnp.int32)
    out = jnp.einsum('rpn,rnc->rpc', wmat, feat[batch])
    R = rois.shape[0]
    return jnp.transpose(out.reshape(R, POOLED, POOLED, C), (0, 3, 1, 2))


# ---------------------------------------------------------------------------
# Kernel 2: spatial masks (draw_union_boxes(pair_rois, 27) - 0.5), pair-vectorized
# ---------------------------------------------------------------------------
def _spatial_mask_kernel(rois_ref, o_ref):
    s = float(MASK_SIZE)
    r = rois_ref[...]                                    # (8, PB): coords on sublanes, pairs on lanes
    x1a, y1a, x2a, y2a = r[0:1], r[1:2], r[2:3], r[3:4]
    x1b, y1b, x2b, y2b = r[4:5], r[5:6], r[6:7], r[7:8]
    x1u = jnp.minimum(x1a, x1b)
    y1u = jnp.minimum(y1a, y1b)
    x2u = jnp.maximum(x2a, x2b)
    y2u = jnp.maximum(y2a, y2b)
    # hoisted per-axis scale, guarded against degenerate / zero-padded pairs (no inf/nan).
    sx = s / jnp.maximum(x2u - x1u, 1e-6)                # (1, PB)
    sy = s / jnp.maximum(y2u - y1u, 1e-6)
    gi = jax.lax.broadcasted_iota(jnp.int32, (MASK_SIZE, r.shape[1]), 0).astype(jnp.float32)

    def cov(lo, hi):                                     # per-cell 1-D fractional coverage
        return jnp.clip(jnp.minimum(gi + 1.0, hi) - jnp.maximum(gi, lo), 0.0, 1.0)

    cya = cov((y1a - y1u) * sy, (y2a - y1u) * sy)        # (27, PB)
    cxa = cov((x1a - x1u) * sx, (x2a - x1u) * sx)
    cyb = cov((y1b - y1u) * sy, (y2b - y1u) * sy)
    cxb = cov((x1b - x1u) * sx, (x2b - x1u) * sx)
    o_ref[0] = cya[:, None, :] * cxa[None, :, :] - 0.5   # (27, 27, PB), lane-dense stores
    o_ref[1] = cyb[:, None, :] * cxb[None, :, :] - 0.5


def make_spatial_masks(pair_rois):
    """draw_union_boxes(pair_rois, 27) - 0.5, vectorized over pairs (pair index on lanes)."""
    P = pair_rois.shape[0]
    p_pad = max(PAIR_BLOCK, ((P + PAIR_BLOCK - 1) // PAIR_BLOCK) * PAIR_BLOCK)
    rois_t = jnp.zeros((8, p_pad), jnp.float32).at[:, :P].set(
        jnp.asarray(pair_rois, jnp.float32).T)
    out = pl.pallas_call(
        _spatial_mask_kernel,
        out_shape=jax.ShapeDtypeStruct((2, MASK_SIZE, MASK_SIZE, p_pad), jnp.float32),
        grid=(p_pad // PAIR_BLOCK,),
        in_specs=[pl.BlockSpec((8, PAIR_BLOCK), lambda i: (0, i))],
        out_specs=pl.BlockSpec((2, MASK_SIZE, MASK_SIZE, PAIR_BLOCK), lambda i: (0, 0, 0, i)),
        compiler_params=pltpu.CompilerParams(dimension_semantics=("parallel",)),
    )(rois_t)
    return jnp.transpose(out, (3, 0, 1, 2))[:P]          # (P, 2, 27, 27)


# ---------------------------------------------------------------------------
# pair_maker forward (host glue + Pallas kernels)
# ---------------------------------------------------------------------------
class PairMaker:
    """Forward-pass equivalent of the PyTorch `pair_maker` module (mode='predcls')."""

    def __init__(self, mode='predcls'):
        self.mode = mode
        # No learnable parameters are used by this forward path (ROI Align is parameter-free;
        # the fasterRCNN / RCNN_Head weights loaded in the original __init__ are never used).

    def __call__(self, gt_annotation, entry):
        im_info = np.asarray(entry['im_info'], np.float32)
        bbox_num = sum(len(j) for j in gt_annotation)
        num_frames = len(gt_annotation)

        FINAL_BBOXES = np.zeros([bbox_num, 5], np.float32)
        FINAL_LABELS = np.zeros([bbox_num], np.int64)
        FINAL_SCORES = np.ones([bbox_num], np.float32)
        HUMAN_IDX = np.zeros([num_frames, 1], np.int64)
        im_idx = []
        pair = []
        bbox_idx = 0
        # TODO(synk): host-side dict/annotation bookkeeping loop has no Pallas equivalent.
        for i, j in enumerate(gt_annotation):
            for m in j:
                if 'person_bbox' in m:
                    FINAL_BBOXES[bbox_idx, 1:] = m['person_bbox'][0]
                    FINAL_BBOXES[bbox_idx, 0] = i
                    FINAL_LABELS[bbox_idx] = 0
                    HUMAN_IDX[i] = bbox_idx
                    bbox_idx += 1
                else:
                    FINAL_BBOXES[bbox_idx, 1:] = m['bbox']
                    FINAL_BBOXES[bbox_idx, 0] = i
                    FINAL_LABELS[bbox_idx] = m['class']
                    im_idx.append(i)
                    pair.append([int(HUMAN_IDX[i, 0]), bbox_idx])
                    bbox_idx += 1

        pair = np.asarray(pair, np.int64)
        im_idx_np = np.asarray(im_idx, np.float32)
        scale = float(im_info[0, 2])

        fmaps = jnp.asarray(entry['fmaps'], jnp.float32)              # (T, C, H, W), NCHW
        _ = jnp.asarray(entry['features'], jnp.float32)               # only used for device placement originally

        bboxes_scaled = jnp.asarray(FINAL_BBOXES)
        bboxes_scaled = bboxes_scaled.at[:, 1:].multiply(scale)       # FINAL_BBOXES[:,1:] * im_info[0,2]

        entry = dict(entry)
        if self.mode == 'predcls':
            boxes_a = bboxes_scaled[pair[:, 0]]
            boxes_b = bboxes_scaled[pair[:, 1]]
            # union boxes: trivially elementwise -> plain JAX (a dedicated Pallas kernel
            # here is pure launch overhead).
            union_boxes = jnp.concatenate(
                [jnp.asarray(im_idx_np)[:, None],
                 jnp.minimum(boxes_a[:, 1:3], boxes_b[:, 1:3]),
                 jnp.maximum(boxes_a[:, 3:5], boxes_b[:, 3:5])], axis=1)

            # --- host-side (numpy) frame grouping for the batched ROI-Align kernel ---
            # pairs are emitted frame-by-frame, so ROIs are already sorted by frame,
            # which lets the kernel reuse each frame's feature-block DMA.
            assert im_idx_np.size == 0 or bool(np.all(np.diff(im_idx_np) >= 0)), \
                "ROIs must be sorted by frame"
            counts = np.bincount(im_idx_np.astype(np.int64), minlength=num_frames)
            blocks_per_frame = -(-counts // ROI_BLOCK)                # ceil
            block_frame = np.repeat(np.arange(num_frames), blocks_per_frame).astype(np.int32)
            slot_offset = np.concatenate([[0], np.cumsum(blocks_per_frame)]) * ROI_BLOCK
            valid_slots = np.concatenate(
                [slot_offset[t] + np.arange(counts[t]) for t in range(num_frames)]
            ).astype(np.int32)

            union_feat = roi_align_grouped(fmaps, union_boxes, block_frame, valid_slots)

            # pair_rois in un-scaled image coords (original divides the scale back out)
            pair_rois = np.concatenate(
                (FINAL_BBOXES[pair[:, 0], 1:], FINAL_BBOXES[pair[:, 1], 1:]), axis=1
            ).astype(np.float32)
            spatial_masks = make_spatial_masks(pair_rois)

            entry['im_idx'] = jnp.asarray(im_idx_np)
            entry['pair_idx'] = jnp.asarray(pair)
            entry['human_idx'] = jnp.asarray(HUMAN_IDX)
            entry['union_feat'] = union_feat
            entry['union_box'] = union_boxes
            entry['spatial_masks'] = spatial_masks
        return entry


if __name__ == "__main__":
    key = jax.random.PRNGKey(0)
    k1, k2 = jax.random.split(key)

    T, C, H, W = 2, 8, 16, 16                     # small shapes, NCHW feature maps
    fmaps = jax.random.normal(k1, (T, C, H, W), dtype=jnp.float32)
    features = jax.random.normal(k2, (6, 32), dtype=jnp.float32)
    im_info = np.array([[256.0, 256.0, 1.25]], dtype=np.float32)

    gt_annotation = [
        [
            {'person_bbox': np.array([[10.0, 20.0, 110.0, 180.0]], dtype=np.float32)},
            {'bbox': np.array([30.0, 40.0, 120.0, 160.0], dtype=np.float32), 'class': 5},
            {'bbox': np.array([5.0, 60.0, 90.0, 200.0], dtype=np.float32), 'class': 9},
        ],
        [
            {'person_bbox': np.array([[15.0, 25.0, 120.0, 190.0]], dtype=np.float32)},
            {'bbox': np.array([50.0, 30.0, 140.0, 150.0], dtype=np.float32), 'class': 3},
            {'bbox': np.array([20.0, 70.0, 100.0, 195.0], dtype=np.float32), 'class': 7},
        ],
    ]
    entry = {'im_info': im_info, 'fmaps': fmaps, 'features': features}

    pm = PairMaker(mode='predcls')
    out = pm(gt_annotation, entry)
    jax.block_until_ready((out['union_feat'], out['union_box'], out['spatial_masks']))

    assert out['union_box'].shape == (4, 5)
    assert out['union_feat'].shape == (4, C, POOLED, POOLED)
    assert out['spatial_masks'].shape == (4, 2, MASK_SIZE, MASK_SIZE)
    assert bool(jnp.all(jnp.isfinite(out['union_feat'])))
    assert bool(jnp.all(jnp.abs(out['spatial_masks']) <= 0.5 + 1e-5))

    # sanity check of the Pallas ROI-Align vs a plain-JAX f32 reference
    # (kernel uses bf16 MXU operands -> loose absolute tolerance)
    ref = _roi_align_reference(fmaps, out['union_box'])
    assert bool(jnp.all(jnp.abs(out['union_feat'] - ref) < 1e-1)), "ROI-Align mismatch vs reference"

    print("KERNEL_OK")
</pallas_src>

<mosaic_0001>
module attributes {stable_mosaic.version = 11 : i64} {
  func.func @kernel(%arg0: i32, %arg1: memref<2xi32, #tpu.memory_space<smem>>, %arg2: memref<392x4xf32, #tpu.memory_space<vmem>>, %arg3: memref<2x256xf32, #tpu.memory_space<vmem>>, %arg4: memref<1x256x8xbf16, #tpu.memory_space<vmem>>, %arg5: memref<392x8xf32, #tpu.memory_space<vmem>>) attributes {dimension_semantics = [#tpu.dimension_semantics<parallel>], iteration_bounds = array<i64: 2>, scalar_prefetch = 1 : i64, scratch_operands = 0 : i64, tpu.core_type = #tpu.core_type<tc>, window_params = [{transform_indices = @transform_0, window_bounds = array<i64: 392, 4>}, {pipeline_mode = #tpu.pipeline_mode<synchronous>, transform_indices = @transform_1, window_bounds = array<i64: 2, 256>}, {transform_indices = @transform_2, window_bounds = array<i64: 1, 256, 8>}, {transform_indices = @transform_3, window_bounds = array<i64: 392, 8>}]} {
    %c0 = arith.constant 0 : index
    %c0_0 = arith.constant 0 : index
    %0 = vector.load %arg3[%c0, %c0_0] : memref<2x256xf32, #tpu.memory_space<vmem>>, vector<1x256xf32>
    %c1 = arith.constant 1 : index
    %c0_1 = arith.constant 0 : index
    %1 = vector.load %arg3[%c1, %c0_1] : memref<2x256xf32, #tpu.memory_space<vmem>>, vector<1x256xf32>
    %c0_2 = arith.constant 0 : index
    %c0_3 = arith.constant 0 : index
    %2 = vector.load %arg2[%c0_2, %c0_3] : memref<392x4xf32, #tpu.memory_space<vmem>>, vector<392x4xf32>
    %3 = vector.extract_strided_slice %2 {offsets = [0, 0], sizes = [392, 1], strides = [1, 1]} : vector<392x4xf32> to vector<392x1xf32>
    %cst = arith.constant -1.000000e+00 : f32
    %4 = vector.broadcast %cst : f32 to vector<392x1xf32>
    %5 = arith.cmpf oge, %3, %4 : vector<392x1xf32>
    %cst_4 = arith.constant 1.600000e+01 : f32
    %6 = vector.broadcast %cst_4 : f32 to vector<392x1xf32>
    %7 = arith.cmpf ole, %3, %6 : vector<392x1xf32>
    %8 = arith.andi %5, %7 : vector<392x1xi1>
    %cst_5 = arith.constant 0.000000e+00 : f32
    %cst_6 = arith.constant 1.500000e+01 : f32
    %9 = vector.broadcast %cst_5 : f32 to vector<392x1xf32>
    %10 = arith.maximumf %9, %3 : vector<392x1xf32>
    %11 = vector.broadcast %cst_6 : f32 to vector<392x1xf32>
    %12 = arith.minimumf %11, %10 : vector<392x1xf32>
    %cst_7 = arith.constant -2.000000e+00 : f32
    %13 = vector.broadcast %cst_7 : f32 to vector<392x1xf32>
    %14 = arith.select %8, %12, %13 : vector<392x1xi1>, vector<392x1xf32>
    %15 = vector.extract_strided_slice %2 {offsets = [0, 1], sizes = [392, 1], strides = [1, 1]} : vector<392x4xf32> to vector<392x1xf32>
    %cst_8 = arith.constant -1.000000e+00 : f32
    %16 = vector.broadcast %cst_8 : f32 to vector<392x1xf32>
    %17 = arith.cmpf oge, %15, %16 : vector<392x1xf32>
    %cst_9 = arith.constant 1.600000e+01 : f32
    %18 = vector.broadcast %cst_9 : f32 to vector<392x1xf32>
    %19 = arith.cmpf ole, %15, %18 : vector<392x1xf32>
    %20 = arith.andi %17, %19 : vector<392x1xi1>
    %cst_10 = arith.constant 0.000000e+00 : f32
    %cst_11 = arith.constant 1.500000e+01 : f32
    %21 = vector.broadcast %cst_10 : f32 to vector<392x1xf32>
    %22 = arith.maximumf %21, %15 : vector<392x1xf32>
    %23 = vector.broadcast %cst_11 : f32 to vector<392x1xf32>
    %24 = arith.minimumf %23, %22 : vector<392x1xf32>
    %cst_12 = arith.constant -2.000000e+00 : f32
    %25 = vector.broadcast %cst_12 : f32 to vector<392x1xf32>
    %26 = arith.select %20, %24, %25 : vector<392x1xi1>, vector<392x1xf32>
    %27 = vector.extract_strided_slice %2 {offsets = [0, 2], sizes = [392, 1], strides = [1, 1]} : vector<392x4xf32> to vector<392x1xf32>
    %cst_13 = arith.constant -1.000000e+00 : f32
    %28 = vector.broadcast %cst_13 : f32 to vector<392x1xf32>
    %29 = arith.cmpf oge, %27, %28 : vector<392x1xf32>
    %cst_14 = arith.constant 1.600000e+01 : f32
    %30 = vector.broadcast %cst_14 : f32 to vector<392x1xf32>
    %31 = arith.cmpf ole, %27, %30 : vector<392x1xf32>
    %32 = arith.andi %29, %31 : vector<392x1xi1>
    %cst_15 = arith.constant 0.000000e+00 : f32
    %cst_16 = arith.constant 1.500000e+01 : f32
    %33 = vector.broadcast %cst_15 : f32 to vector<392x1xf32>
    %34 = arith.maximumf %33, %27 : vector<392x1xf32>
    %35 = vector.broadcast %cst_16 : f32 to vector<392x1xf32>
    %36 = arith.minimumf %35, %34 : vector<392x1xf32>
    %cst_17 = arith.constant -2.000000e+00 : f32
    %37 = vector.broadcast %cst_17 : f32 to vector<392x1xf32>
    %38 = arith.select %32, %36, %37 : vector<392x1xi1>, vector<392x1xf32>
    %39 = vector.extract_strided_slice %2 {offsets = [0, 3], sizes = [392, 1], strides = [1, 1]} : vector<392x4xf32> to vector<392x1xf32>
    %cst_18 = arith.constant -1.000000e+00 : f32
    %40 = vector.broadcast %cst_18 : f32 to vector<392x1xf32>
    %41 = arith.cmpf oge, %39, %40 : vector<392x1xf32>
    %cst_19 = arith.constant 1.600000e+01 : f32
    %42 = vector.broadcast %cst_19 : f32 to vector<392x1xf32>
    %43 = arith.cmpf ole, %39, %42 : vector<392x1xf32>
    %44 = arith.andi %41, %43 : vector<392x1xi1>
    %cst_20 = arith.constant 0.000000e+00 : f32
    %cst_21 = arith.constant 1.500000e+01 : f32
    %45 = vector.broadcast %cst_20 : f32 to vector<392x1xf32>
    %46 = arith.maximumf %45, %39 : vector<392x1xf32>
    %47 = vector.broadcast %cst_21 : f32 to vector<392x1xf32>
    %48 = arith.minimumf %47, %46 : vector<392x1xf32>
    %cst_22 = arith.constant -2.000000e+00 : f32
    %49 = vector.broadcast %cst_22 : f32 to vector<392x1xf32>
    %50 = arith.select %44, %48, %49 : vector<392x1xi1>, vector<392x1xf32>
    %51 = vector.broadcast %14 : vector<392x1xf32> to vector<392x256xf32>
    %52 = vector.broadcast %0 : vector<1x256xf32> to vector<392x256xf32>
    %53 = arith.subf %51, %52 : vector<392x256xf32>
    %54 = math.absf %53 : vector<392x256xf32>
    %cst_23 = arith.constant 1.000000e+00 : f32
    %55 = vector.broadcast %cst_23 : f32 to vector<392x256xf32>
    %56 = arith.subf %55, %54 : vector<392x256xf32>
    %cst_24 = arith.constant 0.000000e+00 : f32
    %57 = vector.broadcast %cst_24 : f32 to vector<392x256xf32>
    %58 = arith.maximumf %57, %56 : vector<392x256xf32>
    %59 = vector.broadcast %26 : vector<392x1xf32> to vector<392x256xf32>
    %60 = vector.broadcast %0 : vector<1x256xf32> to vector<392x256xf32>
    %61 = arith.subf %59, %60 : vector<392x256xf32>
    %62 = math.absf %61 : vector<392x256xf32>
    %cst_25 = arith.constant 1.000000e+00 : f32
    %63 = vector.broadcast %cst_25 : f32 to vector<392x256xf32>
    %64 = arith.subf %63, %62 : vector<392x256xf32>
    %cst_26 = arith.constant 0.000000e+00 : f32
    %65 = vector.broadcast %cst_26 : f32 to vector<392x256xf32>
    %66 = arith.maximumf %65, %64 : vector<392x256xf32>
    %67 = arith.addf %58, %66 : vector<392x256xf32>
    %68 = vector.broadcast %38 : vector<392x1xf32> to vector<392x256xf32>
    %69 = vector.broadcast %1 : vector<1x256xf32> to vector<392x256xf32>
    %70 = arith.subf %68, %69 : vector<392x256xf32>
    %71 = math.absf %70 : vector<392x256xf32>
    %cst_27 = arith.constant 1.000000e+00 : f32
    %72 = vector.broadcast %cst_27 : f32 to vector<392x256xf32>
    %73 = arith.subf %72, %71 : vector<392x256xf32>
    %cst_28 = arith.constant 0.000000e+00 : f32
    %74 = vector.broadcast %cst_28 : f32 to vector<392x256xf32>
    %75 = arith.maximumf %74, %73 : vector<392x256xf32>
    %76 = vector.broadcast %50 : vector<392x1xf32> to vector<392x256xf32>
    %77 = vector.broadcast %1 : vector<1x256xf32> to vector<392x256xf32>
    %78 = arith.subf %76, %77 : vector<392x256xf32>
    %79 = math.absf %78 : vector<392x256xf32>
    %cst_29 = arith.constant 1.000000e+00 : f32
    %80 = vector.broadcast %cst_29 : f32 to vector<392x256xf32>
    %81 = arith.subf %80, %79 : vector<392x256xf32>
    %cst_30 = arith.constant 0.000000e+00 : f32
    %82 = vector.broadcast %cst_30 : f32 to vector<392x256xf32>
    %83 = arith.maximumf %82, %81 : vector<392x256xf32>
    %84 = arith.addf %75, %83 : vector<392x256xf32>
    %85 = arith.mulf %67, %84 : vector<392x256xf32>
    %cst_31 = arith.constant 2.500000e-01 : f32
    %86 = vector.broadcast %cst_31 : f32 to vector<392x256xf32>
    %87 = arith.mulf %86, %85 : vector<392x256xf32>
    %88 = arith.truncf %87 : vector<392x256xf32> to vector<392x256xbf16>
    %c0_32 = arith.constant 0 : index
    %c0_33 = arith.constant 0 : index
    %c0_34 = arith.constant 0 : index
    %89 = vector.load %arg4[%c0_32, %c0_33, %c0_34] : memref<1x256x8xbf16, #tpu.memory_space<vmem>>, vector<1x256x8xbf16>
    %90 = vector.shape_cast %89 : vector<1x256x8xbf16> to vector<256x8xbf16>
    %cst_35 = arith.constant dense<0.000000e+00> : vector<392x8xf32>
    %91 = tpu.matmul %88, %90, %cst_35 {dimension_numbers = #tpu.dot_dimension_numbers<[1], [0], [0], [1], [0, 0, 1, 1], [], []>} : vector<392x256xbf16>, vector<256x8xbf16>, vector<392x8xf32> -> vector<392x8xf32>
    %c0_36 = arith.constant 0 : index
    %c0_37 = arith.constant 0 : index
    %92 = vector.load %arg5[%c0_36, %c0_37] : memref<392x8xf32, #tpu.memory_space<vmem>>, vector<392x8xf32>
    tpu.vector_store %arg5[%c0_36, %c0_37], %91 {strides = array<i32>} : memref<392x8xf32, #tpu.memory_space<vmem>>, vector<392x8xf32>,
    return
  }
  func.func @transform_0(%arg0: i32, %arg1: memref<2xi32, #tpu.memory_space<smem>>) -> (i32, i32) {
    %c0_i32 = arith.constant 0 : i32
    %c0_i32_0 = arith.constant 0 : i32
    return %arg0, %c0_i32 : i32, i32
  }
  func.func @transform_1(%arg0: i32, %arg1: memref<2xi32, #tpu.memory_space<smem>>) -> (i32, i32) {
    %c0_i32 = arith.constant 0 : i32
    %c0_i32_0 = arith.constant 0 : i32
    %c0_i32_1 = arith.constant 0 : i32
    return %c0_i32, %c0_i32_0 : i32, i32
  }
  func.func @transform_2(%arg0: i32, %arg1: memref<2xi32, #tpu.memory_space<smem>>) -> (i32, i32, i32) {
    %0 = arith.index_cast %arg0 : i32 to index
    %1 = memref.load %arg1[%0] : memref<2xi32, #tpu.memory_space<smem>>
    %c0_i32 = arith.constant 0 : i32
    %c0_i32_0 = arith.constant 0 : i32
    %c0_i32_1 = arith.constant 0 : i32
    return %1, %c0_i32, %c0_i32_0 : i32, i32, i32
  }
  func.func @transform_3(%arg0: i32, %arg1: memref<2xi32, #tpu.memory_space<smem>>) -> (i32, i32) {
    %c0_i32 = arith.constant 0 : i32
    %c0_i32_0 = arith.constant 0 : i32
    return %arg0, %c0_i32 : i32, i32
  }
}

</mosaic_0001>

<llo_original>
// kernel: tpu_custom_call.1
$region0: #{tpu_custom_call.1}
  #allocation0 [shape = 'u32[]', space=smem, size = 0x4, offset = 0x4, fixed_abs, tag = 'smem constant byte address 0x4 - core index']
  #allocation1 [shape = 'u32[144,128]{1,0:T(1,128)}', space=vmem, size = 0x12000, scoped, tag = 'internal scratch']
  #allocation2 [shape = 's32[1]{0}', space=sflag, size = 0x4, scoped, tag = 'scoped memory for tpu_custom_call.1']
  #allocation3 [shape = 'u8[512]{0}', space=smem, size = 0x200, scoped, tag = 'prefetched SMEM operand 0']
  %s0 = inlined_call_operand.vmem [shape: s32[2], index: 0, kind: input, shape index: {}]
  %s1 = inlined_call_operand.vmem [shape: f32[784,4], index: 1, kind: input, shape index: {}]
  %s2 = inlined_call_operand.vmem [shape: f32[2,256], index: 2, kind: input, shape index: {}]
  %s3 = inlined_call_operand.vmem [shape: bf16[2,256,8], index: 3, kind: input, shape index: {}]
  %s4 = inlined_call_operand.vmem [shape: f32[784,8], index: 4, kind: output, shape index: {}]
  %s5 = sld [smem:[#allocation0]]
  $region45: #{tpu_custom_call.1} parent=0
    _
  %s7 = ssub.s32 1, %s5
  %s8 = scalar_select 0, %s7, %s5
  %s9 = sshll.u32 %s0, 4
  %s10 = int_to_ptr.vmem [resolvable:$true] %s9
  %12 = dma.vmem_to_smem %s10, 16, [#allocation3], [#allocation2]
  %13 = dma.done [#allocation2], 16
  %14 = sfence
  loop: start=0, step=1, limit=4
  $region2: #{tpu_custom_call.1} parent=0 // loop_pre_header
    _
  $region3: #{tpu_custom_call.1} parent=0 // loop_header
    %s16 = sphi 0, %s20
    %p17 = scmp.ge.s32.totalorder %s16, 4
    %s26 = sphi 0, %s28
    %s29 = sphi 0, %s26
    %s30 = sphi 0, %s29
    %s46 = sphi 0, %s30
    %s50 = sphi 0, %s50
    %s52 = sphi 0, %s50
    %s53 = sphi 0, %s52
    %s67 = sphi 0, %s53
    %s75 = sphi 0, %s77
    %s78 = sphi 0, %s75
    %s79 = sphi 0, %s78
    %s95 = sphi 0, %s79
    %s101 = sphi 0, %s103
    %s104 = sphi 0, %s101
    %s105 = sphi 0, %s104
    %s121 = sphi 0, %s105
  $region4: #{tpu_custom_call.1} parent=0 // loop_header_branch
    %19 = sbr.rel (%p17) target = $region8
  $region5: #{tpu_custom_call.1} parent=0 // loop_body
    %s21 = ssub.s32 %s16, 1
    %s22 = ssub.s32 %s16, 2
    %s23 = sadd.s32 %s16, 1
    %s24 = ssub.s32 %s16, %s23
    %p25 = scmp.eq.s32.totalorder %s24, 0
    %s27 = sadd.s32 %s26, 1
    %s28 = scalar_select %p25, %s26, %s27
    %p31 = pneg %p25
    %p32 = scmp.eq.s32.totalorder %s16, 1
    %p33 = por %p31, %p32
    %p34 = scmp.ne.s32.totalorder %s26, %s29
    %p35 = scmp.eq.s32.totalorder %s16, 0
    %p36 = por %p34, %p35
    %p37 = scmp.ne.s32.totalorder %s26, %s29
    %p38 = scmp.eq.s32.totalorder %s21, 1
    %p39 = por %p37, %p38
    %p40 = scmp.ne.s32.totalorder %s29, %s30
    %p41 = scmp.eq.s32.totalorder %s21, 0
    %p42 = por %p40, %p41
    %p43 = scmp.ne.s32.totalorder %s29, %s30
    %p44 = scmp.eq.s32.totalorder %s22, 1
    %p45 = por %p43, %p44
    %p47 = scmp.ne.s32.totalorder %s30, %s46
    %p48 = scmp.eq.s32.totalorder %s22, 0
    %p49 = por %p47, %p48
    %s51 = sadd.s32 %s50, 1
    %p54 = scmp.eq.s32.totalorder %s16, 1
    %p55 = scmp.ne.s32.totalorder %s50, %s52
    %p56 = scmp.eq.s32.totalorder %s16, 0
    %p57 = por %p55, %p56
    %p58 = scmp.ne.s32.totalorder %s50, %s52
    %p59 = scmp.eq.s32.totalorder %s21, 1
    %p60 = por %p58, %p59
    %p61 = scmp.ne.s32.totalorder %s52, %s53
    %p62 = scmp.eq.s32.totalorder %s21, 0
    %p63 = por %p61, %p62
    %p64 = scmp.ne.s32.totalorder %s52, %s53
    %p65 = scmp.eq.s32.totalorder %s22, 1
    %p66 = por %p64, %p65
    %p68 = scmp.ne.s32.totalorder %s53, %s67
    %p69 = scmp.eq.s32.totalorder %s22, 0
    %p70 = por %p68, %p69
    %s71 = sld [smem:[#allocation3 + %s16]]
    %s72 = sld [smem:[#allocation3 + %s23]]
    %s73 = ssub.s32 %s71, %s72
    %p74 = scmp.eq.s32.totalorder %s73, 0
    %s76 = sadd.s32 %s75, 1
    %s77 = scalar_select %p74, %s75, %s76
    %p80 = pneg %p74
    %p81 = scmp.eq.s32.totalorder %s16, 1
    %p82 = por %p80, %p81
    %p83 = scmp.ne.s32.totalorder %s75, %s78
    %p84 = scmp.eq.s32.totalorder %s16, 0
    %p85 = por %p83, %p84
    %p86 = scmp.ne.s32.totalorder %s75, %s78
    %p87 = scmp.eq.s32.totalorder %s21, 1
    %p88 = por %p86, %p87
    %p89 = scmp.ne.s32.totalorder %s78, %s79
    %p90 = scmp.eq.s32.totalorder %s21, 0
    %p91 = por %p89, %p90
    %p92 = scmp.ne.s32.totalorder %s78, %s79
    %p93 = scmp.eq.s32.totalorder %s22, 1
    %p94 = por %p92, %p93
    %p96 = scmp.ne.s32.totalorder %s79, %s95
    %p97 = scmp.eq.s32.totalorder %s22, 0
    %p98 = por %p96, %p97
    %s99 = ssub.s32 %s16, %s23
    %p100 = scmp.eq.s32.totalorder %s99, 0
    %s102 = sadd.s32 %s101, 1
    %s103 = scalar_select %p100, %s101, %s102
    %p106 = pneg %p100
    %p107 = scmp.eq.s32.totalorder %s16, 1
    %p108 = por %p106, %p107
    %p109 = scmp.ne.s32.totalorder %s101, %s104
    %p110 = scmp.eq.s32.totalorder %s16, 0
    %p111 = por %p109, %p110
    %p112 = scmp.ne.s32.totalorder %s101, %s104
    %p113 = scmp.eq.s32.totalorder %s21, 1
    %p114 = por %p112, %p113
    %p115 = scmp.ne.s32.totalorder %s104, %s105
    %p116 = scmp.eq.s32.totalorder %s21, 0
    %p117 = por %p115, %p116
    %p118 = scmp.ne.s32.totalorder %s104, %s105
    %p119 = scmp.eq.s32.totalorder %s22, 1
    %p120 = por %p118, %p119
    %p122 = scmp.ne.s32.totalorder %s105, %s121
    %p123 = scmp.eq.s32.totalorder %s22, 0
    %p124 = por %p122, %p123
    %p125 = scmp.le.s32.totalorder 1, %s16
    %p126 = scmp.lt.s32.totalorder %s16, 3
    %p127 = pnand %p125, %p126
    %p128 = pneg %p127
    // Predicated region
    $region9: #{tpu_custom_call.1} parent=5 // pred_check
      _
    $region10: #{tpu_custom_call.1} parent=5 // pred_check_branch
      %130 = sbr.rel (%p127) target = $region12
    $region11: #{tpu_custom_call.1} parent=5 // pred_region
      %s131 = ssub.s32 %s16, 1
      // Predicated region
      $region13: #{tpu_custom_call.1} parent=11 // pred_check
        %p132 = pneg %p63
      $region14: #{tpu_custom_call.1} parent=11 // pred_check_branch
        %134 = sbr.rel (%p132) target = $region16
      $region15: #{tpu_custom_call.1} parent=11 // pred_region
        _
      $region16: #{tpu_custom_call.1} parent=11 // pred_fallthru
        _
    $region12: #{tpu_custom_call.1} parent=5 // pred_fallthru
      _
    %p135 = scmp.lt.s32.totalorder %s16, 2
    // Predicated region
    $region17: #{tpu_custom_call.1} parent=5 // pred_check
      %p136 = pneg %p135
    $region18: #{tpu_custom_call.1} parent=5 // pred_check_branch
      %138 = sbr.rel (%p136) target = $region20
    $region19: #{tpu_custom_call.1} parent=5 // pred_region
      // Predicated region
      $region21: #{tpu_custom_call.1} parent=19 // pred_check
        %p139 = pneg %p36
      $region22: #{tpu_custom_call.1} parent=19 // pred_check_branch
        %141 = sbr.rel (%p139) target = $region24
      $region23: #{tpu_custom_call.1} parent=19 // pred_region
        %s142 = smul.u32 49, %s16
        %p143 = scmp.lt.s32.totalorder %s142, 97
        %s144 = scalar_select %p143, %s142, 97
        %s145 = smul.addr %s144, 8
        %s146 = scalar_lea.vmem %s1, %s145
        %s147 = smul.u32 49, %s16
      $region24: #{tpu_custom_call.1} parent=19 // pred_fallthru
        _
      // Predicated region
      $region25: #{tpu_custom_call.1} parent=19 // pred_check
        %p148 = pneg %p85
      $region26: #{tpu_custom_call.1} parent=19 // pred_check_branch
        %150 = sbr.rel (%p148) target = $region28
      $region27: #{tpu_custom_call.1} parent=19 // pred_region
        %s151 = sld [smem:[#allocation3 + %s16]]
        %p152 = scmp.lt.s32.totalorder %s151, 1
        %s153 = scalar_select %p152, %s151, 1
        %s154 = smul.addr %s153, 32
        %s155 = smul.addr %s154, 4
        %s156 = scalar_lea.vmem %s3, %s155
        %s157 = sld [smem:[#allocation3 + %s16]]
      $region28: #{tpu_custom_call.1} parent=19 // pred_fallthru
        _
    $region20: #{tpu_custom_call.1} parent=5 // pred_fallthru
      _
    %p158 = scmp.le.s32.totalorder 1, %s16
    %p159 = scmp.lt.s32.totalorder %s16, 3
    %p160 = pnand %p158, %p159
    %p161 = pneg %p160
    // Predicated region
    $region29: #{tpu_custom_call.1} parent=5 // pred_check
      _
    $region30: #{tpu_custom_call.1} parent=5 // pred_check_branch
      %163 = sbr.rel (%p160) target = $region32
    $region31: #{tpu_custom_call.1} parent=5 // pred_region
      %s164 = ssub.s32 %s16, 1
      %s165 = smul.u32 49, %s21
      %p166 = scmp.lt.s32.totalorder %s165, 97
      %s167 = scalar_select %p166, %s165, 97
      %s168 = smul.addr %s167, 8
      %s169 = scalar_lea.vmem %s1, %s168
      %p170 = pneg %p42
      %p171 = pneg %p39
      %p172 = pneg %p63
      %p173 = pneg %p60
      %s174 = sld [smem:[#allocation3 + %s21]]
      %p175 = scmp.lt.s32.totalorder %s174, 1
      %s176 = scalar_select %p175, %s174, 1
      %s177 = smul.addr %s176, 32
      %s178 = smul.addr %s177, 4
      %s179 = scalar_lea.vmem %s3, %s178
      %p180 = pneg %p91
      %p181 = pneg %p88
      %p182 = pneg %p117
      %p183 = pneg %p114
      %s184 = smul.u32 49, %s21
      %p185 = scmp.lt.s32.totalorder %s184, 97
      %s186 = scalar_select %p185, %s184, 97
      %s187 = smul.addr %s186, 8
      %s188 = scalar_lea.vmem %s4, %s187
      %s189 = smul.u32 49, %s21
      %p190 = scmp.lt.s32.totalorder %s189, 97
      %s191 = scalar_select %p190, %s189, 97
      %s192 = smul.addr %s191, 8
      %s193 = scalar_lea.vmem %s1, %s192
      %s194 = smul.u32 49, %s21
      %s195 = sld [smem:[#allocation3 + %s21]]
      %p196 = scmp.lt.s32.totalorder %s195, 1
      %s197 = scalar_select %p196, %s195, 1
      %s198 = smul.addr %s197, 32
      %s199 = smul.addr %s198, 4
      %s200 = scalar_lea.vmem %s3, %s199
      %s201 = sld [smem:[#allocation3 + %s21]]
      %s202 = smul.u32 49, %s21
      %p203 = scmp.lt.s32.totalorder %s202, 97
      %s204 = scalar_select %p203, %s202, 97
      %s205 = smul.addr %s204, 8
      %s206 = scalar_lea.vmem %s4, %s205
      %s207 = smul.u32 49, %s21
      %v209 = vld [vmem:[%s2] ss:$2 sm:$0x3]
      %s210 = scalar_lea.vmem %s2, 1
      %v211 = vld [vmem:[%s210] ss:$2 sm:$0x3]
      %v212 = vld [vmem:[%s193] sm:$0xff]
      %v213 = vld [vmem:[%s193 + $0x8] sm:$0xff]
      %v214 = vld [vmem:[%s193 + $0x10] sm:$0xff]
      %v215 = vld [vmem:[%s193 + $0x18] sm:$0xff]
      %v216 = vld [vmem:[%s193 + $0x20] sm:$0xff]
      %v217 = vld [vmem:[%s193 + $0x28] sm:$0xff]
      %v218 = vld [vmem:[%s193 + $0x30] sm:$0xff]
      %v219 = vld [vmem:[%s193 + $0x38] sm:$0xff]
      %v220 = vld [vmem:[%s193 + $0x40] sm:$0xff]
      %v221 = vld [vmem:[%s193 + $0x48] sm:$0xff]
      %v222 = vld [vmem:[%s193 + $0x50] sm:$0xff]
      %v223 = vld [vmem:[%s193 + $0x58] sm:$0xff]
      %v224 = vld [vmem:[%s193 + $0x60] sm:$0xff]
      %v225 = vld [vmem:[%s193 + $0x68] sm:$0xff]
      %v226 = vld [vmem:[%s193 + $0x70] sm:$0xff]
      %v227 = vld [vmem:[%s193 + $0x78] sm:$0xff]
      %v228 = vld [vmem:[%s193 + $0x80] sm:$0xff]
      %v229 = vld [vmem:[%s193 + $0x88] sm:$0xff]
      %v230 = vld [vmem:[%s193 + $0x90] sm:$0xff]
      %v231 = vld [vmem:[%s193 + $0x98] sm:$0xff]
      %v232 = vld [vmem:[%s193 + $0xa0] sm:$0xff]
      %v233 = vld [vmem:[%s193 + $0xa8] sm:$0xff]
      %v234 = vld [vmem:[%s193 + $0xb0] sm:$0xff]
      %v235 = vld [vmem:[%s193 + $0xb8] sm:$0xff]
      %v236 = vld [vmem:[%s193 + $0xc0] sm:$0xff]
      %v237 = vld [vmem:[%s193 + $0xc8] sm:$0xff]
      %v238 = vld [vmem:[%s193 + $0xd0] sm:$0xff]
      %v239 = vld [vmem:[%s193 + $0xd8] sm:$0xff]
      %v240 = vld [vmem:[%s193 + $0xe0] sm:$0xff]
      %v241 = vld [vmem:[%s193 + $0xe8] sm:$0xff]
      %v242 = vld [vmem:[%s193 + $0xf0] sm:$0xff]
      %v243 = vld [vmem:[%s193 + $0xf8] sm:$0xff]
      %v244 = vld [vmem:[%s193 + $0x100] sm:$0xff]
      %v245 = vld [vmem:[%s193 + $0x108] sm:$0xff]
      %v246 = vld [vmem:[%s193 + $0x110] sm:$0xff]
      %v247 = vld [vmem:[%s193 + $0x118] sm:$0xff]
      %v248 = vld [vmem:[%s193 + $0x120] sm:$0xff]
      %v249 = vld [vmem:[%s193 + $0x128] sm:$0xff]
      %v250 = vld [vmem:[%s193 + $0x130] sm:$0xff]
      %v251 = vld [vmem:[%s193 + $0x138] sm:$0xff]
      %v252 = vld [vmem:[%s193 + $0x140] sm:$0xff]
      %v253 = vld [vmem:[%s193 + $0x148] sm:$0xff]
      %v254 = vld [vmem:[%s193 + $0x150] sm:$0xff]
      %v255 = vld [vmem:[%s193 + $0x158] sm:$0xff]
      %v256 = vld [vmem:[%s193 + $0x160] sm:$0xff]
      %v257 = vld [vmem:[%s193 + $0x168] sm:$0xff]
      %v258 = vld [vmem:[%s193 + $0x170] sm:$0xff]
      %v259 = vld [vmem:[%s193 + $0x178] sm:$0xff]
      %v260 = vld [vmem:[%s193 + $0x180] sm:$0xff]
      %vm261 = vcmp.ge.f32.partialorder %v212, -1.0
      %vm262 = vcmp.ge.f32.partialorder %v213, -1.0
      %vm263 = vcmp.ge.f32.partialorder %v214, -1.0
      %vm264 = vcmp.ge.f32.partialorder %v215, -1.0
      %vm265 = vcmp.ge.f32.partialorder %v216, -1.0
      %vm266 = vcmp.ge.f32.partialorder %v217, -1.0
      %vm267 = vcmp.ge.f32.partialorder %v218, -1.0
      %vm268 = vcmp.ge.f32.partialorder %v219, -1.0
      %vm269 = vcmp.ge.f32.partialorder %v220, -1.0
      %vm270 = vcmp.ge.f32.partialorder %v221, -1.0
      %vm271 = vcmp.ge.f32.partialorder %v222, -1.0
      %vm272 = vcmp.ge.f32.partialorder %v223, -1.0
      %vm273 = vcmp.ge.f32.partialorder %v224, -1.0
      %vm274 = vcmp.ge.f32.partialorder %v225, -1.0
      %vm275 = vcmp.ge.f32.partialorder %v226, -1.0
      %vm276 = vcmp.ge.f32.partialorder %v227, -1.0
      %vm277 = vcmp.ge.f32.partialorder %v228, -1.0
      %vm278 = vcmp.ge.f32.partialorder %v229, -1.0
      %vm279 = vcmp.ge.f32.partialorder %v230, -1.0
      %vm280 = vcmp.ge.f32.partialorder %v231, -1.0
      %vm281 = vcmp.ge.f32.partialorder %v232, -1.0
      %vm282 = vcmp.ge.f32.partialorder %v233, -1.0
      %vm283 = vcmp.ge.f32.partialorder %v234, -1.0
      %vm284 = vcmp.ge.f32.partialorder %v235, -1.0
      %vm285 = vcmp.ge.f32.partialorder %v236, -1.0
      %vm286 = vcmp.ge.f32.partialorder %v237, -1.0
      %vm287 = vcmp.ge.f32.partialorder %v238, -1.0
      %vm288 = vcmp.ge.f32.partialorder %v239, -1.0
      %vm289 = vcmp.ge.f32.partialorder %v240, -1.0
      %vm290 = vcmp.ge.f32.partialorder %v241, -1.0
      %vm291 = vcmp.ge.f32.partialorder %v242, -1.0
      %vm292 = vcmp.ge.f32.partialorder %v243, -1.0
      %vm293 = vcmp.ge.f32.partialorder %v244, -1.0
      %vm294 = vcmp.ge.f32.partialorder %v245, -1.0
      %vm295 = vcmp.ge.f32.partialorder %v246, -1.0
      %vm296 = vcmp.ge.f32.partialorder %v247, -1.0
      %vm297 = vcmp.ge.f32.partialorder %v248, -1.0
      %vm298 = vcmp.ge.f32.partialorder %v249, -1.0
      %vm299 = vcmp.ge.f32.partialorder %v250, -1.0
      %vm300 = vcmp.ge.f32.partialorder %v251, -1.0
      %vm301 = vcmp.ge.f32.partialorder %v252, -1.0
      %vm302 = vcmp.ge.f32.partialorder %v253, -1.0
      %vm303 = vcmp.ge.f32.partialorder %v254, -1.0
      %vm304 = vcmp.ge.f32.partialorder %v255, -1.0
      %vm305 = vcmp.ge.f32.partialorder %v256, -1.0
      %vm306 = vcmp.ge.f32.partialorder %v257, -1.0
      %vm307 = vcmp.ge.f32.partialorder %v258, -1.0
      %vm308 = vcmp.ge.f32.partialorder %v259, -1.0
      %vm309 = vcmp.ge.f32.partialorder %v260, -1.0
      %vm310 = vcmp.le.f32.partialorder %v212, 16.0
      %vm311 = vcmp.le.f32.partialorder %v213, 16.0
      %vm312 = vcmp.le.f32.partialorder %v214, 16.0
      %vm313 = vcmp.le.f32.partialorder %v215, 16.0
      %vm314 = vcmp.le.f32.partialorder %v216, 16.0
      %vm315 = vcmp.le.f32.partialorder %v217, 16.0
      %vm316 = vcmp.le.f32.partialorder %v218, 16.0
      %vm317 = vcmp.le.f32.partialorder %v219, 16.0
      %vm318 = vcmp.le.f32.partialorder %v220, 16.0
      %vm319 = vcmp.le.f32.partialorder %v221, 16.0
      %vm320 = vcmp.le.f32.partialorder %v222, 16.0
      %vm321 = vcmp.le.f32.partialorder %v223, 16.0
      %vm322 = vcmp.le.f32.partialorder %v224, 16.0
      %vm323 = vcmp.le.f32.partialorder %v225, 16.0
      %vm324 = vcmp.le.f32.partialorder %v226, 16.0
      %vm325 = vcmp.le.f32.partialorder %v227, 16.0
      %vm326 = vcmp.le.f32.partialorder %v228, 16.0
      %vm327 = vcmp.le.f32.partialorder %v229, 16.0
      %vm328 = vcmp.le.f32.partialorder %v230, 16.0
      %vm329 = vcmp.le.f32.partialorder %v231, 16.0
      %vm330 = vcmp.le.f32.partialorder %v232, 16.0
      %vm331 = vcmp.le.f32.partialorder %v233, 16.0
      %vm332 = vcmp.le.f32.partialorder %v234, 16.0
      %vm333 = vcmp.le.f32.partialorder %v235, 16.0
      %vm334 = vcmp.le.f32.partialorder %v236, 16.0
      %vm335 = vcmp.le.f32.partialorder %v237, 16.0
      %vm336 = vcmp.le.f32.partialorder %v238, 16.0
      %vm337 = vcmp.le.f32.partialorder %v239, 16.0
      %vm338 = vcmp.le.f32.partialorder %v240, 16.0
      %vm339 = vcmp.le.f32.partialorder %v241, 16.0
      %vm340 = vcmp.le.f32.partialorder %v242, 16.0
      %vm341 = vcmp.le.f32.partialorder %v243, 16.0
      %vm342 = vcmp.le.f32.partialorder %v244, 16.0
      %vm343 = vcmp.le.f32.partialorder %v245, 16.0
      %vm344 = vcmp.le.f32.partialorder %v246, 16.0
      %vm345 = vcmp.le.f32.partialorder %v247, 16.0
      %vm346 = vcmp.le.f32.partialorder %v248, 16.0
      %vm347 = vcmp.le.f32.partialorder %v249, 16.0
      %vm348 = vcmp.le.f32.partialorder %v250, 16.0
      %vm349 = vcmp.le.f32.partialorder %v251, 16.0
      %vm350 = vcmp.le.f32.partialorder %v252, 16.0
      %vm351 = vcmp.le.f32.partialorder %v253, 16.0
      %vm352 = vcmp.le.f32.partialorder %v254, 16.0
      %vm353 = vcmp.le.f32.partialorder %v255, 16.0
      %vm354 = vcmp.le.f32.partialorder %v256, 16.0
      %vm355 = vcmp.le.f32.partialorder %v257, 16.0
      %vm356 = vcmp.le.f32.partialorder %v258, 16.0
      %vm357 = vcmp.le.f32.partialorder %v259, 16.0
      %vm358 = vcmp.le.f32.partialorder %v260, 16.0
      %vm359 = vmand %vm261, %vm310
      %vm360 = vmand %vm262, %vm311
      %vm361 = vmand %vm263, %vm312
      %vm362 = vmand %vm264, %vm313
      %vm363 = vmand %vm265, %vm314
      %vm364 = vmand %vm266, %vm315
      %vm365 = vmand %vm267, %vm316
      %vm366 = vmand %vm268, %vm317
      %vm367 = vmand %vm269, %vm318
      %vm368 = vmand %vm270, %vm319
      %vm369 = vmand %vm271, %vm320
      %vm370 = vmand %vm272, %vm321
      %vm371 = vmand %vm273, %vm322
      %vm372 = vmand %vm274, %vm323
      %vm373 = vmand %vm275, %vm324
      %vm374 = vmand %vm276, %vm325
      %vm375 = vmand %vm277, %vm326
      %vm376 = vmand %vm278, %vm327
      %vm377 = vmand %vm279, %vm328
      %vm378 = vmand %vm280, %vm329
      %vm379 = vmand %vm281, %vm330
      %vm380 = vmand %vm282, %vm331
      %vm381 = vmand %vm283, %vm332
      %vm382 = vmand %vm284, %vm333
      %vm383 = vmand %vm285, %vm334
      %vm384 = vmand %vm286, %vm335
      %vm385 = vmand %vm287, %vm336
      %vm386 = vmand %vm288, %vm337
      %vm387 = vmand %vm289, %vm338
      %vm388 = vmand %vm290, %vm339
      %vm389 = vmand %vm291, %vm340
      %vm390 = vmand %vm292, %vm341
      %vm391 = vmand %vm293, %vm342
      %vm392 = vmand %vm294, %vm343
      %vm393 = vmand %vm295, %vm344
      %vm394 = vmand %vm296, %vm345
      %vm395 = vmand %vm297, %vm346
      %vm396 = vmand %vm298, %vm347
      %vm397 = vmand %vm299, %vm348
      %vm398 = vmand %vm300, %vm349
      %vm399 = vmand %vm301, %vm350
      %vm400 = vmand %vm302, %vm351
      %vm401 = vmand %vm303, %vm352
      %vm402 = vmand %vm304, %vm353
      %vm403 = vmand %vm305, %vm354
      %vm404 = vmand %vm306, %vm355
      %vm405 = vmand %vm307, %vm356
      %vm406 = vmand %vm308, %vm357
      %vm407 = vmand %vm309, %vm358
      %v408 = vmax.f32 %v212, 0.0
      %v409 = vmax.f32 %v213, 0.0
      %v410 = vmax.f32 %v214, 0.0
      %v411 = vmax.f32 %v215, 0.0
      %v412 = vmax.f32 %v216, 0.0
      %v413 = vmax.f32 %v217, 0.0
      %v414 = vmax.f32 %v218, 0.0
      %v415 = vmax.f32 %v219, 0.0
      %v416 = vmax.f32 %v220, 0.0
      %v417 = vmax.f32 %v221, 0.0
      %v418 = vmax.f32 %v222, 0.0
      %v419 = vmax.f32 %v223, 0.0
      %v420 = vmax.f32 %v224, 0.0
      %v421 = vmax.f32 %v225, 0.0
      %v422 = vmax.f32 %v226, 0.0
      %v423 = vmax.f32 %v227, 0.0
      %v424 = vmax.f32 %v228, 0.0
      %v425 = vmax.f32 %v229, 0.0
      %v426 = vmax.f32 %v230, 0.0
      %v427 = vmax.f32 %v231, 0.0
      %v428 = vmax.f32 %v232, 0.0
      %v429 = vmax.f32 %v233, 0.0
      %v430 = vmax.f32 %v234, 0.0
      %v431 = vmax.f32 %v235, 0.0
      %v432 = vmax.f32 %v236, 0.0
      %v433 = vmax.f32 %v237, 0.0
      %v434 = vmax.f32 %v238, 0.0
      %v435 = vmax.f32 %v239, 0.0
      %v436 = vmax.f32 %v240, 0.0
      %v437 = vmax.f32 %v241, 0.0
      %v438 = vmax.f32 %v242, 0.0
      %v439 = vmax.f32 %v243, 0.0
      %v440 = vmax.f32 %v244, 0.0
      %v441 = vmax.f32 %v245, 0.0
      %v442 = vmax.f32 %v246, 0.0
      %v443 = vmax.f32 %v247, 0.0
      %v444 = vmax.f32 %v248, 0.0
      %v445 = vmax.f32 %v249, 0.0
      %v446 = vmax.f32 %v250, 0.0
      %v447 = vmax.f32 %v251, 0.0
      %v448 = vmax.f32 %v252, 0.0
      %v449 = vmax.f32 %v253, 0.0
      %v450 = vmax.f32 %v254, 0.0
      %v451 = vmax.f32 %v255, 0.0
      %v452 = vmax.f32 %v256, 0.0
      %v453 = vmax.f32 %v257, 0.0
      %v454 = vmax.f32 %v258, 0.0
      %v455 = vmax.f32 %v259, 0.0
      %v456 = vmax.f32 %v260, 0.0
      %v457 = vmin.f32 %v408, 15.0
      %v458 = vmin.f32 %v409, 15.0
      %v459 = vmin.f32 %v410, 15.0
      %v460 = vmin.f32 %v411, 15.0
      %v461 = vmin.f32 %v412, 15.0
      %v462 = vmin.f32 %v413, 15.0
      %v463 = vmin.f32 %v414, 15.0
      %v464 = vmin.f32 %v415, 15.0
      %v465 = vmin.f32 %v416, 15.0
      %v466 = vmin.f32 %v417, 15.0
      %v467 = vmin.f32 %v418, 15.0
      %v468 = vmin.f32 %v419, 15.0
      %v469 = vmin.f32 %v420, 15.0
      %v470 = vmin.f32 %v421, 15.0
      %v471 = vmin.f32 %v422, 15.0
      %v472 = vmin.f32 %v423, 15.0
      %v473 = vmin.f32 %v424, 15.0
      %v474 = vmin.f32 %v425, 15.0
      %v475 = vmin.f32 %v426, 15.0
      %v476 = vmin.f32 %v427, 15.0
      %v477 = vmin.f32 %v428, 15.0
      %v478 = vmin.f32 %v429, 15.0
      %v479 = vmin.f32 %v430, 15.0
      %v480 = vmin.f32 %v431, 15.0
      %v481 = vmin.f32 %v432, 15.0
      %v482 = vmin.f32 %v433, 15.0
      %v483 = vmin.f32 %v434, 15.0
      %v484 = vmin.f32 %v435, 15.0
      %v485 = vmin.f32 %v436, 15.0
      %v486 = vmin.f32 %v437, 15.0
      %v487 = vmin.f32 %v438, 15.0
      %v488 = vmin.f32 %v439, 15.0
      %v489 = vmin.f32 %v440, 15.0
      %v490 = vmin.f32 %v441, 15.0
      %v491 = vmin.f32 %v442, 15.0
      %v492 = vmin.f32 %v443, 15.0
      %v493 = vmin.f32 %v444, 15.0
      %v494 = vmin.f32 %v445, 15.0
      %v495 = vmin.f32 %v446, 15.0
      %v496 = vmin.f32 %v447, 15.0
      %v497 = vmin.f32 %v448, 15.0
      %v498 = vmin.f32 %v449, 15.0
      %v499 = vmin.f32 %v450, 15.0
      %v500 = vmin.f32 %v451, 15.0
      %v501 = vmin.f32 %v452, 15.0
      %v502 = vmin.f32 %v453, 15.0
      %v503 = vmin.f32 %v454, 15.0
      %v504 = vmin.f32 %v455, 15.0
      %v505 = vmin.f32 %v456, 15.0
      %v506 = vsel %vm359, %v457, -2.0
      %v507 = vsel %vm360, %v458, -2.0
      %v508 = vsel %vm361, %v459, -2.0
      %v509 = vsel %vm362, %v460, -2.0
      %v510 = vsel %vm363, %v461, -2.0
      %v511 = vsel %vm364, %v462, -2.0
      %v512 = vsel %vm365, %v463, -2.0
      %v513 = vsel %vm366, %v464, -2.0
      %v514 = vsel %vm367, %v465, -2.0
      %v515 = vsel %vm368, %v466, -2.0
      %v516 = vsel %vm369, %v467, -2.0
      %v517 = vsel %vm370, %v468, -2.0
      %v518 = vsel %vm371, %v469, -2.0
      %v519 = vsel %vm372, %v470, -2.0
      %v520 = vsel %vm373, %v471, -2.0
      %v521 = vsel %vm374, %v472, -2.0
      %v522 = vsel %vm375, %v473, -2.0
      %v523 = vsel %vm376, %v474, -2.0
      %v524 = vsel %vm377, %v475, -2.0
      %v525 = vsel %vm378, %v476, -2.0
      %v526 = vsel %vm379, %v477, -2.0
      %v527 = vsel %vm380, %v478, -2.0
      %v528 = vsel %vm381, %v479, -2.0
      %v529 = vsel %vm382, %v480, -2.0
      %v530 = vsel %vm383, %v481, -2.0
      %v531 = vsel %vm384, %v482, -2.0
      %v532 = vsel %vm385, %v483, -2.0
      %v533 = vsel %vm386, %v484, -2.0
      %v534 = vsel %vm387, %v485, -2.0
      %v535 = vsel %vm388, %v486, -2.0
      %v536 = vsel %vm389, %v487, -2.0
      %v537 = vsel %vm390, %v488, -2.0
      %v538 = vsel %vm391, %v489, -2.0
      %v539 = vsel %vm392, %v490, -2.0
      %v540 = vsel %vm393, %v491, -2.0
      %v541 = vsel %vm394, %v492, -2.0
      %v542 = vsel %vm395, %v493, -2.0
      %v543 = vsel %vm396, %v494, -2.0
      %v544 = vsel %vm397, %v495, -2.0
      %v545 = vsel %vm398, %v496, -2.0
      %v546 = vsel %vm399, %v497, -2.0
      %v547 = vsel %vm400, %v498, -2.0
      %v548 = vsel %vm401, %v499, -2.0
      %v549 = vsel %vm402, %v500, -2.0
      %v550 = vsel %vm403, %v501, -2.0
      %v551 = vsel %vm404, %v502, -2.0
      %v552 = vsel %vm405, %v503, -2.0
      %v553 = vsel %vm406, %v504, -2.0
      %v554 = vsel %vm407, %v505, -2.0
      %556 = vset.pattern.permute.xlu0 0
      %557 = vperm.xlu0 %556, %v506
      %v558 = vpop.permute.xlu0 %557
      %561 = vset.pattern.permute.xlu0 0
      %562 = vperm.xlu0 %561, %v507
      %v563 = vpop.permute.xlu0 %562
      %566 = vset.pattern.permute.xlu0 0
      %567 = vperm.xlu0 %566, %v508
      %v568 = vpop.permute.xlu0 %567
      %571 = vset.pattern.permute.xlu0 0
      %572 = vperm.xlu0 %571, %v509
      %v573 = vpop.permute.xlu0 %572
      %576 = vset.pattern.permute.xlu0 0
      %577 = vperm.xlu0 %576, %v510
      %v578 = vpop.permute.xlu0 %577
      %581 = vset.pattern.permute.xlu0 0
      %582 = vperm.xlu0 %581, %v511
      %v583 = vpop.permute.xlu0 %582
      %586 = vset.pattern.permute.xlu0 0
      %587 = vperm.xlu0 %586, %v512
      %v588 = vpop.permute.xlu0 %587
      %591 = vset.pattern.permute.xlu0 0
      %592 = vperm.xlu0 %591, %v513
      %v593 = vpop.permute.xlu0 %592
      %596 = vset.pattern.permute.xlu0 0
      %597 = vperm.xlu0 %596, %v514
      %v598 = vpop.permute.xlu0 %597
      %601 = vset.pattern.permute.xlu0 0
      %602 = vperm.xlu0 %601, %v515
      %v603 = vpop.permute.xlu0 %602
      %606 = vset.pattern.permute.xlu0 0
      %607 = vperm.xlu0 %606, %v516
      %v608 = vpop.permute.xlu0 %607
      %611 = vset.pattern.permute.xlu0 0
      %612 = vperm.xlu0 %611, %v517
      %v613 = vpop.permute.xlu0 %612
      %616 = vset.pattern.permute.xlu0 0
      %617 = vperm.xlu0 %616, %v518
      %v618 = vpop.permute.xlu0 %617
      %621 = vset.pattern.permute.xlu0 0
      %622 = vperm.xlu0 %621, %v519
      %v623 = vpop.permute.xlu0 %622
      %626 = vset.pattern.permute.xlu0 0
      %627 = vperm.xlu0 %626, %v520
      %v628 = vpop.permute.xlu0 %627
      %631 = vset.pattern.permute.xlu0 0
      %632 = vperm.xlu0 %631, %v521
      %v633 = vpop.permute.xlu0 %632
      %636 = vset.pattern.permute.xlu0 0
      %637 = vperm.xlu0 %636, %v522
      %v638 = vpop.permute.xlu0 %637
      %641 = vset.pattern.permute.xlu0 0
      %642 = vperm.xlu0 %641, %v523
      %v643 = vpop.permute.xlu0 %642
      %646 = vset.pattern.permute.xlu0 0
      %647 = vperm.xlu0 %646, %v524
      %v648 = vpop.permute.xlu0 %647
      %651 = vset.pattern.permute.xlu0 0
      %652 = vperm.xlu0 %651, %v525
      %v653 = vpop.permute.xlu0 %652
      %656 = vset.pattern.permute.xlu0 0
      %657 = vperm.xlu0 %656, %v526
      %v658 = vpop.permute.xlu0 %657
      %661 = vset.pattern.permute.xlu0 0
      %662 = vperm.xlu0 %661, %v527
      %v663 = vpop.permute.xlu0 %662
      %666 = vset.pattern.permute.xlu0 0
      %667 = vperm.xlu0 %666, %v528
      %v668 = vpop.permute.xlu0 %667
      %671 = vset.pattern.permute.xlu0 0
      %672 = vperm.xlu0 %671, %v529
      %v673 = vpop.permute.xlu0 %672
      %676 = vset.pattern.permute.xlu0 0
      %677 = vperm.xlu0 %676, %v530
      %v678 = vpop.permute.xlu0 %677
      %681 = vset.pattern.permute.xlu0 0
      %682 = vperm.xlu0 %681, %v531
      %v683 = vpop.permute.xlu0 %682
      %686 = vset.pattern.permute.xlu0 0
      %687 = vperm.xlu0 %686, %v532
      %v688 = vpop.permute.xlu0 %687
      %691 = vset.pattern.permute.xlu0 0
      %692 = vperm.xlu0 %691, %v533
      %v693 = vpop.permute.xlu0 %692
      %696 = vset.pattern.permute.xlu0 0
      %697 = vperm.xlu0 %696, %v534
      %v698 = vpop.permute.xlu0 %697
      %701 = vset.pattern.permute.xlu0 0
      %702 = vperm.xlu0 %701, %v535
      %v703 = vpop.permute.xlu0 %702
      %706 = vset.pattern.permute.xlu0 0
      %707 = vperm.xlu0 %706, %v536
      %v708 = vpop.permute.xlu0 %707
      %711 = vset.pattern.permute.xlu0 0
      %712 = vperm.xlu0 %711, %v537
      %v713 = vpop.permute.xlu0 %712
      %716 = vset.pattern.permute.xlu0 0
      %717 = vperm.xlu0 %716, %v538
      %v718 = vpop.permute.xlu0 %717
      %721 = vset.pattern.permute.xlu0 0
      %722 = vperm.xlu0 %721, %v539
      %v723 = vpop.permute.xlu0 %722
      %726 = vset.pattern.permute.xlu0 0
      %727 = vperm.xlu0 %726, %v540
      %v728 = vpop.permute.xlu0 %727
      %731 = vset.pattern.permute.xlu0 0
      %732 = vperm.xlu0 %731, %v541
      %v733 = vpop.permute.xlu0 %732
      %736 = vset.pattern.permute.xlu0 0
      %737 = vperm.xlu0 %736, %v542
      %v738 = vpop.permute.xlu0 %737
      %741 = vset.pattern.permute.xlu0 0
      %742 = vperm.xlu0 %741, %v543
      %v743 = vpop.permute.xlu0 %742
      %746 = vset.pattern.permute.xlu0 0
      %747 = vperm.xlu0 %746, %v544
      %v748 = vpop.permute.xlu0 %747
      %751 = vset.pattern.permute.xlu0 0
      %752 = vperm.xlu0 %751, %v545
      %v753 = vpop.permute.xlu0 %752
      %756 = vset.pattern.permute.xlu0 0
      %757 = vperm.xlu0 %756, %v546
      %v758 = vpop.permute.xlu0 %757
      %761 = vset.pattern.permute.xlu0 0
      %762 = vperm.xlu0 %761, %v547
      %v763 = vpop.permute.xlu0 %762
      %766 = vset.pattern.permute.xlu0 0
      %767 = vperm.xlu0 %766, %v548
      %v768 = vpop.permute.xlu0 %767
      %771 = vset.pattern.permute.xlu0 0
      %772 = vperm.xlu0 %771, %v549
      %v773 = vpop.permute.xlu0 %772
      %776 = vset.pattern.permute.xlu0 0
      %777 = vperm.xlu0 %776, %v550
      %v778 = vpop.permute.xlu0 %777
      %781 = vset.pattern.permute.xlu0 0
      %782 = vperm.xlu0 %781, %v551
      %v783 = vpop.permute.xlu0 %782
      %786 = vset.pattern.permute.xlu0 0
      %787 = vperm.xlu0 %786, %v552
      %v788 = vpop.permute.xlu0 %787
      %791 = vset.pattern.permute.xlu0 0
      %792 = vperm.xlu0 %791, %v553
      %v793 = vpop.permute.xlu0 %792
      %796 = vset.pattern.permute.xlu0 0
      %797 = vperm.xlu0 %796, %v554
      %v798 = vpop.permute.xlu0 %797
      %v801 = vlaneseq
      %v802 = vshrl.u32 %v801, 7
      %v803 = vsub.s32 0, %v802
      %v804 = vrot.slane %v209, %v803
      %v805 = vlaneseq
      %v806 = vshrl.u32 %v805, 7
      %v807 = vsub.s32 1, %v806
      %v808 = vrot.slane %v209, %v807
      %v811 = vsub.f32 %v558, %v804
      %v812 = vsub.f32 %v558, %v808
      %v813 = vsub.f32 %v563, %v804
      %v814 = vsub.f32 %v563, %v808
      %v815 = vsub.f32 %v568, %v804
      %v816 = vsub.f32 %v568, %v808
      %v817 = vsub.f32 %v573, %v804
      %v818 = vsub.f32 %v573, %v808
      %v819 = vsub.f32 %v578, %v804
      %v820 = vsub.f32 %v578, %v808
      %v821 = vsub.f32 %v583, %v804
      %v822 = vsub.f32 %v583, %v808
      %v823 = vsub.f32 %v588, %v804
      %v824 = vsub.f32 %v588, %v808
      %v825 = vsub.f32 %v593, %v804
      %v826 = vsub.f32 %v593, %v808
      %v827 = vsub.f32 %v598, %v804
      %v828 = vsub.f32 %v598, %v808
      %v829 = vsub.f32 %v603, %v804
      %v830 = vsub.f32 %v603, %v808
      %v831 = vsub.f32 %v608, %v804
      %v832 = vsub.f32 %v608, %v808
      %v833 = vsub.f32 %v613, %v804
      %v834 = vsub.f32 %v613, %v808
      %v835 = vsub.f32 %v618, %v804
      %v836 = vsub.f32 %v618, %v808
      %v837 = vsub.f32 %v623, %v804
      %v838 = vsub.f32 %v623, %v808
      %v839 = vsub.f32 %v628, %v804
      %v840 = vsub.f32 %v628, %v808
      %v841 = vsub.f32 %v633, %v804
      %v842 = vsub.f32 %v633, %v808
      %v843 = vsub.f32 %v638, %v804
      %v844 = vsub.f32 %v638, %v808
      %v845 = vsub.f32 %v643, %v804
      %v846 = vsub.f32 %v643, %v808
      %v847 = vsub.f32 %v648, %v804
      %v848 = vsub.f32 %v648, %v808
      %v849 = vsub.f32 %v653, %v804
      %v850 = vsub.f32 %v653, %v808
      %v851 = vsub.f32 %v658, %v804
      %v852 = vsub.f32 %v658, %v808
      %v853 = vsub.f32 %v663, %v804
      %v854 = vsub.f32 %v663, %v808
      %v855 = vsub.f32 %v668, %v804
      %v856 = vsub.f32 %v668, %v808
      %v857 = vsub.f32 %v673, %v804
      %v858 = vsub.f32 %v673, %v808
      %v859 = vsub.f32 %v678, %v804
      %v860 = vsub.f32 %v678, %v808
      %v861 = vsub.f32 %v683, %v804
      %v862 = vsub.f32 %v683, %v808
      %v863 = vsub.f32 %v688, %v804
      %v864 = vsub.f32 %v688, %v808
      %v865 = vsub.f32 %v693, %v804
      %v866 = vsub.f32 %v693, %v808
      %v867 = vsub.f32 %v698, %v804
      %v868 = vsub.f32 %v698, %v808
      %v869 = vsub.f32 %v703, %v804
      %v870 = vsub.f32 %v703, %v808
      %v871 = vsub.f32 %v708, %v804
      %v872 = vsub.f32 %v708, %v808
      %v873 = vsub.f32 %v713, %v804
      %v874 = vsub.f32 %v713, %v808
      %v875 = vsub.f32 %v718, %v804
      %v876 = vsub.f32 %v718, %v808
      %v877 = vsub.f32 %v723, %v804
      %v878 = vsub.f32 %v723, %v808
      %v879 = vsub.f32 %v728, %v804
      %v880 = vsub.f32 %v728, %v808
      %v881 = vsub.f32 %v733, %v804
      %v882 = vsub.f32 %v733, %v808
      %v883 = vsub.f32 %v738, %v804
      %v884 = vsub.f32 %v738, %v808
      %v885 = vsub.f32 %v743, %v804
      %v886 = vsub.f32 %v743, %v808
      %v887 = vsub.f32 %v748, %v804
      %v888 = vsub.f32 %v748, %v808
      %v889 = vsub.f32 %v753, %v804
      %v890 = vsub.f32 %v753, %v808
      %v891 = vsub.f32 %v758, %v804
      %v892 = vsub.f32 %v758, %v808
      %v893 = vsub.f32 %v763, %v804
      %v894 = vsub.f32 %v763, %v808
      %v895 = vsub.f32 %v768, %v804
      %v896 = vsub.f32 %v768, %v808
      %v897 = vsub.f32 %v773, %v804
      %v898 = vsub.f32 %v773, %v808
      %v899 = vsub.f32 %v778, %v804
      %v900 = vsub.f32 %v778, %v808
      %v901 = vsub.f32 %v783, %v804
      %v902 = vsub.f32 %v783, %v808
      %v903 = vsub.f32 %v788, %v804
      %v904 = vsub.f32 %v788, %v808
      %v905 = vsub.f32 %v793, %v804
      %v906 = vsub.f32 %v793, %v808
      %v907 = vsub.f32 %v798, %v804
      %v908 = vsub.f32 %v798, %v808
      %v909 = vand.u32 2147483647, %v811
      %v910 = vand.u32 2147483647, %v812
      %v911 = vand.u32 2147483647, %v813
      %v912 = vand.u32 2147483647, %v814
      %v913 = vand.u32 2147483647, %v815
      %v914 = vand.u32 2147483647, %v816
      %v915 = vand.u32 2147483647, %v817
      %v916 = vand.u32 2147483647, %v818
      %v917 = vand.u32 2147483647, %v819
      %v918 = vand.u32 2147483647, %v820
      %v919 = vand.u32 2147483647, %v821
      %v920 = vand.u32 2147483647, %v822
      %v921 = vand.u32 2147483647, %v823
      %v922 = vand.u32 2147483647, %v824
      %v923 = vand.u32 2147483647, %v825
      %v924 = vand.u32 2147483647, %v826
      %v925 = vand.u32 2147483647, %v827
      %v926 = vand.u32 2147483647, %v828
      %v927 = vand.u32 2147483647, %v829
      %v928 = vand.u32 2147483647, %v830
      %v929 = vand.u32 2147483647, %v831
      %v930 = vand.u32 2147483647, %v832
      %v931 = vand.u32 2147483647, %v833
      %v932 = vand.u32 2147483647, %v834
      %v933 = vand.u32 2147483647, %v835
      %v934 = vand.u32 2147483647, %v836
      %v935 = vand.u32 2147483647, %v837
      %v936 = vand.u32 2147483647, %v838
      %v937 = vand.u32 2147483647, %v839
      %v938 = vand.u32 2147483647, %v840
      %v939 = vand.u32 2147483647, %v841
      %v940 = vand.u32 2147483647, %v842
      %v941 = vand.u32 2147483647, %v843
      %v942 = vand.u32 2147483647, %v844
      %v943 = vand.u32 2147483647, %v845
      %v944 = vand.u32 2147483647, %v846
      %v945 = vand.u32 2147483647, %v847
      %v946 = vand.u32 2147483647, %v848
      %v947 = vand.u32 2147483647, %v849
      %v948 = vand.u32 2147483647, %v850
      %v949 = vand.u32 2147483647, %v851
      %v950 = vand.u32 2147483647, %v852
      %v951 = vand.u32 2147483647, %v853
      %v952 = vand.u32 2147483647, %v854
      %v953 = vand.u32 2147483647, %v855
      %v954 = vand.u32 2147483647, %v856
      %v955 = vand.u32 2147483647, %v857
      %v956 = vand.u32 2147483647, %v858
      %v957 = vand.u32 2147483647, %v859
      %v958 = vand.u32 2147483647, %v860
      %v959 = vand.u32 2147483647, %v861
      %v960 = vand.u32 2147483647, %v862
      %v961 = vand.u32 2147483647, %v863
      %v962 = vand.u32 2147483647, %v864
      %v963 = vand.u32 2147483647, %v865
      %v964 = vand.u32 2147483647, %v866
      %v965 = vand.u32 2147483647, %v867
      %v966 = vand.u32 2147483647, %v868
      %v967 = vand.u32 2147483647, %v869
      %v968 = vand.u32 2147483647, %v870
      %v969 = vand.u32 2147483647, %v871
      %v970 = vand.u32 2147483647, %v872
      %v971 = vand.u32 2147483647, %v873
      %v972 = vand.u32 2147483647, %v874
      %v973 = vand.u32 2147483647, %v875
      %v974 = vand.u32 2147483647, %v876
      %v975 = vand.u32 2147483647, %v877
      %v976 = vand.u32 2147483647, %v878
      %v977 = vand.u32 2147483647, %v879
      %v978 = vand.u32 2147483647, %v880
      %v979 = vand.u32 2147483647, %v881
      %v980 = vand.u32 2147483647, %v882
      %v981 = vand.u32 2147483647, %v883
      %v982 = vand.u32 2147483647, %v884
      %v983 = vand.u32 2147483647, %v885
      %v984 = vand.u32 2147483647, %v886
      %v985 = vand.u32 2147483647, %v887
      %v986 = vand.u32 2147483647, %v888
      %v987 = vand.u32 2147483647, %v889
      %v988 = vand.u32 2147483647, %v890
      %v989 = vand.u32 2147483647, %v891
      %v990 = vand.u32 2147483647, %v892
      %v991 = vand.u32 2147483647, %v893
      %v992 = vand.u32 2147483647, %v894
      %v993 = vand.u32 2147483647, %v895
      %v994 = vand.u32 2147483647, %v896
      %v995 = vand.u32 2147483647, %v897
      %v996 = vand.u32 2147483647, %v898
      %v997 = vand.u32 2147483647, %v899
      %v998 = vand.u32 2147483647, %v900
      %v999 = vand.u32 2147483647, %v901
      %v1000 = vand.u32 2147483647, %v902
      %v1001 = vand.u32 2147483647, %v903
      %v1002 = vand.u32 2147483647, %v904
      %v1003 = vand.u32 2147483647, %v905
      %v1004 = vand.u32 2147483647, %v906
      %v1005 = vand.u32 2147483647, %v907
      %v1006 = vand.u32 2147483647, %v908
      %v1007 = vsub.f32 1.0, %v909
      %v1008 = vsub.f32 1.0, %v910
      %v1009 = vsub.f32 1.0, %v911
      %v1010 = vsub.f32 1.0, %v912
      %v1011 = vsub.f32 1.0, %v913
      %v1012 = vsub.f32 1.0, %v914
      %v1013 = vsub.f32 1.0, %v915
      %v1014 = vsub.f32 1.0, %v916
      %v1015 = vsub.f32 1.0, %v917
      %v1016 = vsub.f32 1.0, %v918
      %v1017 = vsub.f32 1.0, %v919
      %v1018 = vsub.f32 1.0, %v920
      %v1019 = vsub.f32 1.0, %v921
      %v1020 = vsub.f32 1.0, %v922
      %v1021 = vsub.f32 1.0, %v923
      %v1022 = vsub.f32 1.0, %v924
      %v1023 = vsub.f32 1.0, %v925
      %v1024 = vsub.f32 1.0, %v926
      %v1025 = vsub.f32 1.0, %v927
      %v1026 = vsub.f32 1.0, %v928
      %v1027 = vsub.f32 1.0, %v929
      %v1028 = vsub.f32 1.0, %v930
      %v1029 = vsub.f32 1.0, %v931
      %v1030 = vsub.f32 1.0, %v932
      %v1031 = vsub.f32 1.0, %v933
      %v1032 = vsub.f32 1.0, %v934
      %v1033 = vsub.f32 1.0, %v935
      %v1034 = vsub.f32 1.0, %v936
      %v1035 = vsub.f32 1.0, %v937
      %v1036 = vsub.f32 1.0, %v938
      %v1037 = vsub.f32 1.0, %v939
      %v1038 = vsub.f32 1.0, %v940
      %v1039 = vsub.f32 1.0, %v941
      %v1040 = vsub.f32 1.0, %v942
      %v1041 = vsub.f32 1.0, %v943
      %v1042 = vsub.f32 1.0, %v944
      %v1043 = vsub.f32 1.0, %v945
      %v1044 = vsub.f32 1.0, %v946
      %v1045 = vsub.f32 1.0, %v947
      %v1046 = vsub.f32 1.0, %v948
      %v1047 = vsub.f32 1.0, %v949
      %v1048 = vsub.f32 1.0, %v950
      %v1049 = vsub.f32 1.0, %v951
      %v1050 = vsub.f32 1.0, %v952
      %v1051 = vsub.f32 1.0, %v953
      %v1052 = vsub.f32 1.0, %v954
      %v1053 = vsub.f32 1.0, %v955
      %v1054 = vsub.f32 1.0, %v956
      %v1055 = vsub.f32 1.0, %v957
      %v1056 = vsub.f32 1.0, %v958
      %v1057 = vsub.f32 1.0, %v959
      %v1058 = vsub.f32 1.0, %v960
      %v1059 = vsub.f32 1.0, %v961
      %v1060 = vsub.f32 1.0, %v962
      %v1061 = vsub.f32 1.0, %v963
      %v1062 = vsub.f32 1.0, %v964
      %v1063 = vsub.f32 1.0, %v965
      %v1064 = vsub.f32 1.0, %v966
      %v1065 = vsub.f32 1.0, %v967
      %v1066 = vsub.f32 1.0, %v968
      %v1067 = vsub.f32 1.0, %v969
      %v1068 = vsub.f32 1.0, %v970
      %v1069 = vsub.f32 1.0, %v971
      %v1070 = vsub.f32 1.0, %v972
      %v1071 = vsub.f32 1.0, %v973
      %v1072 = vsub.f32 1.0, %v974
      %v1073 = vsub.f32 1.0, %v975
      %v1074 = vsub.f32 1.0, %v976
      %v1075 = vsub.f32 1.0, %v977
      %v1076 = vsub.f32 1.0, %v978
      %v1077 = vsub.f32 1.0, %v979
      %v1078 = vsub.f32 1.0, %v980
      %v1079 = vsub.f32 1.0, %v981
      %v1080 = vsub.f32 1.0, %v982
      %v1081 = vsub.f32 1.0, %v983
      %v1082 = vsub.f32 1.0, %v984
      %v1083 = vsub.f32 1.0, %v985
      %v1084 = vsub.f32 1.0, %v986
      %v1085 = vsub.f32 1.0, %v987
      %v1086 = vsub.f32 1.0, %v988
      %v1087 = vsub.f32 1.0, %v989
      %v1088 = vsub.f32 1.0, %v990
      %v1089 = vsub.f32 1.0, %v991
      %v1090 = vsub.f32 1.0, %v992
      %v1091 = vsub.f32 1.0, %v993
      %v1092 = vsub.f32 1.0, %v994
      %v1093 = vsub.f32 1.0, %v995
      %v1094 = vsub.f32 1.0, %v996
      %v1095 = vsub.f32 1.0, %v997
      %v1096 = vsub.f32 1.0, %v998
      %v1097 = vsub.f32 1.0, %v999
      %v1098 = vsub.f32 1.0, %v1000
      %v1099 = vsub.f32 1.0, %v1001
      %v1100 = vsub.f32 1.0, %v1002
      %v1101 = vsub.f32 1.0, %v1003
      %v1102 = vsub.f32 1.0, %v1004
      %v1103 = vsub.f32 1.0, %v1005
      %v1104 = vsub.f32 1.0, %v1006
      %v1105 = vmax.f32 %v1007, 0.0
      %v1106 = vmax.f32 %v1008, 0.0
      %v1107 = vmax.f32 %v1009, 0.0
      %v1108 = vmax.f32 %v1010, 0.0
      %v1109 = vmax.f32 %v1011, 0.0
      %v1110 = vmax.f32 %v1012, 0.0
      %v1111 = vmax.f32 %v1013, 0.0
      %v1112 = vmax.f32 %v1014, 0.0
      %v1113 = vmax.f32 %v1015, 0.0
      %v1114 = vmax.f32 %v1016, 0.0
      %v1115 = vmax.f32 %v1017, 0.0
      %v1116 = vmax.f32 %v1018, 0.0
      %v1117 = vmax.f32 %v1019, 0.0
      %v1118 = vmax.f32 %v1020, 0.0
      %v1119 = vmax.f32 %v1021, 0.0
      %v1120 = vmax.f32 %v1022, 0.0
      %v1121 = vmax.f32 %v1023, 0.0
      %v1122 = vmax.f32 %v1024, 0.0
      %v1123 = vmax.f32 %v1025, 0.0
      %v1124 = vmax.f32 %v1026, 0.0
      %v1125 = vmax.f32 %v1027, 0.0
      %v1126 = vmax.f32 %v1028, 0.0
      %v1127 = vmax.f32 %v1029, 0.0
      %v1128 = vmax.f32 %v1030, 0.0
      %v1129 = vmax.f32 %v1031, 0.0
      %v1130 = vmax.f32 %v1032, 0.0
      %v1131 = vmax.f32 %v1033, 0.0
      %v1132 = vmax.f32 %v1034, 0.0
      %v1133 = vmax.f32 %v1035, 0.0
      %v1134 = vmax.f32 %v1036, 0.0
      %v1135 = vmax.f32 %v1037, 0.0
      %v1136 = vmax.f32 %v1038, 0.0
      %v1137 = vmax.f32 %v1039, 0.0
      %v1138 = vmax.f32 %v1040, 0.0
      %v1139 = vmax.f32 %v1041, 0.0
      %v1140 = vmax.f32 %v1042, 0.0
      %v1141 = vmax.f32 %v1043, 0.0
      %v1142 = vmax.f32 %v1044, 0.0
      %v1143 = vmax.f32 %v1045, 0.0
      %v1144 = vmax.f32 %v1046, 0.0
      %v1145 = vmax.f32 %v1047, 0.0
      %v1146 = vmax.f32 %v1048, 0.0
      %v1147 = vmax.f32 %v1049, 0.0
      %v1148 = vmax.f32 %v1050, 0.0
      %v1149 = vmax.f32 %v1051, 0.0
      %v1150 = vmax.f32 %v1052, 0.0
      %v1151 = vmax.f32 %v1053, 0.0
      %v1152 = vmax.f32 %v1054, 0.0
      %v1153 = vmax.f32 %v1055, 0.0
      %v1154 = vmax.f32 %v1056, 0.0
      %v1155 = vmax.f32 %v1057, 0.0
      %v1156 = vmax.f32 %v1058, 0.0
      %v1157 = vmax.f32 %v1059, 0.0
      %v1158 = vmax.f32 %v1060, 0.0
      %v1159 = vmax.f32 %v1061, 0.0
      %v1160 = vmax.f32 %v1062, 0.0
      %v1161 = vmax.f32 %v1063, 0.0
      %v1162 = vmax.f32 %v1064, 0.0
      %v1163 = vmax.f32 %v1065, 0.0
      %v1164 = vmax.f32 %v1066, 0.0
      %v1165 = vmax.f32 %v1067, 0.0
      %v1166 = vmax.f32 %v1068, 0.0
      %v1167 = vmax.f32 %v1069, 0.0
      %v1168 = vmax.f32 %v1070, 0.0
      %v1169 = vmax.f32 %v1071, 0.0
      %v1170 = vmax.f32 %v1072, 0.0
      %v1171 = vmax.f32 %v1073, 0.0
      %v1172 = vmax.f32 %v1074, 0.0
      %v1173 = vmax.f32 %v1075, 0.0
      %v1174 = vmax.f32 %v1076, 0.0
      %v1175 = vmax.f32 %v1077, 0.0
      %v1176 = vmax.f32 %v1078, 0.0
      %v1177 = vmax.f32 %v1079, 0.0
      %v1178 = vmax.f32 %v1080, 0.0
      %v1179 = vmax.f32 %v1081, 0.0
      %v1180 = vmax.f32 %v1082, 0.0
      %v1181 = vmax.f32 %v1083, 0.0
      %v1182 = vmax.f32 %v1084, 0.0
      %v1183 = vmax.f32 %v1085, 0.0
      %v1184 = vmax.f32 %v1086, 0.0
      %v1185 = vmax.f32 %v1087, 0.0
      %v1186 = vmax.f32 %v1088, 0.0
      %v1187 = vmax.f32 %v1089, 0.0
      %v1188 = vmax.f32 %v1090, 0.0
      %v1189 = vmax.f32 %v1091, 0.0
      %v1190 = vmax.f32 %v1092, 0.0
      %v1191 = vmax.f32 %v1093, 0.0
      %v1192 = vmax.f32 %v1094, 0.0
      %v1193 = vmax.f32 %v1095, 0.0
      %v1194 = vmax.f32 %v1096, 0.0
      %v1195 = vmax.f32 %v1097, 0.0
      %v1196 = vmax.f32 %v1098, 0.0
      %v1197 = vmax.f32 %v1099, 0.0
      %v1198 = vmax.f32 %v1100, 0.0
      %v1199 = vmax.f32 %v1101, 0.0
      %v1200 = vmax.f32 %v1102, 0.0
      %v1201 = vmax.f32 %v1103, 0.0
      %v1202 = vmax.f32 %v1104, 0.0
      %1203 = vset.pattern.permute.xlu0 1
      %1204 = vperm.xlu0 %1203, %v506
      %v1205 = vpop.permute.xlu0 %1204
      %1207 = vset.pattern.permute.xlu0 1
      %1208 = vperm.xlu0 %1207, %v507
      %v1209 = vpop.permute.xlu0 %1208
      %1211 = vset.pattern.permute.xlu0 1
      %1212 = vperm.xlu0 %1211, %v508
      %v1213 = vpop.permute.xlu0 %1212
      %1215 = vset.pattern.permute.xlu0 1
      %1216 = vperm.xlu0 %1215, %v509
      %v1217 = vpop.permute.xlu0 %1216
      %1219 = vset.pattern.permute.xlu0 1
      %1220 = vperm.xlu0 %1219, %v510
      %v1221 = vpop.permute.xlu0 %1220
      %1223 = vset.pattern.permute.xlu0 1
      %1224 = vperm.xlu0 %1223, %v511
      %v1225 = vpop.permute.xlu0 %1224
      %1227 = vset.pattern.permute.xlu0 1
      %1228 = vperm.xlu0 %1227, %v512
      %v1229 = vpop.permute.xlu0 %1228
      %1231 = vset.pattern.permute.xlu0 1
      %1232 = vperm.xlu0 %1231, %v513
      %v1233 = vpop.permute.xlu0 %1232
      %1235 = vset.pattern.permute.xlu0 1
      %1236 = vperm.xlu0 %1235, %v514
      %v1237 = vpop.permute.xlu0 %1236
      %1239 = vset.pattern.permute.xlu0 1
      %1240 = vperm.xlu0 %1239, %v515
      %v1241 = vpop.permute.xlu0 %1240
      %1243 = vset.pattern.permute.xlu0 1
      %1244 = vperm.xlu0 %1243, %v516
      %v1245 = vpop.permute.xlu0 %1244
      %1247 = vset.pattern.permute.xlu0 1
      %1248 = vperm.xlu0 %1247, %v517
      %v1249 = vpop.permute.xlu0 %1248
      %1251 = vset.pattern.permute.xlu0 1
      %1252 = vperm.xlu0 %1251, %v518
      %v1253 = vpop.permute.xlu0 %1252
      %1255 = vset.pattern.permute.xlu0 1
      %1256 = vperm.xlu0 %1255, %v519
      %v1257 = vpop.permute.xlu0 %1256
      %1259 = vset.pattern.permute.xlu0 1
      %1260 = vperm.xlu0 %1259, %v520
      %v1261 = vpop.permute.xlu0 %1260
      %1263 = vset.pattern.permute.xlu0 1
      %1264 = vperm.xlu0 %1263, %v521
      %v1265 = vpop.permute.xlu0 %1264
      %1267 = vset.pattern.permute.xlu0 1
      %1268 = vperm.xlu0 %1267, %v522
      %v1269 = vpop.permute.xlu0 %1268
      %1271 = vset.pattern.permute.xlu0 1
      %1272 = vperm.xlu0 %1271, %v523
      %v1273 = vpop.permute.xlu0 %1272
      %1275 = vset.pattern.permute.xlu0 1
      %1276 = vperm.xlu0 %1275, %v524
      %v1277 = vpop.permute.xlu0 %1276
      %1279 = vset.pattern.permute.xlu0 1
      %1280 = vperm.xlu0 %1279, %v525
      %v1281 = vpop.permute.xlu0 %1280
      %1283 = vset.pattern.permute.xlu0 1
      %1284 = vperm.xlu0 %1283, %v526
      %v1285 = vpop.permute.xlu0 %1284
      %1287 = vset.pattern.permute.xlu0 1
      %1288 = vperm.xlu0 %1287, %v527
      %v1289 = vpop.permute.xlu0 %1288
      %1291 = vset.pattern.permute.xlu0 1
      %1292 = vperm.xlu0 %1291, %v528
      %v1293 = vpop.permute.xlu0 %1292
      %1295 = vset.pattern.permute.xlu0 1
      %1296 = vperm.xlu0 %1295, %v529
      %v1297 = vpop.permute.xlu0 %1296
      %1299 = vset.pattern.permute.xlu0 1
      %1300 = vperm.xlu0 %1299, %v530
      %v1301 = vpop.permute.xlu0 %1300
      %1303 = vset.pattern.permute.xlu0 1
      %1304 = vperm.xlu0 %1303, %v531
      %v1305 = vpop.permute.xlu0 %1304
      %1307 = vset.pattern.permute.xlu0 1
      %1308 = vperm.xlu0 %1307, %v532
      %v1309 = vpop.permute.xlu0 %1308
      %1311 = vset.pattern.permute.xlu0 1
      %1312 = vperm.xlu0 %1311, %v533
      %v1313 = vpop.permute.xlu0 %1312
      %1315 = vset.pattern.permute.xlu0 1
      %1316 = vperm.xlu0 %1315, %v534
      %v1317 = vpop.permute.xlu0 %1316
      %1319 = vset.pattern.permute.xlu0 1
      %1320 = vperm.xlu0 %1319, %v535
      %v1321 = vpop.permute.xlu0 %1320
      %1323 = vset.pattern.permute.xlu0 1
      %1324 = vperm.xlu0 %1323, %v536
      %v1325 = vpop.permute.xlu0 %1324
      %1327 = vset.pattern.permute.xlu0 1
      %1328 = vperm.xlu0 %1327, %v537
      %v1329 = vpop.permute.xlu0 %1328
      %1331 = vset.pattern.permute.xlu0 1
      %1332 = vperm.xlu0 %1331, %v538
      %v1333 = vpop.permute.xlu0 %1332
      %1335 = vset.pattern.permute.xlu0 1
      %1336 = vperm.xlu0 %1335, %v539
      %v1337 = vpop.permute.xlu0 %1336
      %1339 = vset.pattern.permute.xlu0 1
      %1340 = vperm.xlu0 %1339, %v540
      %v1341 = vpop.permute.xlu0 %1340
      %1343 = vset.pattern.permute.xlu0 1
      %1344 = vperm.xlu0 %1343, %v541
      %v1345 = vpop.permute.xlu0 %1344
      %1347 = vset.pattern.permute.xlu0 1
      %1348 = vperm.xlu0 %1347, %v542
      %v1349 = vpop.permute.xlu0 %1348
      %1351 = vset.pattern.permute.xlu0 1
      %1352 = vperm.xlu0 %1351, %v543
      %v1353 = vpop.permute.xlu0 %1352
      %1355 = vset.pattern.permute.xlu0 1
      %1356 = vperm.xlu0 %1355, %v544
      %v1357 = vpop.permute.xlu0 %1356
      %1359 = vset.pattern.permute.xlu0 1
      %1360 = vperm.xlu0 %1359, %v545
      %v1361 = vpop.permute.xlu0 %1360
      %1363 = vset.pattern.permute.xlu0 1
      %1364 = vperm.xlu0 %1363, %v546
      %v1365 = vpop.permute.xlu0 %1364
      %1367 = vset.pattern.permute.xlu0 1
      %1368 = vperm.xlu0 %1367, %v547
      %v1369 = vpop.permute.xlu0 %1368
      %1371 = vset.pattern.permute.xlu0 1
      %1372 = vperm.xlu0 %1371, %v548
      %v1373 = vpop.permute.xlu0 %1372
      %1375 = vset.pattern.permute.xlu0 1
      %1376 = vperm.xlu0 %1375, %v549
      %v1377 = vpop.permute.xlu0 %1376
      %1379 = vset.pattern.permute.xlu0 1
      %1380 = vperm.xlu0 %1379, %v550
      %v1381 = vpop.permute.xlu0 %1380
      %1383 = vset.pattern.permute.xlu0 1
      %1384 = vperm.xlu0 %1383, %v551
      %v1385 = vpop.permute.xlu0 %1384
      %1387 = vset.pattern.permute.xlu0 1
      %1388 = vperm.xlu0 %1387, %v552
      %v1389 = vpop.permute.xlu0 %1388
      %1391 = vset.pattern.permute.xlu0 1
      %1392 = vperm.xlu0 %1391, %v553
      %v1393 = vpop.permute.xlu0 %1392
      %1395 = vset.pattern.permute.xlu0 1
      %1396 = vperm.xlu0 %1395, %v554
      %v1397 = vpop.permute.xlu0 %1396
      %v1399 = vsub.f32 %v1205, %v804
      %v1400 = vsub.f32 %v1205, %v808
      %v1401 = vsub.f32 %v1209, %v804
      %v1402 = vsub.f32 %v1209, %v808
      %v1403 = vsub.f32 %v1213, %v804
      %v1404 = vsub.f32 %v1213, %v808
      %v1405 = vsub.f32 %v1217, %v804
      %v1406 = vsub.f32 %v1217, %v808
      %v1407 = vsub.f32 %v1221, %v804
      %v1408 = vsub.f32 %v1221, %v808
      %v1409 = vsub.f32 %v1225, %v804
      %v1410 = vsub.f32 %v1225, %v808
      %v1411 = vsub.f32 %v1229, %v804
      %v1412 = vsub.f32 %v1229, %v808
      %v1413 = vsub.f32 %v1233, %v804
      %v1414 = vsub.f32 %v1233, %v808
      %v1415 = vsub.f32 %v1237, %v804
      %v1416 = vsub.f32 %v1237, %v808
      %v1417 = vsub.f32 %v1241, %v804
      %v1418 = vsub.f32 %v1241, %v808
      %v1419 = vsub.f32 %v1245, %v804
      %v1420 = vsub.f32 %v1245, %v808
      %v1421 = vsub.f32 %v1249, %v804
      %v1422 = vsub.f32 %v1249, %v808
      %v1423 = vsub.f32 %v1253, %v804
      %v1424 = vsub.f32 %v1253, %v808
      %v1425 = vsub.f32 %v1257, %v804
      %v1426 = vsub.f32 %v1257, %v808
      %v1427 = vsub.f32 %v1261, %v804
      %v1428 = vsub.f32 %v1261, %v808
      %v1429 = vsub.f32 %v1265, %v804
      %v1430 = vsub.f32 %v1265, %v808
      %v1431 = vsub.f32 %v1269, %v804
      %v1432 = vsub.f32 %v1269, %v808
      %v1433 = vsub.f32 %v1273, %v804
      %v1434 = vsub.f32 %v1273, %v808
      %v1435 = vsub.f32 %v1277, %v804
      %v1436 = vsub.f32 %v1277, %v808
      %v1437 = vsub.f32 %v1281, %v804
      %v1438 = vsub.f32 %v1281, %v808
      %v1439 = vsub.f32 %v1285, %v804
      %v1440 = vsub.f32 %v1285, %v808
      %v1441 = vsub.f32 %v1289, %v804
      %v1442 = vsub.f32 %v1289, %v808
      %v1443 = vsub.f32 %v1293, %v804
      %v1444 = vsub.f32 %v1293, %v808
      %v1445 = vsub.f32 %v1297, %v804
      %v1446 = vsub.f32 %v1297, %v808
      %v1447 = vsub.f32 %v1301, %v804
      %v1448 = vsub.f32 %v1301, %v808
      %v1449 = vsub.f32 %v1305, %v804
      %v1450 = vsub.f32 %v1305, %v808
      %v1451 = vsub.f32 %v1309, %v804
      %v1452 = vsub.f32 %v1309, %v808
      %v1453 = vsub.f32 %v1313, %v804
      %v1454 = vsub.f32 %v1313, %v808
      %v1455 = vsub.f32 %v1317, %v804
      %v1456 = vsub.f32 %v1317, %v808
      %v1457 = vsub.f32 %v1321, %v804
      %v1458 = vsub.f32 %v1321, %v808
      %v1459 = vsub.f32 %v1325, %v804
      %v1460 = vsub.f32 %v1325, %v808
      %v1461 = vsub.f32 %v1329, %v804
      %v1462 = vsub.f32 %v1329, %v808
      %v1463 = vsub.f32 %v1333, %v804
      %v1464 = vsub.f32 %v1333, %v808
      %v1465 = vsub.f32 %v1337, %v804
      %v1466 = vsub.f32 %v1337, %v808
      %v1467 = vsub.f32 %v1341, %v804
      %v1468 = vsub.f32 %v1341, %v808
      %v1469 = vsub.f32 %v1345, %v804
      %v1470 = vsub.f32 %v1345, %v808
      %v1471 = vsub.f32 %v1349, %v804
      %v1472 = vsub.f32 %v1349, %v808
      %v1473 = vsub.f32 %v1353, %v804
      %v1474 = vsub.f32 %v1353, %v808
      %v1475 = vsub.f32 %v1357, %v804
      %v1476 = vsub.f32 %v1357, %v808
      %v1477 = vsub.f32 %v1361, %v804
      %v1478 = vsub.f32 %v1361, %v808
      %v1479 = vsub.f32 %v1365, %v804
      %v1480 = vsub.f32 %v1365, %v808
      %v1481 = vsub.f32 %v1369, %v804
      %v1482 = vsub.f32 %v1369, %v808
      %v1483 = vsub.f32 %v1373, %v804
      %v1484 = vsub.f32 %v1373, %v808
      %v1485 = vsub.f32 %v1377, %v804
      %v1486 = vsub.f32 %v1377, %v808
      %v1487 = vsub.f32 %v1381, %v804
      %v1488 = vsub.f32 %v1381, %v808
      %v1489 = vsub.f32 %v1385, %v804
      %v1490 = vsub.f32 %v1385, %v808
      %v1491 = vsub.f32 %v1389, %v804
      %v1492 = vsub.f32 %v1389, %v808
      %v1493 = vsub.f32 %v1393, %v804
      %v1494 = vsub.f32 %v1393, %v808
      %v1495 = vsub.f32 %v1397, %v804
      %v1496 = vsub.f32 %v1397, %v808
      %v1497 = vand.u32 2147483647, %v1399
      %v1498 = vand.u32 2147483647, %v1400
      %v1499 = vand.u32 2147483647, %v1401
      %v1500 = vand.u32 2147483647, %v1402
      %v1501 = vand.u32 2147483647, %v1403
      %v1502 = vand.u32 2147483647, %v1404
      %v1503 = vand.u32 2147483647, %v1405
      %v1504 = vand.u32 2147483647, %v1406
      %v1505 = vand.u32 2147483647, %v1407
      %v1506 = vand.u32 2147483647, %v1408
      %v1507 = vand.u32 2147483647, %v1409
      %v1508 = vand.u32 2147483647, %v1410
      %v1509 = vand.u32 2147483647, %v1411
      %v1510 = vand.u32 2147483647, %v1412
      %v1511 = vand.u32 2147483647, %v1413
      %v1512 = vand.u32 2147483647, %v1414
      %v1513 = vand.u32 2147483647, %v1415
      %v1514 = vand.u32 2147483647, %v1416
      %v1515 = vand.u32 2147483647, %v1417
      %v1516 = vand.u32 2147483647, %v1418
      %v1517 = vand.u32 2147483647, %v1419
      %v1518 = vand.u32 2147483647, %v1420
      %v1519 = vand.u32 2147483647, %v1421
      %v1520 = vand.u32 2147483647, %v1422
      %v1521 = vand.u32 2147483647, %v1423
      %v1522 = vand.u32 2147483647, %v1424
      %v1523 = vand.u32 2147483647, %v1425
      %v1524 = vand.u32 2147483647, %v1426
      %v1525 = vand.u32 2147483647, %v1427
      %v1526 = vand.u32 2147483647, %v1428
      %v1527 = vand.u32 2147483647, %v1429
      %v1528 = vand.u32 2147483647, %v1430
      %v1529 = vand.u32 2147483647, %v1431
      %v1530 = vand.u32 2147483647, %v1432
      %v1531 = vand.u32 2147483647, %v1433
      %v1532 = vand.u32 2147483647, %v1434
      %v1533 = vand.u32 2147483647, %v1435
      %v1534 = vand.u32 2147483647, %v1436
      %v1535 = vand.u32 2147483647, %v1437
      %v1536 = vand.u32 2147483647, %v1438
      %v1537 = vand.u32 2147483647, %v1439
      %v1538 = vand.u32 2147483647, %v1440
      %v1539 = vand.u32 2147483647, %v1441
      %v1540 = vand.u32 2147483647, %v1442
      %v1541 = vand.u32 2147483647, %v1443
      %v1542 = vand.u32 2147483647, %v1444
      %v1543 = vand.u32 2147483647, %v1445
      %v1544 = vand.u32 2147483647, %v1446
      %v1545 = vand.u32 2147483647, %v1447
      %v1546 = vand.u32 2147483647, %v1448
      %v1547 = vand.u32 2147483647, %v1449
      %v1548 = vand.u32 2147483647, %v1450
      %v1549 = vand.u32 2147483647, %v1451
      %v1550 = vand.u32 2147483647, %v1452
      %v1551 = vand.u32 2147483647, %v1453
      %v1552 = vand.u32 2147483647, %v1454
      %v1553 = vand.u32 2147483647, %v1455
      %v1554 = vand.u32 2147483647, %v1456
      %v1555 = vand.u32 2147483647, %v1457
      %v1556 = vand.u32 2147483647, %v1458
      %v1557 = vand.u32 2147483647, %v1459
      %v1558 = vand.u32 2147483647, %v1460
      %v1559 = vand.u32 2147483647, %v1461
      %v1560 = vand.u32 2147483647, %v1462
      %v1561 = vand.u32 2147483647, %v1463
      %v1562 = vand.u32 2147483647, %v1464
      %v1563 = vand.u32 2147483647, %v1465
      %v1564 = vand.u32 2147483647, %v1466
      %v1565 = vand.u32 2147483647, %v1467
      %v1566 = vand.u32 2147483647, %v1468
      %v1567 = vand.u32 2147483647, %v1469
      %v1568 = vand.u32 2147483647, %v1470
      %v1569 = vand.u32 2147483647, %v1471
      %v1570 = vand.u32 2147483647, %v1472
      %v1571 = vand.u32 2147483647, %v1473
      %v1572 = vand.u32 2147483647, %v1474
      %v1573 = vand.u32 2147483647, %v1475
      %v1574 = vand.u32 2147483647, %v1476
      %v1575 = vand.u32 2147483647, %v1477
      %v1576 = vand.u32 2147483647, %v1478
      %v1577 = vand.u32 2147483647, %v1479
      %v1578 = vand.u32 2147483647, %v1480
      %v1579 = vand.u32 2147483647, %v1481
      %v1580 = vand.u32 2147483647, %v1482
      %v1581 = vand.u32 2147483647, %v1483
      %v1582 = vand.u32 2147483647, %v1484
      %v1583 = vand.u32 2147483647, %v1485
      %v1584 = vand.u32 2147483647, %v1486
      %v1585 = vand.u32 2147483647, %v1487
      %v1586 = vand.u32 2147483647, %v1488
      %v1587 = vand.u32 2147483647, %v1489
      %v1588 = vand.u32 2147483647, %v1490
      %v1589 = vand.u32 2147483647, %v1491
      %v1590 = vand.u32 2147483647, %v1492
      %v1591 = vand.u32 2147483647, %v1493
      %v1592 = vand.u32 2147483647, %v1494
      %v1593 = vand.u32 2147483647, %v1495
      %v1594 = vand.u32 2147483647, %v1496
      %v1595 = vsub.f32 1.0, %v1497
      %v1596 = vsub.f32 1.0, %v1498
      %v1597 = vsub.f32 1.0, %v1499
      %v1598 = vsub.f32 1.0, %v1500
      %v1599 = vsub.f32 1.0, %v1501
      %v1600 = vsub.f32 1.0, %v1502
      %v1601 = vsub.f32 1.0, %v1503
      %v1602 = vsub.f32 1.0, %v1504
      %v1603 = vsub.f32 1.0, %v1505
      %v1604 = vsub.f32 1.0, %v1506
      %v1605 = vsub.f32 1.0, %v1507
      %v1606 = vsub.f32 1.0, %v1508
      %v1607 = vsub.f32 1.0, %v1509
      %v1608 = vsub.f32 1.0, %v1510
      %v1609 = vsub.f32 1.0, %v1511
      %v1610 = vsub.f32 1.0, %v1512
      %v1611 = vsub.f32 1.0, %v1513
      %v1612 = vsub.f32 1.0, %v1514
      %v1613 = vsub.f32 1.0, %v1515
      %v1614 = vsub.f32 1.0, %v1516
      %v1615 = vsub.f32 1.0, %v1517
      %v1616 = vsub.f32 1.0, %v1518
      %v1617 = vsub.f32 1.0, %v1519
      %v1618 = vsub.f32 1.0, %v1520
      %v1619 = vsub.f32 1.0, %v1521
      %v1620 = vsub.f32 1.0, %v1522
      %v1621 = vsub.f32 1.0, %v1523
      %v1622 = vsub.f32 1.0, %v1524
      %v1623 = vsub.f32 1.0, %v1525
      %v1624 = vsub.f32 1.0, %v1526
      %v1625 = vsub.f32 1.0, %v1527
      %v1626 = vsub.f32 1.0, %v1528
      %v1627 = vsub.f32 1.0, %v1529
      %v1628 = vsub.f32 1.0, %v1530
      %v1629 = vsub.f32 1.0, %v1531
      %v1630 = vsub.f32 1.0, %v1532
      %v1631 = vsub.f32 1.0, %v1533
      %v1632 = vsub.f32 1.0, %v1534
      %v1633 = vsub.f32 1.0, %v1535
      %v1634 = vsub.f32 1.0, %v1536
      %v1635 = vsub.f32 1.0, %v1537
      %v1636 = vsub.f32 1.0, %v1538
      %v1637 = vsub.f32 1.0, %v1539
      %v1638 = vsub.f32 1.0, %v1540
      %v1639 = vsub.f32 1.0, %v1541
      %v1640 = vsub.f32 1.0, %v1542
      %v1641 = vsub.f32 1.0, %v1543
      %v1642 = vsub.f32 1.0, %v1544
      %v1643 = vsub.f32 1.0, %v1545
      %v1644 = vsub.f32 1.0, %v1546
      %v1645 = vsub.f32 1.0, %v1547
      %v1646 = vsub.f32 1.0, %v1548
      %v1647 = vsub.f32 1.0, %v1549
      %v1648 = vsub.f32 1.0, %v1550
      %v1649 = vsub.f32 1.0, %v1551
      %v1650 = vsub.f32 1.0, %v1552
      %v1651 = vsub.f32 1.0, %v1553
      %v1652 = vsub.f32 1.0, %v1554
      %v1653 = vsub.f32 1.0, %v1555
      %v1654 = vsub.f32 1.0, %v1556
      %v1655 = vsub.f32 1.0, %v1557
      %v1656 = vsub.f32 1.0, %v1558
      %v1657 = vsub.f32 1.0, %v1559
      %v1658 = vsub.f32 1.0, %v1560
      %v1659 = vsub.f32 1.0, %v1561
      %v1660 = vsub.f32 1.0, %v1562
      %v1661 = vsub.f32 1.0, %v1563
      %v1662 = vsub.f32 1.0, %v1564
      %v1663 = vsub.f32 1.0, %v1565
      %v1664 = vsub.f32 1.0, %v1566
      %v1665 = vsub.f32 1.0, %v1567
      %v1666 = vsub.f32 1.0, %v1568
      %v1667 = vsub.f32 1.0, %v1569
      %v1668 = vsub.f32 1.0, %v1570
      %v1669 = vsub.f32 1.0, %v1571
      %v1670 = vsub.f32 1.0, %v1572
      %v1671 = vsub.f32 1.0, %v1573
      %v1672 = vsub.f32 1.0, %v1574
      %v1673 = vsub.f32 1.0, %v1575
      %v1674 = vsub.f32 1.0, %v1576
      %v1675 = vsub.f32 1.0, %v1577
      %v1676 = vsub.f32 1.0, %v1578
      %v1677 = vsub.f32 1.0, %v1579
      %v1678 = vsub.f32 1.0, %v1580
      %v1679 = vsub.f32 1.0, %v1581
      %v1680 = vsub.f32 1.0, %v1582
      %v1681 = vsub.f32 1.0, %v1583
      %v1682 = vsub.f32 1.0, %v1584
      %v1683 = vsub.f32 1.0, %v1585
      %v1684 = vsub.f32 1.0, %v1586
      %v1685 = vsub.f32 1.0, %v1587
      %v1686 = vsub.f32 1.0, %v1588
      %v1687 = vsub.f32 1.0, %v1589
      %v1688 = vsub.f32 1.0, %v1590
      %v1689 = vsub.f32 1.0, %v1591
      %v1690 = vsub.f32 1.0, %v1592
      %v1691 = vsub.f32 1.0, %v1593
      %v1692 = vsub.f32 1.0, %v1594
      %v1693 = vmax.f32 %v1595, 0.0
      %v1694 = vmax.f32 %v1596, 0.0
      %v1695 = vmax.f32 %v1597, 0.0
      %v1696 = vmax.f32 %v1598, 0.0
      %v1697 = vmax.f32 %v1599, 0.0
      %v1698 = vmax.f32 %v1600, 0.0
      %v1699 = vmax.f32 %v1601, 0.0
      %v1700 = vmax.f32 %v1602, 0.0
      %v1701 = vmax.f32 %v1603, 0.0
      %v1702 = vmax.f32 %v1604, 0.0
      %v1703 = vmax.f32 %v1605, 0.0
      %v1704 = vmax.f32 %v1606, 0.0
      %v1705 = vmax.f32 %v1607, 0.0
      %v1706 = vmax.f32 %v1608, 0.0
      %v1707 = vmax.f32 %v1609, 0.0
      %v1708 = vmax.f32 %v1610, 0.0
      %v1709 = vmax.f32 %v1611, 0.0
      %v1710 = vmax.f32 %v1612, 0.0
      %v1711 = vmax.f32 %v1613, 0.0
      %v1712 = vmax.f32 %v1614, 0.0
      %v1713 = vmax.f32 %v1615, 0.0
      %v1714 = vmax.f32 %v1616, 0.0
      %v1715 = vmax.f32 %v1617, 0.0
      %v1716 = vmax.f32 %v1618, 0.0
      %v1717 = vmax.f32 %v1619, 0.0
      %v1718 = vmax.f32 %v1620, 0.0
      %v1719 = vmax.f32 %v1621, 0.0
      %v1720 = vmax.f32 %v1622, 0.0
      %v1721 = vmax.f32 %v1623, 0.0
      %v1722 = vmax.f32 %v1624, 0.0
      %v1723 = vmax.f32 %v1625, 0.0
      %v1724 = vmax.f32 %v1626, 0.0
      %v1725 = vmax.f32 %v1627, 0.0
      %v1726 = vmax.f32 %v1628, 0.0
      %v1727 = vmax.f32 %v1629, 0.0
      %v1728 = vmax.f32 %v1630, 0.0
      %v1729 = vmax.f32 %v1631, 0.0
      %v1730 = vmax.f32 %v1632, 0.0
      %v1731 = vmax.f32 %v1633, 0.0
      %v1732 = vmax.f32 %v1634, 0.0
      %v1733 = vmax.f32 %v1635, 0.0
      %v1734 = vmax.f32 %v1636, 0.0
      %v1735 = vmax.f32 %v1637, 0.0
      %v1736 = vmax.f32 %v1638, 0.0
      %v1737 = vmax.f32 %v1639, 0.0
      %v1738 = vmax.f32 %v1640, 0.0
      %v1739 = vmax.f32 %v1641, 0.0
      %v1740 = vmax.f32 %v1642, 0.0
      %v1741 = vmax.f32 %v1643, 0.0
      %v1742 = vmax.f32 %v1644, 0.0
      %v1743 = vmax.f32 %v1645, 0.0
      %v1744 = vmax.f32 %v1646, 0.0
      %v1745 = vmax.f32 %v1647, 0.0
      %v1746 = vmax.f32 %v1648, 0.0
      %v1747 = vmax.f32 %v1649, 0.0
      %v1748 = vmax.f32 %v1650, 0.0
      %v1749 = vmax.f32 %v1651, 0.0
      %v1750 = vmax.f32 %v1652, 0.0
      %v1751 = vmax.f32 %v1653, 0.0
      %v1752 = vmax.f32 %v1654, 0.0
      %v1753 = vmax.f32 %v1655, 0.0
      %v1754 = vmax.f32 %v1656, 0.0
      %v1755 = vmax.f32 %v1657, 0.0
      %v1756 = vmax.f32 %v1658, 0.0
      %v1757 = vmax.f32 %v1659, 0.0
      %v1758 = vmax.f32 %v1660, 0.0
      %v1759 = vmax.f32 %v1661, 0.0
      %v1760 = vmax.f32 %v1662, 0.0
      %v1761 = vmax.f32 %v1663, 0.0
      %v1762 = vmax.f32 %v1664, 0.0
      %v1763 = vmax.f32 %v1665, 0.0
      %v1764 = vmax.f32 %v1666, 0.0
      %v1765 = vmax.f32 %v1667, 0.0
      %v1766 = vmax.f32 %v1668, 0.0
      %v1767 = vmax.f32 %v1669, 0.0
      %v1768 = vmax.f32 %v1670, 0.0
      %v1769 = vmax.f32 %v1671, 0.0
      %v1770 = vmax.f32 %v1672, 0.0
      %v1771 = vmax.f32 %v1673, 0.0
      %v1772 = vmax.f32 %v1674, 0.0
      %v1773 = vmax.f32 %v1675, 0.0
      %v1774 = vmax.f32 %v1676, 0.0
      %v1775 = vmax.f32 %v1677, 0.0
      %v1776 = vmax.f32 %v1678, 0.0
      %v1777 = vmax.f32 %v1679, 0.0
      %v1778 = vmax.f32 %v1680, 0.0
      %v1779 = vmax.f32 %v1681, 0.0
      %v1780 = vmax.f32 %v1682, 0.0
      %v1781 = vmax.f32 %v1683, 0.0
      %v1782 = vmax.f32 %v1684, 0.0
      %v1783 = vmax.f32 %v1685, 0.0
      %v1784 = vmax.f32 %v1686, 0.0
      %v1785 = vmax.f32 %v1687, 0.0
      %v1786 = vmax.f32 %v1688, 0.0
      %v1787 = vmax.f32 %v1689, 0.0
      %v1788 = vmax.f32 %v1690, 0.0
      %v1789 = vmax.f32 %v1691, 0.0
      %v1790 = vmax.f32 %v1692, 0.0
      %v1791 = vadd.f32 %v1105, %v1693
      %v1792 = vadd.f32 %v1106, %v1694
      %v1793 = vadd.f32 %v1107, %v1695
      %v1794 = vadd.f32 %v1108, %v1696
      %v1795 = vadd.f32 %v1109, %v1697
      %v1796 = vadd.f32 %v1110, %v1698
      %v1797 = vadd.f32 %v1111, %v1699
      %v1798 = vadd.f32 %v1112, %v1700
      %v1799 = vadd.f32 %v1113, %v1701
      %v1800 = vadd.f32 %v1114, %v1702
      %v1801 = vadd.f32 %v1115, %v1703
      %v1802 = vadd.f32 %v1116, %v1704
      %v1803 = vadd.f32 %v1117, %v1705
      %v1804 = vadd.f32 %v1118, %v1706
      %v1805 = vadd.f32 %v1119, %v1707
      %v1806 = vadd.f32 %v1120, %v1708
      %v1807 = vadd.f32 %v1121, %v1709
      %v1808 = vadd.f32 %v1122, %v1710
      %v1809 = vadd.f32 %v1123, %v1711
      %v1810 = vadd.f32 %v1124, %v1712
      %v1811 = vadd.f32 %v1125, %v1713
      %v1812 = vadd.f32 %v1126, %v1714
      %v1813 = vadd.f32 %v1127, %v1715
      %v1814 = vadd.f32 %v1128, %v1716
      %v1815 = vadd.f32 %v1129, %v1717
      %v1816 = vadd.f32 %v1130, %v1718
      %v1817 = vadd.f32 %v1131, %v1719
      %v1818 = vadd.f32 %v1132, %v1720
      %v1819 = vadd.f32 %v1133, %v1721
      %v1820 = vadd.f32 %v1134, %v1722
      %v1821 = vadd.f32 %v1135, %v1723
      %v1822 = vadd.f32 %v1136, %v1724
      %v1823 = vadd.f32 %v1137, %v1725
      %v1824 = vadd.f32 %v1138, %v1726
      %v1825 = vadd.f32 %v1139, %v1727
      %v1826 = vadd.f32 %v1140, %v1728
      %v1827 = vadd.f32 %v1141, %v1729
      %v1828 = vadd.f32 %v1142, %v1730
      %v1829 = vadd.f32 %v1143, %v1731
      %v1830 = vadd.f32 %v1144, %v1732
      %v1831 = vadd.f32 %v1145, %v1733
      %v1832 = vadd.f32 %v1146, %v1734
      %v1833 = vadd.f32 %v1147, %v1735
      %v1834 = vadd.f32 %v1148, %v1736
      %v1835 = vadd.f32 %v1149, %v1737
      %v1836 = vadd.f32 %v1150, %v1738
      %v1837 = vadd.f32 %v1151, %v1739
      %v1838 = vadd.f32 %v1152, %v1740
      %v1839 = vadd.f32 %v1153, %v1741
      %v1840 = vadd.f32 %v1154, %v1742
      %v1841 = vadd.f32 %v1155, %v1743
      %v1842 = vadd.f32 %v1156, %v1744
      %v1843 = vadd.f32 %v1157, %v1745
      %v1844 = vadd.f32 %v1158, %v1746
      %v1845 = vadd.f32 %v1159, %v1747
      %v1846 = vadd.f32 %v1160, %v1748
      %v1847 = vadd.f32 %v1161, %v1749
      %v1848 = vadd.f32 %v1162, %v1750
      %v1849 = vadd.f32 %v1163, %v1751
      %v1850 = vadd.f32 %v1164, %v1752
      %v1851 = vadd.f32 %v1165, %v1753
      %v1852 = vadd.f32 %v1166, %v1754
      %v1853 = vadd.f32 %v1167, %v1755
      %v1854 = vadd.f32 %v1168, %v1756
      %v1855 = vadd.f32 %v1169, %v1757
      %v1856 = vadd.f32 %v1170, %v1758
      %v1857 = vadd.f32 %v1171, %v1759
      %v1858 = vadd.f32 %v1172, %v1760
      %v1859 = vadd.f32 %v1173, %v1761
      %v1860 = vadd.f32 %v1174, %v1762
      %v1861 = vadd.f32 %v1175, %v1763
      %v1862 = vadd.f32 %v1176, %v1764
      %v1863 = vadd.f32 %v1177, %v1765
      %v1864 = vadd.f32 %v1178, %v1766
      %v1865 = vadd.f32 %v1179, %v1767
      %v1866 = vadd.f32 %v1180, %v1768
      %v1867 = vadd.f32 %v1181, %v1769
      %v1868 = vadd.f32 %v1182, %v1770
      %v1869 = vadd.f32 %v1183, %v1771
      %v1870 = vadd.f32 %v1184, %v1772
      %v1871 = vadd.f32 %v1185, %v1773
      %v1872 = vadd.f32 %v1186, %v1774
      %v1873 = vadd.f32 %v1187, %v1775
      %v1874 = vadd.f32 %v1188, %v1776
      %v1875 = vadd.f32 %v1189, %v1777
      %v1876 = vadd.f32 %v1190, %v1778
      %v1877 = vadd.f32 %v1191, %v1779
      %v1878 = vadd.f32 %v1192, %v1780
      %v1879 = vadd.f32 %v1193, %v1781
      %v1880 = vadd.f32 %v1194, %v1782
      %v1881 = vadd.f32 %v1195, %v1783
      %v1882 = vadd.f32 %v1196, %v1784
      %v1883 = vadd.f32 %v1197, %v1785
      %v1884 = vadd.f32 %v1198, %v1786
      %v1885 = vadd.f32 %v1199, %v1787
      %v1886 = vadd.f32 %v1200, %v1788
      %v1887 = vadd.f32 %v1201, %v1789
      %v1888 = vadd.f32 %v1202, %v1790
      %1889 = vset.pattern.permute.xlu0 2
      %1890 = vperm.xlu0 %1889, %v506
      %v1891 = vpop.permute.xlu0 %1890
      %1893 = vset.pattern.permute.xlu0 2
      %1894 = vperm.xlu0 %1893, %v507
      %v1895 = vpop.permute.xlu0 %1894
      %1897 = vset.pattern.permute.xlu0 2
      %1898 = vperm.xlu0 %1897, %v508
      %v1899 = vpop.permute.xlu0 %1898
      %1901 = vset.pattern.permute.xlu0 2
      %1902 = vperm.xlu0 %1901, %v509
      %v1903 = vpop.permute.xlu0 %1902
      %1905 = vset.pattern.permute.xlu0 2
      %1906 = vperm.xlu0 %1905, %v510
      %v1907 = vpop.permute.xlu0 %1906
      %1909 = vset.pattern.permute.xlu0 2
      %1910 = vperm.xlu0 %1909, %v511
      %v1911 = vpop.permute.xlu0 %1910
      %1913 = vset.pattern.permute.xlu0 2
      %1914 = vperm.xlu0 %1913, %v512
      %v1915 = vpop.permute.xlu0 %1914
      %1917 = vset.pattern.permute.xlu0 2
      %1918 = vperm.xlu0 %1917, %v513
      %v1919 = vpop.permute.xlu0 %1918
      %1921 = vset.pattern.permute.xlu0 2
      %1922 = vperm.xlu0 %1921, %v514
      %v1923 = vpop.permute.xlu0 %1922
      %1925 = vset.pattern.permute.xlu0 2
      %1926 = vperm.xlu0 %1925, %v515
      %v1927 = vpop.permute.xlu0 %1926
      %1929 = vset.pattern.permute.xlu0 2
      %1930 = vperm.xlu0 %1929, %v516
      %v1931 = vpop.permute.xlu0 %1930
      %1933 = vset.pattern.permute.xlu0 2
      %1934 = vperm.xlu0 %1933, %v517
      %v1935 = vpop.permute.xlu0 %1934
      %1937 = vset.pattern.permute.xlu0 2
      %1938 = vperm.xlu0 %1937, %v518
      %v1939 = vpop.permute.xlu0 %1938
      %1941 = vset.pattern.permute.xlu0 2
      %1942 = vperm.xlu0 %1941, %v519
      %v1943 = vpop.permute.xlu0 %1942
      %1945 = vset.pattern.permute.xlu0 2
      %1946 = vperm.xlu0 %1945, %v520
      %v1947 = vpop.permute.xlu0 %1946
      %1949 = vset.pattern.permute.xlu0 2
      %1950 = vperm.xlu0 %1949, %v521
      %v1951 = vpop.permute.xlu0 %1950
      %1953 = vset.pattern.permute.xlu0 2
      %1954 = vperm.xlu0 %1953, %v522
      %v1955 = vpop.permute.xlu0 %1954
      %1957 = vset.pattern.permute.xlu0 2
      %1958 = vperm.xlu0 %1957, %v523
      %v1959 = vpop.permute.xlu0 %1958
      %1961 = vset.pattern.permute.xlu0 2
      %1962 = vperm.xlu0 %1961, %v524
      %v1963 = vpop.permute.xlu0 %1962
      %1965 = vset.pattern.permute.xlu0 2
      %1966 = vperm.xlu0 %1965, %v525
      %v1967 = vpop.permute.xlu0 %1966
      %1969 = vset.pattern.permute.xlu0 2
      %1970 = vperm.xlu0 %1969, %v526
      %v1971 = vpop.permute.xlu0 %1970
      %1973 = vset.pattern.permute.xlu0 2
      %1974 = vperm.xlu0 %1973, %v527
      %v1975 = vpop.permute.xlu0 %1974
      %1977 = vset.pattern.permute.xlu0 2
      %1978 = vperm.xlu0 %1977, %v528
      %v1979 = vpop.permute.xlu0 %1978
      %1981 = vset.pattern.permute.xlu0 2
      %1982 = vperm.xlu0 %1981, %v529
      %v1983 = vpop.permute.xlu0 %1982
      %1985 = vset.pattern.permute.xlu0 2
      %1986 = vperm.xlu0 %1985, %v530
      %v1987 = vpop.permute.xlu0 %1986
      %1989 = vset.pattern.permute.xlu0 2
      %1990 = vperm.xlu0 %1989, %v531
      %v1991 = vpop.permute.xlu0 %1990
      %1993 = vset.pattern.permute.xlu0 2
      %1994 = vperm.xlu0 %1993, %v532
      %v1995 = vpop.permute.xlu0 %1994
      %1997 = vset.pattern.permute.xlu0 2
      %1998 = vperm.xlu0 %1997, %v533
      %v1999 = vpop.permute.xlu0 %1998
      %2001 = vset.pattern.permute.xlu0 2
      %2002 = vperm.xlu0 %2001, %v534
      %v2003 = vpop.permute.xlu0 %2002
      %2005 = vset.pattern.permute.xlu0 2
      %2006 = vperm.xlu0 %2005, %v535
      %v2007 = vpop.permute.xlu0 %2006
      %2009 = vset.pattern.permute.xlu0 2
      %2010 = vperm.xlu0 %2009, %v536
      %v2011 = vpop.permute.xlu0 %2010
      %2013 = vset.pattern.permute.xlu0 2
      %2014 = vperm.xlu0 %2013, %v537
      %v2015 = vpop.permute.xlu0 %2014
      %2017 = vset.pattern.permute.xlu0 2
      %2018 = vperm.xlu0 %2017, %v538
      %v2019 = vpop.permute.xlu0 %2018
      %2021 = vset.pattern.permute.xlu0 2
      %2022 = vperm.xlu0 %2021, %v539
      %v2023 = vpop.permute.xlu0 %2022
      %2025 = vset.pattern.permute.xlu0 2
      %2026 = vperm.xlu0 %2025, %v540
      %v2027 = vpop.permute.xlu0 %2026
      %2029 = vset.pattern.permute.xlu0 2
      %2030 = vperm.xlu0 %2029, %v541
      %v2031 = vpop.permute.xlu0 %2030
      %2033 = vset.pattern.permute.xlu0 2
      %2034 = vperm.xlu0 %2033, %v542
      %v2035 = vpop.permute.xlu0 %2034
      %2037 = vset.pattern.permute.xlu0 2
      %2038 = vperm.xlu0 %2037, %v543
      %v2039 = vpop.permute.xlu0 %2038
      %2041 = vset.pattern.permute.xlu0 2
      %2042 = vperm.xlu0 %2041, %v544
      %v2043 = vpop.permute.xlu0 %2042
      %2045 = vset.pattern.permute.xlu0 2
      %2046 = vperm.xlu0 %2045, %v545
      %v2047 = vpop.permute.xlu0 %2046
      %2049 = vset.pattern.permute.xlu0 2
      %2050 = vperm.xlu0 %2049, %v546
      %v2051 = vpop.permute.xlu0 %2050
      %2053 = vset.pattern.permute.xlu0 2
      %2054 = vperm.xlu0 %2053, %v547
      %v2055 = vpop.permute.xlu0 %2054
      %2057 = vset.pattern.permute.xlu0 2
      %2058 = vperm.xlu0 %2057, %v548
      %v2059 = vpop.permute.xlu0 %2058
      %2061 = vset.pattern.permute.xlu0 2
      %2062 = vperm.xlu0 %2061, %v549
      %v2063 = vpop.permute.xlu0 %2062
      %2065 = vset.pattern.permute.xlu0 2
      %2066 = vperm.xlu0 %2065, %v550
      %v2067 = vpop.permute.xlu0 %2066
      %2069 = vset.pattern.permute.xlu0 2
      %2070 = vperm.xlu0 %2069, %v551
      %v2071 = vpop.permute.xlu0 %2070
      %2073 = vset.pattern.permute.xlu0 2
      %2074 = vperm.xlu0 %2073, %v552
      %v2075 = vpop.permute.xlu0 %2074
      %2077 = vset.pattern.permute.xlu0 2
      %2078 = vperm.xlu0 %2077, %v553
      %v2079 = vpop.permute.xlu0 %2078
      %2081 = vset.pattern.permute.xlu0 2
      %2082 = vperm.xlu0 %2081, %v554
      %v2083 = vpop.permute.xlu0 %2082
      %v2086 = vlaneseq
      %v2087 = vshrl.u32 %v2086, 7
      %v2088 = vsub.s32 0, %v2087
      %v2089 = vrot.slane %v211, %v2088
      %v2090 = vlaneseq
      %v2091 = vshrl.u32 %v2090, 7
      %v2092 = vsub.s32 1, %v2091
      %v2093 = vrot.slane %v211, %v2092
      %v2096 = vsub.f32 %v1891, %v2089
      %v2097 = vsub.f32 %v1891, %v2093
      %v2098 = vsub.f32 %v1895, %v2089
      %v2099 = vsub.f32 %v1895, %v2093
      %v2100 = vsub.f32 %v1899, %v2089
      %v2101 = vsub.f32 %v1899, %v2093
      %v2102 = vsub.f32 %v1903, %v2089
      %v2103 = vsub.f32 %v1903, %v2093
      %v2104 = vsub.f32 %v1907, %v2089
      %v2105 = vsub.f32 %v1907, %v2093
      %v2106 = vsub.f32 %v1911, %v2089
      %v2107 = vsub.f32 %v1911, %v2093
      %v2108 = vsub.f32 %v1915, %v2089
      %v2109 = vsub.f32 %v1915, %v2093
      %v2110 = vsub.f32 %v1919, %v2089
      %v2111 = vsub.f32 %v1919, %v2093
      %v2112 = vsub.f32 %v1923, %v2089
      %v2113 = vsub.f32 %v1923, %v2093
      %v2114 = vsub.f32 %v1927, %v2089
      %v2115 = vsub.f32 %v1927, %v2093
      %v2116 = vsub.f32 %v1931, %v2089
      %v2117 = vsub.f32 %v1931, %v2093
      %v2118 = vsub.f32 %v1935, %v2089
      %v2119 = vsub.f32 %v1935, %v2093
      %v2120 = vsub.f32 %v1939, %v2089
      %v2121 = vsub.f32 %v1939, %v2093
      %v2122 = vsub.f32 %v1943, %v2089
      %v2123 = vsub.f32 %v1943, %v2093
      %v2124 = vsub.f32 %v1947, %v2089
      %v2125 = vsub.f32 %v1947, %v2093
      %v2126 = vsub.f32 %v1951, %v2089
      %v2127 = vsub.f32 %v1951, %v2093
      %v2128 = vsub.f32 %v1955, %v2089
      %v2129 = vsub.f32 %v1955, %v2093
      %v2130 = vsub.f32 %v1959, %v2089
      %v2131 = vsub.f32 %v1959, %v2093
      %v2132 = vsub.f32 %v1963, %v2089
      %v2133 = vsub.f32 %v1963, %v2093
      %v2134 = vsub.f32 %v1967, %v2089
      %v2135 = vsub.f32 %v1967, %v2093
      %v2136 = vsub.f32 %v1971, %v2089
      %v2137 = vsub.f32 %v1971, %v2093
      %v2138 = vsub.f32 %v1975, %v2089
      %v2139 = vsub.f32 %v1975, %v2093
      %v2140 = vsub.f32 %v1979, %v2089
      %v2141 = vsub.f32 %v1979, %v2093
      %v2142 = vsub.f32 %v1983, %v2089
      %v2143 = vsub.f32 %v1983, %v2093
      %v2144 = vsub.f32 %v1987, %v2089
      %v2145 = vsub.f32 %v1987, %v2093
      %v2146 = vsub.f32 %v1991, %v2089
      %v2147 = vsub.f32 %v1991, %v2093
      %v2148 = vsub.f32 %v1995, %v2089
      %v2149 = vsub.f32 %v1995, %v2093
      %v2150 = vsub.f32 %v1999, %v2089
      %v2151 = vsub.f32 %v1999, %v2093
      %v2152 = vsub.f32 %v2003, %v2089
      %v2153 = vsub.f32 %v2003, %v2093
      %v2154 = vsub.f32 %v2007, %v2089
      %v2155 = vsub.f32 %v2007, %v2093
      %v2156 = vsub.f32 %v2011, %v2089
      %v2157 = vsub.f32 %v2011, %v2093
      %v2158 = vsub.f32 %v2015, %v2089
      %v2159 = vsub.f32 %v2015, %v2093
      %v2160 = vsub.f32 %v2019, %v2089
      %v2161 = vsub.f32 %v2019, %v2093
      %v2162 = vsub.f32 %v2023, %v2089
      %v2163 = vsub.f32 %v2023, %v2093
      %v2164 = vsub.f32 %v2027, %v2089
      %v2165 = vsub.f32 %v2027, %v2093
      %v2166 = vsub.f32 %v2031, %v2089
      %v2167 = vsub.f32 %v2031, %v2093
      %v2168 = vsub.f32 %v2035, %v2089
      %v2169 = vsub.f32 %v2035, %v2093
      %v2170 = vsub.f32 %v2039, %v2089
      %v2171 = vsub.f32 %v2039, %v2093
      %v2172 = vsub.f32 %v2043, %v2089
      %v2173 = vsub.f32 %v2043, %v2093
      %v2174 = vsub.f32 %v2047, %v2089
      %v2175 = vsub.f32 %v2047, %v2093
      %v2176 = vsub.f32 %v2051, %v2089
      %v2177 = vsub.f32 %v2051, %v2093
      %v2178 = vsub.f32 %v2055, %v2089
      %v2179 = vsub.f32 %v2055, %v2093
      %v2180 = vsub.f32 %v2059, %v2089
      %v2181 = vsub.f32 %v2059, %v2093
      %v2182 = vsub.f32 %v2063, %v2089
      %v2183 = vsub.f32 %v2063, %v2093
      %v2184 = vsub.f32 %v2067, %v2089
      %v2185 = vsub.f32 %v2067, %v2093
      %v2186 = vsub.f32 %v2071, %v2089
      %v2187 = vsub.f32 %v2071, %v2093
      %v2188 = vsub.f32 %v2075, %v2089
      %v2189 = vsub.f32 %v2075, %v2093
      %v2190 = vsub.f32 %v2079, %v2089
      %v2191 = vsub.f32 %v2079, %v2093
      %v2192 = vsub.f32 %v2083, %v2089
      %v2193 = vsub.f32 %v2083, %v2093
      %v2194 = vand.u32 2147483647, %v2096
      %v2195 = vand.u32 2147483647, %v2097
      %v2196 = vand.u32 2147483647, %v2098
      %v2197 = vand.u32 2147483647, %v2099
      %v2198 = vand.u32 2147483647, %v2100
      %v2199 = vand.u32 2147483647, %v2101
      %v2200 = vand.u32 2147483647, %v2102
      %v2201 = vand.u32 2147483647, %v2103
      %v2202 = vand.u32 2147483647, %v2104
      %v2203 = vand.u32 2147483647, %v2105
      %v2204 = vand.u32 2147483647, %v2106
      %v2205 = vand.u32 2147483647, %v2107
      %v2206 = vand.u32 2147483647, %v2108
      %v2207 = vand.u32 2147483647, %v2109
      %v2208 = vand.u32 2147483647, %v2110
      %v2209 = vand.u32 2147483647, %v2111
      %v2210 = vand.u32 2147483647, %v2112
      %v2211 = vand.u32 2147483647, %v2113
      %v2212 = vand.u32 2147483647, %v2114
      %v2213 = vand.u32 2147483647, %v2115
      %v2214 = vand.u32 2147483647, %v2116
      %v2215 = vand.u32 2147483647, %v2117
      %v2216 = vand.u32 2147483647, %v2118
      %v2217 = vand.u32 2147483647, %v2119
      %v2218 = vand.u32 2147483647, %v2120
      %v2219 = vand.u32 2147483647, %v2121
      %v2220 = vand.u32 2147483647, %v2122
      %v2221 = vand.u32 2147483647, %v2123
      %v2222 = vand.u32 2147483647, %v2124
      %v2223 = vand.u32 2147483647, %v2125
      %v2224 = vand.u32 2147483647, %v2126
      %v2225 = vand.u32 2147483647, %v2127
      %v2226 = vand.u32 2147483647, %v2128
      %v2227 = vand.u32 2147483647, %v2129
      %v2228 = vand.u32 2147483647, %v2130
      %v2229 = vand.u32 2147483647, %v2131
      %v2230 = vand.u32 2147483647, %v2132
      %v2231 = vand.u32 2147483647, %v2133
      %v2232 = vand.u32 2147483647, %v2134
      %v2233 = vand.u32 2147483647, %v2135
      %v2234 = vand.u32 2147483647, %v2136
      %v2235 = vand.u32 2147483647, %v2137
      %v2236 = vand.u32 2147483647, %v2138
      %v2237 = vand.u32 2147483647, %v2139
      %v2238 = vand.u32 2147483647, %v2140
      %v2239 = vand.u32 2147483647, %v2141
      %v2240 = vand.u32 2147483647, %v2142
      %v2241 = vand.u32 2147483647, %v2143
      %v2242 = vand.u32 2147483647, %v2144
      %v2243 = vand.u32 2147483647, %v2145
      %v2244 = vand.u32 2147483647, %v2146
      %v2245 = vand.u32 2147483647, %v2147
      %v2246 = vand.u32 2147483647, %v2148
      %v2247 = vand.u32 2147483647, %v2149
      %v2248 = vand.u32 2147483647, %v2150
      %v2249 = vand.u32 2147483647, %v2151
      %v2250 = vand.u32 2147483647, %v2152
      %v2251 = vand.u32 2147483647, %v2153
      %v2252 = vand.u32 2147483647, %v2154
      %v2253 = vand.u32 2147483647, %v2155
      %v2254 = vand.u32 2147483647, %v2156
      %v2255 = vand.u32 2147483647, %v2157
      %v2256 = vand.u32 2147483647, %v2158
      %v2257 = vand.u32 2147483647, %v2159
      %v2258 = vand.u32 2147483647, %v2160
      %v2259 = vand.u32 2147483647, %v2161
      %v2260 = vand.u32 2147483647, %v2162
      %v2261 = vand.u32 2147483647, %v2163
      %v2262 = vand.u32 2147483647, %v2164
      %v2263 = vand.u32 2147483647, %v2165
      %v2264 = vand.u32 2147483647, %v2166
      %v2265 = vand.u32 2147483647, %v2167
      %v2266 = vand.u32 2147483647, %v2168
      %v2267 = vand.u32 2147483647, %v2169
      %v2268 = vand.u32 2147483647, %v2170
      %v2269 = vand.u32 2147483647, %v2171
      %v2270 = vand.u32 2147483647, %v2172
      %v2271 = vand.u32 2147483647, %v2173
      %v2272 = vand.u32 2147483647, %v2174
      %v2273 = vand.u32 2147483647, %v2175
      %v2274 = vand.u32 2147483647, %v2176
      %v2275 = vand.u32 2147483647, %v2177
      %v2276 = vand.u32 2147483647, %v2178
      %v2277 = vand.u32 2147483647, %v2179
      %v2278 = vand.u32 2147483647, %v2180
      %v2279 = vand.u32 2147483647, %v2181
      %v2280 = vand.u32 2147483647, %v2182
      %v2281 = vand.u32 2147483647, %v2183
      %v2282 = vand.u32 2147483647, %v2184
      %v2283 = vand.u32 2147483647, %v2185
      %v2284 = vand.u32 2147483647, %v2186
      %v2285 = vand.u32 2147483647, %v2187
      %v2286 = vand.u32 2147483647, %v2188
      %v2287 = vand.u32 2147483647, %v2189
      %v2288 = vand.u32 2147483647, %v2190
      %v2289 = vand.u32 2147483647, %v2191
      %v2290 = vand.u32 2147483647, %v2192
      %v2291 = vand.u32 2147483647, %v2193
      %v2292 = vsub.f32 1.0, %v2194
      %v2293 = vsub.f32 1.0, %v2195
      %v2294 = vsub.f32 1.0, %v2196
      %v2295 = vsub.f32 1.0, %v2197
      %v2296 = vsub.f32 1.0, %v2198
      %v2297 = vsub.f32 1.0, %v2199
      %v2298 = vsub.f32 1.0, %v2200
      %v2299 = vsub.f32 1.0, %v2201
      %v2300 = vsub.f32 1.0, %v2202
      %v2301 = vsub.f32 1.0, %v2203
      %v2302 = vsub.f32 1.0, %v2204
      %v2303 = vsub.f32 1.0, %v2205
      %v2304 = vsub.f32 1.0, %v2206
      %v2305 = vsub.f32 1.0, %v2207
      %v2306 = vsub.f32 1.0, %v2208
      %v2307 = vsub.f32 1.0, %v2209
      %v2308 = vsub.f32 1.0, %v2210
      %v2309 = vsub.f32 1.0, %v2211
      %v2310 = vsub.f32 1.0, %v2212
      %v2311 = vsub.f32 1.0, %v2213
      %v2312 = vsub.f32 1.0, %v2214
      %v2313 = vsub.f32 1.0, %v2215
      %v2314 = vsub.f32 1.0, %v2216
      %v2315 = vsub.f32 1.0, %v2217
      %v2316 = vsub.f32 1.0, %v2218
      %v2317 = vsub.f32 1.0, %v2219
      %v2318 = vsub.f32 1.0, %v2220
      %v2319 = vsub.f32 1.0, %v2221
      %v2320 = vsub.f32 1.0, %v2222
      %v2321 = vsub.f32 1.0, %v2223
      %v2322 = vsub.f32 1.0, %v2224
      %v2323 = vsub.f32 1.0, %v2225
      %v2324 = vsub.f32 1.0, %v2226
      %v2325 = vsub.f32 1.0, %v2227
      %v2326 = vsub.f32 1.0, %v2228
      %v2327 = vsub.f32 1.0, %v2229
      %v2328 = vsub.f32 1.0, %v2230
      %v2329 = vsub.f32 1.0, %v2231
      %v2330 = vsub.f32 1.0, %v2232
      %v2331 = vsub.f32 1.0, %v2233
      %v2332 = vsub.f32 1.0, %v2234
      %v2333 = vsub.f32 1.0, %v2235
      %v2334 = vsub.f32 1.0, %v2236
      %v2335 = vsub.f32 1.0, %v2237
      %v2336 = vsub.f32 1.0, %v2238
      %v2337 = vsub.f32 1.0, %v2239
      %v2338 = vsub.f32 1.0, %v2240
      %v2339 = vsub.f32 1.0, %v2241
      %v2340 = vsub.f32 1.0, %v2242
      %v2341 = vsub.f32 1.0, %v2243
      %v2342 = vsub.f32 1.0, %v2244
      %v2343 = vsub.f32 1.0, %v2245
      %v2344 = vsub.f32 1.0, %v2246
      %v2345 = vsub.f32 1.0, %v2247
      %v2346 = vsub.f32 1.0, %v2248
      %v2347 = vsub.f32 1.0, %v2249
      %v2348 = vsub.f32 1.0, %v2250
      %v2349 = vsub.f32 1.0, %v2251
      %v2350 = vsub.f32 1.0, %v2252
      %v2351 = vsub.f32 1.0, %v2253
      %v2352 = vsub.f32 1.0, %v2254
      %v2353 = vsub.f32 1.0, %v2255
      %v2354 = vsub.f32 1.0, %v2256
      %v2355 = vsub.f32 1.0, %v2257
      %v2356 = vsub.f32 1.0, %v2258
      %v2357 = vsub.f32 1.0, %v2259
      %v2358 = vsub.f32 1.0, %v2260
      %v2359 = vsub.f32 1.0, %v2261
      %v2360 = vsub.f32 1.0, %v2262
      %v2361 = vsub.f32 1.0, %v2263
      %v2362 = vsub.f32 1.0, %v2264
      %v2363 = vsub.f32 1.0, %v2265
      %v2364 = vsub.f32 1.0, %v2266
      %v2365 = vsub.f32 1.0, %v2267
      %v2366 = vsub.f32 1.0, %v2268
      %v2367 = vsub.f32 1.0, %v2269
      %v2368 = vsub.f32 1.0, %v2270
      %v2369 = vsub.f32 1.0, %v2271
      %v2370 = vsub.f32 1.0, %v2272
      %v2371 = vsub.f32 1.0, %v2273
      %v2372 = vsub.f32 1.0, %v2274
      %v2373 = vsub.f32 1.0, %v2275
      %v2374 = vsub.f32 1.0, %v2276
      %v2375 = vsub.f32 1.0, %v2277
      %v2376 = vsub.f32 1.0, %v2278
      %v2377 = vsub.f32 1.0, %v2279
      %v2378 = vsub.f32 1.0, %v2280
      %v2379 = vsub.f32 1.0, %v2281
      %v2380 = vsub.f32 1.0, %v2282
      %v2381 = vsub.f32 1.0, %v2283
      %v2382 = vsub.f32 1.0, %v2284
      %v2383 = vsub.f32 1.0, %v2285
      %v2384 = vsub.f32 1.0, %v2286
      %v2385 = vsub.f32 1.0, %v2287
      %v2386 = vsub.f32 1.0, %v2288
      %v2387 = vsub.f32 1.0, %v2289
      %v2388 = vsub.f32 1.0, %v2290
      %v2389 = vsub.f32 1.0, %v2291
      %v2390 = vmax.f32 %v2292, 0.0
      %v2391 = vmax.f32 %v2293, 0.0
      %v2392 = vmax.f32 %v2294, 0.0
      %v2393 = vmax.f32 %v2295, 0.0
      %v2394 = vmax.f32 %v2296, 0.0
      %v2395 = vmax.f32 %v2297, 0.0
      %v2396 = vmax.f32 %v2298, 0.0
      %v2397 = vmax.f32 %v2299, 0.0
      %v2398 = vmax.f32 %v2300, 0.0
      %v2399 = vmax.f32 %v2301, 0.0
      %v2400 = vmax.f32 %v2302, 0.0
      %v2401 = vmax.f32 %v2303, 0.0
      %v2402 = vmax.f32 %v2304, 0.0
      %v2403 = vmax.f32 %v2305, 0.0
      %v2404 = vmax.f32 %v2306, 0.0
      %v2405 = vmax.f32 %v2307, 0.0
      %v2406 = vmax.f32 %v2308, 0.0
      %v2407 = vmax.f32 %v2309, 0.0
      %v2408 = vmax.f32 %v2310, 0.0
      %v2409 = vmax.f32 %v2311, 0.0
      %v2410 = vmax.f32 %v2312, 0.0
      %v2411 = vmax.f32 %v2313, 0.0
      %v2412 = vmax.f32 %v2314, 0.0
      %v2413 = vmax.f32 %v2315, 0.0
      %v2414 = vmax.f32 %v2316, 0.0
      %v2415 = vmax.f32 %v2317, 0.0
      %v2416 = vmax.f32 %v2318, 0.0
      %v2417 = vmax.f32 %v2319, 0.0
      %v2418 = vmax.f32 %v2320, 0.0
      %v2419 = vmax.f32 %v2321, 0.0
      %v2420 = vmax.f32 %v2322, 0.0
      %v2421 = vmax.f32 %v2323, 0.0
      %v2422 = vmax.f32 %v2324, 0.0
      %v2423 = vmax.f32 %v2325, 0.0
      %v2424 = vmax.f32 %v2326, 0.0
      %v2425 = vmax.f32 %v2327, 0.0
      %v2426 = vmax.f32 %v2328, 0.0
      %v2427 = vmax.f32 %v2329, 0.0
      %v2428 = vmax.f32 %v2330, 0.0
      %v2429 = vmax.f32 %v2331, 0.0
      %v2430 = vmax.f32 %v2332, 0.0
      %v2431 = vmax.f32 %v2333, 0.0
      %v2432 = vmax.f32 %v2334, 0.0
      %v2433 = vmax.f32 %v2335, 0.0
      %v2434 = vmax.f32 %v2336, 0.0
      %v2435 = vmax.f32 %v2337, 0.0
      %v2436 = vmax.f32 %v2338, 0.0
      %v2437 = vmax.f32 %v2339, 0.0
      %v2438 = vmax.f32 %v2340, 0.0
      %v2439 = vmax.f32 %v2341, 0.0
      %v2440 = vmax.f32 %v2342, 0.0
      %v2441 = vmax.f32 %v2343, 0.0
      %v2442 = vmax.f32 %v2344, 0.0
      %v2443 = vmax.f32 %v2345, 0.0
      %v2444 = vmax.f32 %v2346, 0.0
      %v2445 = vmax.f32 %v2347, 0.0
      %v2446 = vmax.f32 %v2348, 0.0
      %v2447 = vmax.f32 %v2349, 0.0
      %v2448 = vmax.f32 %v2350, 0.0
      %v2449 = vmax.f32 %v2351, 0.0
      %v2450 = vmax.f32 %v2352, 0.0
      %v2451 = vmax.f32 %v2353, 0.0
      %v2452 = vmax.f32 %v2354, 0.0
      %v2453 = vmax.f32 %v2355, 0.0
      %v2454 = vmax.f32 %v2356, 0.0
      %v2455 = vmax.f32 %v2357, 0.0
      %v2456 = vmax.f32 %v2358, 0.0
      %v2457 = vmax.f32 %v2359, 0.0
      %v2458 = vmax.f32 %v2360, 0.0
      %v2459 = vmax.f32 %v2361, 0.0
      %v2460 = vmax.f32 %v2362, 0.0
      %v2461 = vmax.f32 %v2363, 0.0
      %v2462 = vmax.f32 %v2364, 0.0
      %v2463 = vmax.f32 %v2365, 0.0
      %v2464 = vmax.f32 %v2366, 0.0
      %v2465 = vmax.f32 %v2367, 0.0
      %v2466 = vmax.f32 %v2368, 0.0
      %v2467 = vmax.f32 %v2369, 0.0
      %v2468 = vmax.f32 %v2370, 0.0
      %v2469 = vmax.f32 %v2371, 0.0
      %v2470 = vmax.f32 %v2372, 0.0
      %v2471 = vmax.f32 %v2373, 0.0
      %v2472 = vmax.f32 %v2374, 0.0
      %v2473 = vmax.f32 %v2375, 0.0
      %v2474 = vmax.f32 %v2376, 0.0
      %v2475 = vmax.f32 %v2377, 0.0
      %v2476 = vmax.f32 %v2378, 0.0
      %v2477 = vmax.f32 %v2379, 0.0
      %v2478 = vmax.f32 %v2380, 0.0
      %v2479 = vmax.f32 %v2381, 0.0
      %v2480 = vmax.f32 %v2382, 0.0
      %v2481 = vmax.f32 %v2383, 0.0
      %v2482 = vmax.f32 %v2384, 0.0
      %v2483 = vmax.f32 %v2385, 0.0
      %v2484 = vmax.f32 %v2386, 0.0
      %v2485 = vmax.f32 %v2387, 0.0
      %v2486 = vmax.f32 %v2388, 0.0
      %v2487 = vmax.f32 %v2389, 0.0
      %2488 = vset.pattern.permute.xlu0 3
      %2489 = vperm.xlu0 %2488, %v506
      %v2490 = vpop.permute.xlu0 %2489
      %2492 = vset.pattern.permute.xlu0 3
      %2493 = vperm.xlu0 %2492, %v507
      %v2494 = vpop.permute.xlu0 %2493
      %2496 = vset.pattern.permute.xlu0 3
      %2497 = vperm.xlu0 %2496, %v508
      %v2498 = vpop.permute.xlu0 %2497
      %2500 = vset.pattern.permute.xlu0 3
      %2501 = vperm.xlu0 %2500, %v509
      %v2502 = vpop.permute.xlu0 %2501
      %2504 = vset.pattern.permute.xlu0 3
      %2505 = vperm.xlu0 %2504, %v510
      %v2506 = vpop.permute.xlu0 %2505
      %2508 = vset.pattern.permute.xlu0 3
      %2509 = vperm.xlu0 %2508, %v511
      %v2510 = vpop.permute.xlu0 %2509
      %2512 = vset.pattern.permute.xlu0 3
      %2513 = vperm.xlu0 %2512, %v512
      %v2514 = vpop.permute.xlu0 %2513
      %2516 = vset.pattern.permute.xlu0 3
      %2517 = vperm.xlu0 %2516, %v513
      %v2518 = vpop.permute.xlu0 %2517
      %2520 = vset.pattern.permute.xlu0 3
      %2521 = vperm.xlu0 %2520, %v514
      %v2522 = vpop.permute.xlu0 %2521
      %2524 = vset.pattern.permute.xlu0 3
      %2525 = vperm.xlu0 %2524, %v515
      %v2526 = vpop.permute.xlu0 %2525
      %2528 = vset.pattern.permute.xlu0 3
      %2529 = vperm.xlu0 %2528, %v516
      %v2530 = vpop.permute.xlu0 %2529
      %2532 = vset.pattern.permute.xlu0 3
      %2533 = vperm.xlu0 %2532, %v517
      %v2534 = vpop.permute.xlu0 %2533
      %2536 = vset.pattern.permute.xlu0 3
      %2537 = vperm.xlu0 %2536, %v518
      %v2538 = vpop.permute.xlu0 %2537
      %2540 = vset.pattern.permute.xlu0 3
      %2541 = vperm.xlu0 %2540, %v519
      %v2542 = vpop.permute.xlu0 %2541
      %2544 = vset.pattern.permute.xlu0 3
      %2545 = vperm.xlu0 %2544, %v520
      %v2546 = vpop.permute.xlu0 %2545
      %2548 = vset.pattern.permute.xlu0 3
      %2549 = vperm.xlu0 %2548, %v521
      %v2550 = vpop.permute.xlu0 %2549
      %2552 = vset.pattern.permute.xlu0 3
      %2553 = vperm.xlu0 %2552, %v522
      %v2554 = vpop.permute.xlu0 %2553
      %2556 = vset.pattern.permute.xlu0 3
      %2557 = vperm.xlu0 %2556, %v523
      %v2558 = vpop.permute.xlu0 %2557
      %2560 = vset.pattern.permute.xlu0 3
      %2561 = vperm.xlu0 %2560, %v524
      %v2562 = vpop.permute.xlu0 %2561
      %2564 = vset.pattern.permute.xlu0 3
      %2565 = vperm.xlu0 %2564, %v525
      %v2566 = vpop.permute.xlu0 %2565
      %2568 = vset.pattern.permute.xlu0 3
      %2569 = vperm.xlu0 %2568, %v526
      %v2570 = vpop.permute.xlu0 %2569
      %2572 = vset.pattern.permute.xlu0 3
      %2573 = vperm.xlu0 %2572, %v527
      %v2574 = vpop.permute.xlu0 %2573
      %2576 = vset.pattern.permute.xlu0 3
      %2577 = vperm.xlu0 %2576, %v528
      %v2578 = vpop.permute.xlu0 %2577
      %2580 = vset.pattern.permute.xlu0 3
      %2581 = vperm.xlu0 %2580, %v529
      %v2582 = vpop.permute.xlu0 %2581
      %2584 = vset.pattern.permute.xlu0 3
      %2585 = vperm.xlu0 %2584, %v530
      %v2586 = vpop.permute.xlu0 %2585
      %2588 = vset.pattern.permute.xlu0 3
      %2589 = vperm.xlu0 %2588, %v531
      %v2590 = vpop.permute.xlu0 %2589
      %2592 = vset.pattern.permute.xlu0 3
      %2593 = vperm.xlu0 %2592, %v532
      %v2594 = vpop.permute.xlu0 %2593
      %2596 = vset.pattern.permute.xlu0 3
      %2597 = vperm.xlu0 %2596, %v533
      %v2598 = vpop.permute.xlu0 %2597
      %2600 = vset.pattern.permute.xlu0 3
      %2601 = vperm.xlu0 %2600, %v534
      %v2602 = vpop.permute.xlu0 %2601
      %2604 = vset.pattern.permute.xlu0 3
      %2605 = vperm.xlu0 %2604, %v535
      %v2606 = vpop.permute.xlu0 %2605
      %2608 = vset.pattern.permute.xlu0 3
      %2609 = vperm.xlu0 %2608, %v536
      %v2610 = vpop.permute.xlu0 %2609
      %2612 = vset.pattern.permute.xlu0 3
      %2613 = vperm.xlu0 %2612, %v537
      %v2614 = vpop.permute.xlu0 %2613
      %2616 = vset.pattern.permute.xlu0 3
      %2617 = vperm.xlu0 %2616, %v538
      %v2618 = vpop.permute.xlu0 %2617
      %2620 = vset.pattern.permute.xlu0 3
      %2621 = vperm.xlu0 %2620, %v539
      %v2622 = vpop.permute.xlu0 %2621
      %2624 = vset.pattern.permute.xlu0 3
      %2625 = vperm.xlu0 %2624, %v540
      %v2626 = vpop.permute.xlu0 %2625
      %2628 = vset.pattern.permute.xlu0 3
      %2629 = vperm.xlu0 %2628, %v541
      %v2630 = vpop.permute.xlu0 %2629
      %2632 = vset.pattern.permute.xlu0 3
      %2633 = vperm.xlu0 %2632, %v542
      %v2634 = vpop.permute.xlu0 %2633
      %2636 = vset.pattern.permute.xlu0 3
      %2637 = vperm.xlu0 %2636, %v543
      %v2638 = vpop.permute.xlu0 %2637
      %2640 = vset.pattern.permute.xlu0 3
      %2641 = vperm.xlu0 %2640, %v544
      %v2642 = vpop.permute.xlu0 %2641
      %2644 = vset.pattern.permute.xlu0 3
      %2645 = vperm.xlu0 %2644, %v545
      %v2646 = vpop.permute.xlu0 %2645
      %2648 = vset.pattern.permute.xlu0 3
      %2649 = vperm.xlu0 %2648, %v546
      %v2650 = vpop.permute.xlu0 %2649
      %2652 = vset.pattern.permute.xlu0 3
      %2653 = vperm.xlu0 %2652, %v547
      %v2654 = vpop.permute.xlu0 %2653
      %2656 = vset.pattern.permute.xlu0 3
      %2657 = vperm.xlu0 %2656, %v548
      %v2658 = vpop.permute.xlu0 %2657
      %2660 = vset.pattern.permute.xlu0 3
      %2661 = vperm.xlu0 %2660, %v549
      %v2662 = vpop.permute.xlu0 %2661
      %2664 = vset.pattern.permute.xlu0 3
      %2665 = vperm.xlu0 %2664, %v550
      %v2666 = vpop.permute.xlu0 %2665
      %2668 = vset.pattern.permute.xlu0 3
      %2669 = vperm.xlu0 %2668, %v551
      %v2670 = vpop.permute.xlu0 %2669
      %2672 = vset.pattern.permute.xlu0 3
      %2673 = vperm.xlu0 %2672, %v552
      %v2674 = vpop.permute.xlu0 %2673
      %2676 = vset.pattern.permute.xlu0 3
      %2677 = vperm.xlu0 %2676, %v553
      %v2678 = vpop.permute.xlu0 %2677
      %2680 = vset.pattern.permute.xlu0 3
      %2681 = vperm.xlu0 %2680, %v554
      %v2682 = vpop.permute.xlu0 %2681
      %v2684 = vsub.f32 %v2490, %v2089
      %v2685 = vsub.f32 %v2490, %v2093
      %v2686 = vsub.f32 %v2494, %v2089
      %v2687 = vsub.f32 %v2494, %v2093
      %v2688 = vsub.f32 %v2498, %v2089
      %v2689 = vsub.f32 %v2498, %v2093
      %v2690 = vsub.f32 %v2502, %v2089
      %v2691 = vsub.f32 %v2502, %v2093
      %v2692 = vsub.f32 %v2506, %v2089
      %v2693 = vsub.f32 %v2506, %v2093
      %v2694 = vsub.f32 %v2510, %v2089
      %v2695 = vsub.f32 %v2510, %v2093
      %v2696 = vsub.f32 %v2514, %v2089
      %v2697 = vsub.f32 %v2514, %v2093
      %v2698 = vsub.f32 %v2518, %v2089
      %v2699 = vsub.f32 %v2518, %v2093
      %v2700 = vsub.f32 %v2522, %v2089
      %v2701 = vsub.f32 %v2522, %v2093
      %v2702 = vsub.f32 %v2526, %v2089
      %v2703 = vsub.f32 %v2526, %v2093
      %v2704 = vsub.f32 %v2530, %v2089
      %v2705 = vsub.f32 %v2530, %v2093
      %v2706 = vsub.f32 %v2534, %v2089
      %v2707 = vsub.f32 %v2534, %v2093
      %v2708 = vsub.f32 %v2538, %v2089
      %v2709 = vsub.f32 %v2538, %v2093
      %v2710 = vsub.f32 %v2542, %v2089
      %v2711 = vsub.f32 %v2542, %v2093
      %v2712 = vsub.f32 %v2546, %v2089
      %v2713 = vsub.f32 %v2546, %v2093
      %v2714 = vsub.f32 %v2550, %v2089
      %v2715 = vsub.f32 %v2550, %v2093
      %v2716 = vsub.f32 %v2554, %v2089
      %v2717 = vsub.f32 %v2554, %v2093
      %v2718 = vsub.f32 %v2558, %v2089
      %v2719 = vsub.f32 %v2558, %v2093
      %v2720 = vsub.f32 %v2562, %v2089
      %v2721 = vsub.f32 %v2562, %v2093
      %v2722 = vsub.f32 %v2566, %v2089
      %v2723 = vsub.f32 %v2566, %v2093
      %v2724 = vsub.f32 %v2570, %v2089
      %v2725 = vsub.f32 %v2570, %v2093
      %v2726 = vsub.f32 %v2574, %v2089
      %v2727 = vsub.f32 %v2574, %v2093
      %v2728 = vsub.f32 %v2578, %v2089
      %v2729 = vsub.f32 %v2578, %v2093
      %v2730 = vsub.f32 %v2582, %v2089
      %v2731 = vsub.f32 %v2582, %v2093
      %v2732 = vsub.f32 %v2586, %v2089
      %v2733 = vsub.f32 %v2586, %v2093
      %v2734 = vsub.f32 %v2590, %v2089
      %v2735 = vsub.f32 %v2590, %v2093
      %v2736 = vsub.f32 %v2594, %v2089
      %v2737 = vsub.f32 %v2594, %v2093
      %v2738 = vsub.f32 %v2598, %v2089
      %v2739 = vsub.f32 %v2598, %v2093
      %v2740 = vsub.f32 %v2602, %v2089
      %v2741 = vsub.f32 %v2602, %v2093
      %v2742 = vsub.f32 %v2606, %v2089
      %v2743 = vsub.f32 %v2606, %v2093
      %v2744 = vsub.f32 %v2610, %v2089
      %v2745 = vsub.f32 %v2610, %v2093
      %v2746 = vsub.f32 %v2614, %v2089
      %v2747 = vsub.f32 %v2614, %v2093
      %v2748 = vsub.f32 %v2618, %v2089
      %v2749 = vsub.f32 %v2618, %v2093
      %v2750 = vsub.f32 %v2622, %v2089
      %v2751 = vsub.f32 %v2622, %v2093
      %v2752 = vsub.f32 %v2626, %v2089
      %v2753 = vsub.f32 %v2626, %v2093
      %v2754 = vsub.f32 %v2630, %v2089
      %v2755 = vsub.f32 %v2630, %v2093
      %v2756 = vsub.f32 %v2634, %v2089
      %v2757 = vsub.f32 %v2634, %v2093
      %v2758 = vsub.f32 %v2638, %v2089
      %v2759 = vsub.f32 %v2638, %v2093
      %v2760 = vsub.f32 %v2642, %v2089
      %v2761 = vsub.f32 %v2642, %v2093
      %v2762 = vsub.f32 %v2646, %v2089
      %v2763 = vsub.f32 %v2646, %v2093
      %v2764 = vsub.f32 %v2650, %v2089
      %v2765 = vsub.f32 %v2650, %v2093
      %v2766 = vsub.f32 %v2654, %v2089
      %v2767 = vsub.f32 %v2654, %v2093
      %v2768 = vsub.f32 %v2658, %v2089
      %v2769 = vsub.f32 %v2658, %v2093
      %v2770 = vsub.f32 %v2662, %v2089
      %v2771 = vsub.f32 %v2662, %v2093
      %v2772 = vsub.f32 %v2666, %v2089
      %v2773 = vsub.f32 %v2666, %v2093
      %v2774 = vsub.f32 %v2670, %v2089
      %v2775 = vsub.f32 %v2670, %v2093
      %v2776 = vsub.f32 %v2674, %v2089
      %v2777 = vsub.f32 %v2674, %v2093
      %v2778 = vsub.f32 %v2678, %v2089
      %v2779 = vsub.f32 %v2678, %v2093
      %v2780 = vsub.f32 %v2682, %v2089
      %v2781 = vsub.f32 %v2682, %v2093
      %v2782 = vand.u32 2147483647, %v2684
      %v2783 = vand.u32 2147483647, %v2685
      %v2784 = vand.u32 2147483647, %v2686
      %v2785 = vand.u32 2147483647, %v2687
      %v2786 = vand.u32 2147483647, %v2688
      %v2787 = vand.u32 2147483647, %v2689
      %v2788 = vand.u32 2147483647, %v2690
      %v2789 = vand.u32 2147483647, %v2691
      %v2790 = vand.u32 2147483647, %v2692
      %v2791 = vand.u32 2147483647, %v2693
      %v2792 = vand.u32 2147483647, %v2694
      %v2793 = vand.u32 2147483647, %v2695
      %v2794 = vand.u32 2147483647, %v2696
      %v2795 = vand.u32 2147483647, %v2697
      %v2796 = vand.u32 2147483647, %v2698
      %v2797 = vand.u32 2147483647, %v2699
      %v2798 = vand.u32 2147483647, %v2700
      %v2799 = vand.u32 2147483647, %v2701
      %v2800 = vand.u32 2147483647, %v2702
      %v2801 = vand.u32 2147483647, %v2703
      %v2802 = vand.u32 2147483647, %v2704
      %v2803 = vand.u32 2147483647, %v2705
      %v2804 = vand.u32 2147483647, %v2706
      %v2805 = vand.u32 2147483647, %v2707
      %v2806 = vand.u32 2147483647, %v2708
      %v2807 = vand.u32 2147483647, %v2709
      %v2808 = vand.u32 2147483647, %v2710
      %v2809 = vand.u32 2147483647, %v2711
      %v2810 = vand.u32 2147483647, %v2712
      %v2811 = vand.u32 2147483647, %v2713
      %v2812 = vand.u32 2147483647, %v2714
      %v2813 = vand.u32 2147483647, %v2715
      %v2814 = vand.u32 2147483647, %v2716
      %v2815 = vand.u32 2147483647, %v2717
      %v2816 = vand.u32 2147483647, %v2718
      %v2817 = vand.u32 2147483647, %v2719
      %v2818 = vand.u32 2147483647, %v2720
      %v2819 = vand.u32 2147483647, %v2721
      %v2820 = vand.u32 2147483647, %v2722
      %v2821 = vand.u32 2147483647, %v2723
      %v2822 = vand.u32 2147483647, %v2724
      %v2823 = vand.u32 2147483647, %v2725
      %v2824 = vand.u32 2147483647, %v2726
      %v2825 = vand.u32 2147483647, %v2727
      %v2826 = vand.u32 2147483647, %v2728
      %v2827 = vand.u32 2147483647, %v2729
      %v2828 = vand.u32 2147483647, %v2730
      %v2829 = vand.u32 2147483647, %v2731
      %v2830 = vand.u32 2147483647, %v2732
      %v2831 = vand.u32 2147483647, %v2733
      %v2832 = vand.u32 2147483647, %v2734
      %v2833 = vand.u32 2147483647, %v2735
      %v2834 = vand.u32 2147483647, %v2736
      %v2835 = vand.u32 2147483647, %v2737
      %v2836 = vand.u32 2147483647, %v2738
      %v2837 = vand.u32 2147483647, %v2739
      %v2838 = vand.u32 2147483647, %v2740
      %v2839 = vand.u32 2147483647, %v2741
      %v2840 = vand.u32 2147483647, %v2742
      %v2841 = vand.u32 2147483647, %v2743
      %v2842 = vand.u32 2147483647, %v2744
      %v2843 = vand.u32 2147483647, %v2745
      %v2844 = vand.u32 2147483647, %v2746
      %v2845 = vand.u32 2147483647, %v2747
      %v2846 = vand.u32 2147483647, %v2748
      %v2847 = vand.u32 2147483647, %v2749
      %v2848 = vand.u32 2147483647, %v2750
      %v2849 = vand.u32 2147483647, %v2751
      %v2850 = vand.u32 2147483647, %v2752
      %v2851 = vand.u32 2147483647, %v2753
      %v2852 = vand.u32 2147483647, %v2754
      %v2853 = vand.u32 2147483647, %v2755
      %v2854 = vand.u32 2147483647, %v2756
      %v2855 = vand.u32 2147483647, %v2757
      %v2856 = vand.u32 2147483647, %v2758
      %v2857 = vand.u32 2147483647, %v2759
      %v2858 = vand.u32 2147483647, %v2760
      %v2859 = vand.u32 2147483647, %v2761
      %v2860 = vand.u32 2147483647, %v2762
      %v2861 = vand.u32 2147483647, %v2763
      %v2862 = vand.u32 2147483647, %v2764
      %v2863 = vand.u32 2147483647, %v2765
      %v2864 = vand.u32 2147483647, %v2766
      %v2865 = vand.u32 2147483647, %v2767
      %v2866 = vand.u32 2147483647, %v2768
      %v2867 = vand.u32 2147483647, %v2769
      %v2868 = vand.u32 2147483647, %v2770
      %v2869 = vand.u32 2147483647, %v2771
      %v2870 = vand.u32 2147483647, %v2772
      %v2871 = vand.u32 2147483647, %v2773
      %v2872 = vand.u32 2147483647, %v2774
      %v2873 = vand.u32 2147483647, %v2775
      %v2874 = vand.u32 2147483647, %v2776
      %v2875 = vand.u32 2147483647, %v2777
      %v2876 = vand.u32 2147483647, %v2778
      %v2877 = vand.u32 2147483647, %v2779
      %v2878 = vand.u32 2147483647, %v2780
      %v2879 = vand.u32 2147483647, %v2781
      %v2880 = vsub.f32 1.0, %v2782
      %v2881 = vsub.f32 1.0, %v2783
      %v2882 = vsub.f32 1.0, %v2784
      %v2883 = vsub.f32 1.0, %v2785
      %v2884 = vsub.f32 1.0, %v2786
      %v2885 = vsub.f32 1.0, %v2787
      %v2886 = vsub.f32 1.0, %v2788
      %v2887 = vsub.f32 1.0, %v2789
      %v2888 = vsub.f32 1.0, %v2790
      %v2889 = vsub.f32 1.0, %v2791
      %v2890 = vsub.f32 1.0, %v2792
      %v2891 = vsub.f32 1.0, %v2793
      %v2892 = vsub.f32 1.0, %v2794
      %v2893 = vsub.f32 1.0, %v2795
      %v2894 = vsub.f32 1.0, %v2796
      %v2895 = vsub.f32 1.0, %v2797
      %v2896 = vsub.f32 1.0, %v2798
      %v2897 = vsub.f32 1.0, %v2799
      %v2898 = vsub.f32 1.0, %v2800
      %v2899 = vsub.f32 1.0, %v2801
      %v2900 = vsub.f32 1.0, %v2802
      %v2901 = vsub.f32 1.0, %v2803
      %v2902 = vsub.f32 1.0, %v2804
      %v2903 = vsub.f32 1.0, %v2805
      %v2904 = vsub.f32 1.0, %v2806
      %v2905 = vsub.f32 1.0, %v2807
      %v2906 = vsub.f32 1.0, %v2808
      %v2907 = vsub.f32 1.0, %v2809
      %v2908 = vsub.f32 1.0, %v2810
      %v2909 = vsub.f32 1.0, %v2811
      %v2910 = vsub.f32 1.0, %v2812
      %v2911 = vsub.f32 1.0, %v2813
      %v2912 = vsub.f32 1.0, %v2814
      %v2913 = vsub.f32 1.0, %v2815
      %v2914 = vsub.f32 1.0, %v2816
      %v2915 = vsub.f32 1.0, %v2817
      %v2916 = vsub.f32 1.0, %v2818
      %v2917 = vsub.f32 1.0, %v2819
      %v2918 = vsub.f32 1.0, %v2820
      %v2919 = vsub.f32 1.0, %v2821
      %v2920 = vsub.f32 1.0, %v2822
      %v2921 = vsub.f32 1.0, %v2823
      %v2922 = vsub.f32 1.0, %v2824
      %v2923 = vsub.f32 1.0, %v2825
      %v2924 = vsub.f32 1.0, %v2826
      %v2925 = vsub.f32 1.0, %v2827
      %v2926 = vsub.f32 1.0, %v2828
      %v2927 = vsub.f32 1.0, %v2829
      %v2928 = vsub.f32 1.0, %v2830
      %v2929 = vsub.f32 1.0, %v2831
      %v2930 = vsub.f32 1.0, %v2832
      %v2931 = vsub.f32 1.0, %v2833
      %v2932 = vsub.f32 1.0, %v2834
      %v2933 = vsub.f32 1.0, %v2835
      %v2934 = vsub.f32 1.0, %v2836
      %v2935 = vsub.f32 1.0, %v2837
      %v2936 = vsub.f32 1.0, %v2838
      %v2937 = vsub.f32 1.0, %v2839
      %v2938 = vsub.f32 1.0, %v2840
      %v2939 = vsub.f32 1.0, %v2841
      %v2940 = vsub.f32 1.0, %v2842
      %v2941 = vsub.f32 1.0, %v2843
      %v2942 = vsub.f32 1.0, %v2844
      %v2943 = vsub.f32 1.0, %v2845
      %v2944 = vsub.f32 1.0, %v2846
      %v2945 = vsub.f32 1.0, %v2847
      %v2946 = vsub.f32 1.0, %v2848
      %v2947 = vsub.f32 1.0, %v2849
      %v2948 = vsub.f32 1.0, %v2850
      %v2949 = vsub.f32 1.0, %v2851
      %v2950 = vsub.f32 1.0, %v2852
      %v2951 = vsub.f32 1.0, %v2853
      %v2952 = vsub.f32 1.0, %v2854
      %v2953 = vsub.f32 1.0, %v2855
      %v2954 = vsub.f32 1.0, %v2856
      %v2955 = vsub.f32 1.0, %v2857
      %v2956 = vsub.f32 1.0, %v2858
      %v2957 = vsub.f32 1.0, %v2859
      %v2958 = vsub.f32 1.0, %v2860
      %v2959 = vsub.f32 1.0, %v2861
      %v2960 = vsub.f32 1.0, %v2862
      %v2961 = vsub.f32 1.0, %v2863
      %v2962 = vsub.f32 1.0, %v2864
      %v2963 = vsub.f32 1.0, %v2865
      %v2964 = vsub.f32 1.0, %v2866
      %v2965 = vsub.f32 1.0, %v2867
      %v2966 = vsub.f32 1.0, %v2868
      %v2967 = vsub.f32 1.0, %v2869
      %v2968 = vsub.f32 1.0, %v2870
      %v2969 = vsub.f32 1.0, %v2871
      %v2970 = vsub.f32 1.0, %v2872
      %v2971 = vsub.f32 1.0, %v2873
      %v2972 = vsub.f32 1.0, %v2874
      %v2973 = vsub.f32 1.0, %v2875
      %v2974 = vsub.f32 1.0, %v2876
      %v2975 = vsub.f32 1.0, %v2877
      %v2976 = vsub.f32 1.0, %v2878
      %v2977 = vsub.f32 1.0, %v2879
      %v2978 = vmax.f32 %v2880, 0.0
      %v2979 = vmax.f32 %v2881, 0.0
      %v2980 = vmax.f32 %v2882, 0.0
      %v2981 = vmax.f32 %v2883, 0.0
      %v2982 = vmax.f32 %v2884, 0.0
      %v2983 = vmax.f32 %v2885, 0.0
      %v2984 = vmax.f32 %v2886, 0.0
      %v2985 = vmax.f32 %v2887, 0.0
      %v2986 = vmax.f32 %v2888, 0.0
      %v2987 = vmax.f32 %v2889, 0.0
      %v2988 = vmax.f32 %v2890, 0.0
      %v2989 = vmax.f32 %v2891, 0.0
      %v2990 = vmax.f32 %v2892, 0.0
      %v2991 = vmax.f32 %v2893, 0.0
      %v2992 = vmax.f32 %v2894, 0.0
      %v2993 = vmax.f32 %v2895, 0.0
      %v2994 = vmax.f32 %v2896, 0.0
      %v2995 = vmax.f32 %v2897, 0.0
      %v2996 = vmax.f32 %v2898, 0.0
      %v2997 = vmax.f32 %v2899, 0.0
      %v2998 = vmax.f32 %v2900, 0.0
      %v2999 = vmax.f32 %v2901, 0.0
      %v3000 = vmax.f32 %v2902, 0.0
      %v3001 = vmax.f32 %v2903, 0.0
      %v3002 = vmax.f32 %v2904, 0.0
      %v3003 = vmax.f32 %v2905, 0.0
      %v3004 = vmax.f32 %v2906, 0.0
      %v3005 = vmax.f32 %v2907, 0.0
      %v3006 = vmax.f32 %v2908, 0.0
      %v3007 = vmax.f32 %v2909, 0.0
      %v3008 = vmax.f32 %v2910, 0.0
      %v3009 = vmax.f32 %v2911, 0.0
      %v3010 = vmax.f32 %v2912, 0.0
      %v3011 = vmax.f32 %v2913, 0.0
      %v3012 = vmax.f32 %v2914, 0.0
      %v3013 = vmax.f32 %v2915, 0.0
      %v3014 = vmax.f32 %v2916, 0.0
      %v3015 = vmax.f32 %v2917, 0.0
      %v3016 = vmax.f32 %v2918, 0.0
      %v3017 = vmax.f32 %v2919, 0.0
      %v3018 = vmax.f32 %v2920, 0.0
      %v3019 = vmax.f32 %v2921, 0.0
      %v3020 = vmax.f32 %v2922, 0.0
      %v3021 = vmax.f32 %v2923, 0.0
      %v3022 = vmax.f32 %v2924, 0.0
      %v3023 = vmax.f32 %v2925, 0.0
      %v3024 = vmax.f32 %v2926, 0.0
      %v3025 = vmax.f32 %v2927, 0.0
      %v3026 = vmax.f32 %v2928, 0.0
      %v3027 = vmax.f32 %v2929, 0.0
      %v3028 = vmax.f32 %v2930, 0.0
      %v3029 = vmax.f32 %v2931, 0.0
      %v3030 = vmax.f32 %v2932, 0.0
      %v3031 = vmax.f32 %v2933, 0.0
      %v3032 = vmax.f32 %v2934, 0.0
      %v3033 = vmax.f32 %v2935, 0.0
      %v3034 = vmax.f32 %v2936, 0.0
      %v3035 = vmax.f32 %v2937, 0.0
      %v3036 = vmax.f32 %v2938, 0.0
      %v3037 = vmax.f32 %v2939, 0.0
      %v3038 = vmax.f32 %v2940, 0.0
      %v3039 = vmax.f32 %v2941, 0.0
      %v3040 = vmax.f32 %v2942, 0.0
      %v3041 = vmax.f32 %v2943, 0.0
      %v3042 = vmax.f32 %v2944, 0.0
      %v3043 = vmax.f32 %v2945, 0.0
      %v3044 = vmax.f32 %v2946, 0.0
      %v3045 = vmax.f32 %v2947, 0.0
      %v3046 = vmax.f32 %v2948, 0.0
      %v3047 = vmax.f32 %v2949, 0.0
      %v3048 = vmax.f32 %v2950, 0.0
      %v3049 = vmax.f32 %v2951, 0.0
      %v3050 = vmax.f32 %v2952, 0.0
      %v3051 = vmax.f32 %v2953, 0.0
      %v3052 = vmax.f32 %v2954, 0.0
      %v3053 = vmax.f32 %v2955, 0.0
      %v3054 = vmax.f32 %v2956, 0.0
      %v3055 = vmax.f32 %v2957, 0.0
      %v3056 = vmax.f32 %v2958, 0.0
      %v3057 = vmax.f32 %v2959, 0.0
      %v3058 = vmax.f32 %v2960, 0.0
      %v3059 = vmax.f32 %v2961, 0.0
      %v3060 = vmax.f32 %v2962, 0.0
      %v3061 = vmax.f32 %v2963, 0.0
      %v3062 = vmax.f32 %v2964, 0.0
      %v3063 = vmax.f32 %v2965, 0.0
      %v3064 = vmax.f32 %v2966, 0.0
      %v3065 = vmax.f32 %v2967, 0.0
      %v3066 = vmax.f32 %v2968, 0.0
      %v3067 = vmax.f32 %v2969, 0.0
      %v3068 = vmax.f32 %v2970, 0.0
      %v3069 = vmax.f32 %v2971, 0.0
      %v3070 = vmax.f32 %v2972, 0.0
      %v3071 = vmax.f32 %v2973, 0.0
      %v3072 = vmax.f32 %v2974, 0.0
      %v3073 = vmax.f32 %v2975, 0.0
      %v3074 = vmax.f32 %v2976, 0.0
      %v3075 = vmax.f32 %v2977, 0.0
      %v3076 = vadd.f32 %v2390, %v2978
      %v3077 = vadd.f32 %v2391, %v2979
      %v3078 = vadd.f32 %v2392, %v2980
      %v3079 = vadd.f32 %v2393, %v2981
      %v3080 = vadd.f32 %v2394, %v2982
      %v3081 = vadd.f32 %v2395, %v2983
      %v3082 = vadd.f32 %v2396, %v2984
      %v3083 = vadd.f32 %v2397, %v2985
      %v3084 = vadd.f32 %v2398, %v2986
      %v3085 = vadd.f32 %v2399, %v2987
      %v3086 = vadd.f32 %v2400, %v2988
      %v3087 = vadd.f32 %v2401, %v2989
      %v3088 = vadd.f32 %v2402, %v2990
      %v3089 = vadd.f32 %v2403, %v2991
      %v3090 = vadd.f32 %v2404, %v2992
      %v3091 = vadd.f32 %v2405, %v2993
      %v3092 = vadd.f32 %v2406, %v2994
      %v3093 = vadd.f32 %v2407, %v2995
      %v3094 = vadd.f32 %v2408, %v2996
      %v3095 = vadd.f32 %v2409, %v2997
      %v3096 = vadd.f32 %v2410, %v2998
      %v3097 = vadd.f32 %v2411, %v2999
      %v3098 = vadd.f32 %v2412, %v3000
      %v3099 = vadd.f32 %v2413, %v3001
      %v3100 = vadd.f32 %v2414, %v3002
      %v3101 = vadd.f32 %v2415, %v3003
      %v3102 = vadd.f32 %v2416, %v3004
      %v3103 = vadd.f32 %v2417, %v3005
      %v3104 = vadd.f32 %v2418, %v3006
      %v3105 = vadd.f32 %v2419, %v3007
      %v3106 = vadd.f32 %v2420, %v3008
      %v3107 = vadd.f32 %v2421, %v3009
      %v3108 = vadd.f32 %v2422, %v3010
      %v3109 = vadd.f32 %v2423, %v3011
      %v3110 = vadd.f32 %v2424, %v3012
      %v3111 = vadd.f32 %v2425, %v3013
      %v3112 = vadd.f32 %v2426, %v3014
      %v3113 = vadd.f32 %v2427, %v3015
      %v3114 = vadd.f32 %v2428, %v3016
      %v3115 = vadd.f32 %v2429, %v3017
      %v3116 = vadd.f32 %v2430, %v3018
      %v3117 = vadd.f32 %v2431, %v3019
      %v3118 = vadd.f32 %v2432, %v3020
      %v3119 = vadd.f32 %v2433, %v3021
      %v3120 = vadd.f32 %v2434, %v3022
      %v3121 = vadd.f32 %v2435, %v3023
      %v3122 = vadd.f32 %v2436, %v3024
      %v3123 = vadd.f32 %v2437, %v3025
      %v3124 = vadd.f32 %v2438, %v3026
      %v3125 = vadd.f32 %v2439, %v3027
      %v3126 = vadd.f32 %v2440, %v3028
      %v3127 = vadd.f32 %v2441, %v3029
      %v3128 = vadd.f32 %v2442, %v3030
      %v3129 = vadd.f32 %v2443, %v3031
      %v3130 = vadd.f32 %v2444, %v3032
      %v3131 = vadd.f32 %v2445, %v3033
      %v3132 = vadd.f32 %v2446, %v3034
      %v3133 = vadd.f32 %v2447, %v3035
      %v3134 = vadd.f32 %v2448, %v3036
      %v3135 = vadd.f32 %v2449, %v3037
      %v3136 = vadd.f32 %v2450, %v3038
      %v3137 = vadd.f32 %v2451, %v3039
      %v3138 = vadd.f32 %v2452, %v3040
      %v3139 = vadd.f32 %v2453, %v3041
      %v3140 = vadd.f32 %v2454, %v3042
      %v3141 = vadd.f32 %v2455, %v3043
      %v3142 = vadd.f32 %v2456, %v3044
      %v3143 = vadd.f32 %v2457, %v3045
      %v3144 = vadd.f32 %v2458, %v3046
      %v3145 = vadd.f32 %v2459, %v3047
      %v3146 = vadd.f32 %v2460, %v3048
      %v3147 = vadd.f32 %v2461, %v3049
      %v3148 = vadd.f32 %v2462, %v3050
      %v3149 = vadd.f32 %v2463, %v3051
      %v3150 = vadd.f32 %v2464, %v3052
      %v3151 = vadd.f32 %v2465, %v3053
      %v3152 = vadd.f32 %v2466, %v3054
      %v3153 = vadd.f32 %v2467, %v3055
      %v3154 = vadd.f32 %v2468, %v3056
      %v3155 = vadd.f32 %v2469, %v3057
      %v3156 = vadd.f32 %v2470, %v3058
      %v3157 = vadd.f32 %v2471, %v3059
      %v3158 = vadd.f32 %v2472, %v3060
      %v3159 = vadd.f32 %v2473, %v3061
      %v3160 = vadd.f32 %v2474, %v3062
      %v3161 = vadd.f32 %v2475, %v3063
      %v3162 = vadd.f32 %v2476, %v3064
      %v3163 = vadd.f32 %v2477, %v3065
      %v3164 = vadd.f32 %v2478, %v3066
      %v3165 = vadd.f32 %v2479, %v3067
      %v3166 = vadd.f32 %v2480, %v3068
      %v3167 = vadd.f32 %v2481, %v3069
      %v3168 = vadd.f32 %v2482, %v3070
      %v3169 = vadd.f32 %v2483, %v3071
      %v3170 = vadd.f32 %v2484, %v3072
      %v3171 = vadd.f32 %v2485, %v3073
      %v3172 = vadd.f32 %v2486, %v3074
      %v3173 = vadd.f32 %v2487, %v3075
      %v3174 = vmul.f32 %v1791, %v3076
      %v3175 = vmul.f32 %v1792, %v3077
      %v3176 = vmul.f32 %v1793, %v3078
      %v3177 = vmul.f32 %v1794, %v3079
      %v3178 = vmul.f32 %v1795, %v3080
      %v3179 = vmul.f32 %v1796, %v3081
      %v3180 = vmul.f32 %v1797, %v3082
      %v3181 = vmul.f32 %v1798, %v3083
      %v3182 = vmul.f32 %v1799, %v3084
      %v3183 = vmul.f32 %v1800, %v3085
      %v3184 = vmul.f32 %v1801, %v3086
      %v3185 = vmul.f32 %v1802, %v3087
      %v3186 = vmul.f32 %v1803, %v3088
      %v3187 = vmul.f32 %v1804, %v3089
      %v3188 = vmul.f32 %v1805, %v3090
      %v3189 = vmul.f32 %v1806, %v3091
      %v3190 = vmul.f32 %v1807, %v3092
      %v3191 = vmul.f32 %v1808, %v3093
      %v3192 = vmul.f32 %v1809, %v3094
      %v3193 = vmul.f32 %v1810, %v3095
      %v3194 = vmul.f32 %v1811, %v3096
      %v3195 = vmul.f32 %v1812, %v3097
      %v3196 = vmul.f32 %v1813, %v3098
      %v3197 = vmul.f32 %v1814, %v3099
      %v3198 = vmul.f32 %v1815, %v3100
      %v3199 = vmul.f32 %v1816, %v3101
      %v3200 = vmul.f32 %v1817, %v3102
      %v3201 = vmul.f32 %v1818, %v3103
      %v3202 = vmul.f32 %v1819, %v3104
      %v3203 = vmul.f32 %v1820, %v3105
      %v3204 = vmul.f32 %v1821, %v3106
      %v3205 = vmul.f32 %v1822, %v3107
      %v3206 = vmul.f32 %v1823, %v3108
      %v3207 = vmul.f32 %v1824, %v3109
      %v3208 = vmul.f32 %v1825, %v3110
      %v3209 = vmul.f32 %v1826, %v3111
      %v3210 = vmul.f32 %v1827, %v3112
      %v3211 = vmul.f32 %v1828, %v3113
      %v3212 = vmul.f32 %v1829, %v3114
      %v3213 = vmul.f32 %v1830, %v3115
      %v3214 = vmul.f32 %v1831, %v3116
      %v3215 = vmul.f32 %v1832, %v3117
      %v3216 = vmul.f32 %v1833, %v3118
      %v3217 = vmul.f32 %v1834, %v3119
      %v3218 = vmul.f32 %v1835, %v3120
      %v3219 = vmul.f32 %v1836, %v3121
      %v3220 = vmul.f32 %v1837, %v3122
      %v3221 = vmul.f32 %v1838, %v3123
      %v3222 = vmul.f32 %v1839, %v3124
      %v3223 = vmul.f32 %v1840, %v3125
      %v3224 = vmul.f32 %v1841, %v3126
      %v3225 = vmul.f32 %v1842, %v3127
      %v3226 = vmul.f32 %v1843, %v3128
      %v3227 = vmul.f32 %v1844, %v3129
      %v3228 = vmul.f32 %v1845, %v3130
      %v3229 = vmul.f32 %v1846, %v3131
      %v3230 = vmul.f32 %v1847, %v3132
      %v3231 = vmul.f32 %v1848, %v3133
      %v3232 = vmul.f32 %v1849, %v3134
      %v3233 = vmul.f32 %v1850, %v3135
      %v3234 = vmul.f32 %v1851, %v3136
      %v3235 = vmul.f32 %v1852, %v3137
      %v3236 = vmul.f32 %v1853, %v3138
      %v3237 = vmul.f32 %v1854, %v3139
      %v3238 = vmul.f32 %v1855, %v3140
      %v3239 = vmul.f32 %v1856, %v3141
      %v3240 = vmul.f32 %v1857, %v3142
      %v3241 = vmul.f32 %v1858, %v3143
      %v3242 = vmul.f32 %v1859, %v3144
      %v3243 = vmul.f32 %v1860, %v3145
      %v3244 = vmul.f32 %v1861, %v3146
      %v3245 = vmul.f32 %v1862, %v3147
      %v3246 = vmul.f32 %v1863, %v3148
      %v3247 = vmul.f32 %v1864, %v3149
      %v3248 = vmul.f32 %v1865, %v3150
      %v3249 = vmul.f32 %v1866, %v3151
      %v3250 = vmul.f32 %v1867, %v3152
      %v3251 = vmul.f32 %v1868, %v3153
      %v3252 = vmul.f32 %v1869, %v3154
      %v3253 = vmul.f32 %v1870, %v3155
      %v3254 = vmul.f32 %v1871, %v3156
      %v3255 = vmul.f32 %v1872, %v3157
      %v3256 = vmul.f32 %v1873, %v3158
      %v3257 = vmul.f32 %v1874, %v3159
      %v3258 = vmul.f32 %v1875, %v3160
      %v3259 = vmul.f32 %v1876, %v3161
      %v3260 = vmul.f32 %v1877, %v3162
      %v3261 = vmul.f32 %v1878, %v3163
      %v3262 = vmul.f32 %v1879, %v3164
      %v3263 = vmul.f32 %v1880, %v3165
      %v3264 = vmul.f32 %v1881, %v3166
      %v3265 = vmul.f32 %v1882, %v3167
      %v3266 = vmul.f32 %v1883, %v3168
      %v3267 = vmul.f32 %v1884, %v3169
      %v3268 = vmul.f32 %v1885, %v3170
      %v3269 = vmul.f32 %v1886, %v3171
      %v3270 = vmul.f32 %v1887, %v3172
      %v3271 = vmul.f32 %v1888, %v3173
      %v3272 = vmul.f32 %v3174, 0.25
      %v3273 = vmul.f32 %v3175, 0.25
      %v3274 = vmul.f32 %v3176, 0.25
      %v3275 = vmul.f32 %v3177, 0.25
      %v3276 = vmul.f32 %v3178, 0.25
      %v3277 = vmul.f32 %v3179, 0.25
      %v3278 = vmul.f32 %v3180, 0.25
      %v3279 = vmul.f32 %v3181, 0.25
      %v3280 = vmul.f32 %v3182, 0.25
      %v3281 = vmul.f32 %v3183, 0.25
      %v3282 = vmul.f32 %v3184, 0.25
      %v3283 = vmul.f32 %v3185, 0.25
      %v3284 = vmul.f32 %v3186, 0.25
      %v3285 = vmul.f32 %v3187, 0.25
      %v3286 = vmul.f32 %v3188, 0.25
      %v3287 = vmul.f32 %v3189, 0.25
      %v3288 = vmul.f32 %v3190, 0.25
      %v3289 = vmul.f32 %v3191, 0.25
      %v3290 = vmul.f32 %v3192, 0.25
      %v3291 = vmul.f32 %v3193, 0.25
      %v3292 = vmul.f32 %v3194, 0.25
      %v3293 = vmul.f32 %v3195, 0.25
      %v3294 = vmul.f32 %v3196, 0.25
      %v3295 = vmul.f32 %v3197, 0.25
      %v3296 = vmul.f32 %v3198, 0.25
      %v3297 = vmul.f32 %v3199, 0.25
      %v3298 = vmul.f32 %v3200, 0.25
      %v3299 = vmul.f32 %v3201, 0.25
      %v3300 = vmul.f32 %v3202, 0.25
      %v3301 = vmul.f32 %v3203, 0.25
      %v3302 = vmul.f32 %v3204, 0.25
      %v3303 = vmul.f32 %v3205, 0.25
      %v3304 = vmul.f32 %v3206, 0.25
      %v3305 = vmul.f32 %v3207, 0.25
      %v3306 = vmul.f32 %v3208, 0.25
      %v3307 = vmul.f32 %v3209, 0.25
      %v3308 = vmul.f32 %v3210, 0.25
      %v3309 = vmul.f32 %v3211, 0.25
      %v3310 = vmul.f32 %v3212, 0.25
      %v3311 = vmul.f32 %v3213, 0.25
      %v3312 = vmul.f32 %v3214, 0.25
      %v3313 = vmul.f32 %v3215, 0.25
      %v3314 = vmul.f32 %v3216, 0.25
      %v3315 = vmul.f32 %v3217, 0.25
      %v3316 = vmul.f32 %v3218, 0.25
      %v3317 = vmul.f32 %v3219, 0.25
      %v3318 = vmul.f32 %v3220, 0.25
      %v3319 = vmul.f32 %v3221, 0.25
      %v3320 = vmul.f32 %v3222, 0.25
      %v3321 = vmul.f32 %v3223, 0.25
      %v3322 = vmul.f32 %v3224, 0.25
      %v3323 = vmul.f32 %v3225, 0.25
      %v3324 = vmul.f32 %v3226, 0.25
      %v3325 = vmul.f32 %v3227, 0.25
      %v3326 = vmul.f32 %v3228, 0.25
      %v3327 = vmul.f32 %v3229, 0.25
      %v3328 = vmul.f32 %v3230, 0.25
      %v3329 = vmul.f32 %v3231, 0.25
      %v3330 = vmul.f32 %v3232, 0.25
      %v3331 = vmul.f32 %v3233, 0.25
      %v3332 = vmul.f32 %v3234, 0.25
      %v3333 = vmul.f32 %v3235, 0.25
      %v3334 = vmul.f32 %v3236, 0.25
      %v3335 = vmul.f32 %v3237, 0.25
      %v3336 = vmul.f32 %v3238, 0.25
      %v3337 = vmul.f32 %v3239, 0.25
      %v3338 = vmul.f32 %v3240, 0.25
      %v3339 = vmul.f32 %v3241, 0.25
      %v3340 = vmul.f32 %v3242, 0.25
      %v3341 = vmul.f32 %v3243, 0.25
      %v3342 = vmul.f32 %v3244, 0.25
      %v3343 = vmul.f32 %v3245, 0.25
      %v3344 = vmul.f32 %v3246, 0.25
      %v3345 = vmul.f32 %v3247, 0.25
      %v3346 = vmul.f32 %v3248, 0.25
      %v3347 = vmul.f32 %v3249, 0.25
      %v3348 = vmul.f32 %v3250, 0.25
      %v3349 = vmul.f32 %v3251, 0.25
      %v3350 = vmul.f32 %v3252, 0.25
      %v3351 = vmul.f32 %v3253, 0.25
      %v3352 = vmul.f32 %v3254, 0.25
      %v3353 = vmul.f32 %v3255, 0.25
      %v3354 = vmul.f32 %v3256, 0.25
      %v3355 = vmul.f32 %v3257, 0.25
      %v3356 = vmul.f32 %v3258, 0.25
      %v3357 = vmul.f32 %v3259, 0.25
      %v3358 = vmul.f32 %v3260, 0.25
      %v3359 = vmul.f32 %v3261, 0.25
      %v3360 = vmul.f32 %v3262, 0.25
      %v3361 = vmul.f32 %v3263, 0.25
      %v3362 = vmul.f32 %v3264, 0.25
      %v3363 = vmul.f32 %v3265, 0.25
      %v3364 = vmul.f32 %v3266, 0.25
      %v3365 = vmul.f32 %v3267, 0.25
      %v3366 = vmul.f32 %v3268, 0.25
      %v3367 = vmul.f32 %v3269, 0.25
      %v3368 = vmul.f32 %v3270, 0.25
      %v3369 = vmul.f32 %v3271, 0.25
      %v3370 = vpack.c.bf16 %v3274, %v3272
      %v3371 = vpack.c.bf16 %v3275, %v3273
      %v3372 = vpack.c.bf16 %v3278, %v3276
      %v3373 = vpack.c.bf16 %v3279, %v3277
      %v3374 = vpack.c.bf16 %v3282, %v3280
      %v3375 = vpack.c.bf16 %v3283, %v3281
      %v3376 = vpack.c.bf16 %v3286, %v3284
      %v3377 = vpack.c.bf16 %v3287, %v3285
      %v3378 = vpack.c.bf16 %v3290, %v3288
      %v3379 = vpack.c.bf16 %v3291, %v3289
      %v3380 = vpack.c.bf16 %v3294, %v3292
      %v3381 = vpack.c.bf16 %v3295, %v3293
      %v3382 = vpack.c.bf16 %v3298, %v3296
      %v3383 = vpack.c.bf16 %v3299, %v3297
      %v3384 = vpack.c.bf16 %v3302, %v3300
      %v3385 = vpack.c.bf16 %v3303, %v3301
      %v3386 = vpack.c.bf16 %v3306, %v3304
      %v3387 = vpack.c.bf16 %v3307, %v3305
      %v3388 = vpack.c.bf16 %v3310, %v3308
      %v3389 = vpack.c.bf16 %v3311, %v3309
      %v3390 = vpack.c.bf16 %v3314, %v3312
      %v3391 = vpack.c.bf16 %v3315, %v3313
      %v3392 = vpack.c.bf16 %v3318, %v3316
      %v3393 = vpack.c.bf16 %v3319, %v3317
      %v3394 = vpack.c.bf16 %v3322, %v3320
      %v3395 = vpack.c.bf16 %v3323, %v3321
      %v3396 = vpack.c.bf16 %v3326, %v3324
      %v3397 = vpack.c.bf16 %v3327, %v3325
      %v3398 = vpack.c.bf16 %v3330, %v3328
      %v3399 = vpack.c.bf16 %v3331, %v3329
      %v3400 = vpack.c.bf16 %v3334, %v3332
      %v3401 = vpack.c.bf16 %v3335, %v3333
      %v3402 = vpack.c.bf16 %v3338, %v3336
      %v3403 = vpack.c.bf16 %v3339, %v3337
      %v3404 = vpack.c.bf16 %v3342, %v3340
      %v3405 = vpack.c.bf16 %v3343, %v3341
      %v3406 = vpack.c.bf16 %v3346, %v3344
      %v3407 = vpack.c.bf16 %v3347, %v3345
      %v3408 = vpack.c.bf16 %v3350, %v3348
      %v3409 = vpack.c.bf16 %v3351, %v3349
      %v3410 = vpack.c.bf16 %v3354, %v3352
      %v3411 = vpack.c.bf16 %v3355, %v3353
      %v3412 = vpack.c.bf16 %v3358, %v3356
      %v3413 = vpack.c.bf16 %v3359, %v3357
      %v3414 = vpack.c.bf16 %v3362, %v3360
      %v3415 = vpack.c.bf16 %v3363, %v3361
      %v3416 = vpack.c.bf16 %v3366, %v3364
      %v3417 = vpack.c.bf16 %v3367, %v3365
      %v3418 = vpack.c.bf16 %v3368, %v3368
      %v3419 = vpack.c.bf16 %v3369, %v3369
      %v3420 = vld [vmem:[%s200] sm:$0xf]
      %v3421 = vld [vmem:[%s200 + $0x4] sm:$0xf]
      %v3422 = vld [vmem:[%s200 + $0x8] sm:$0xf]
      %v3423 = vld [vmem:[%s200 + $0xc] sm:$0xf]
      %v3424 = vld [vmem:[%s200 + $0x10] sm:$0xf]
      %v3425 = vld [vmem:[%s200 + $0x14] sm:$0xf]
      %v3426 = vld [vmem:[%s200 + $0x18] sm:$0xf]
      %v3427 = vld [vmem:[%s200 + $0x1c] sm:$0xf]
      %v3428 = vld [vmem:[%s200 + $0x20] sm:$0xf]
      %v3429 = vld [vmem:[%s200 + $0x24] sm:$0xf]
      %v3430 = vld [vmem:[%s200 + $0x28] sm:$0xf]
      %v3431 = vld [vmem:[%s200 + $0x2c] sm:$0xf]
      %v3432 = vld [vmem:[%s200 + $0x30] sm:$0xf]
      %v3433 = vld [vmem:[%s200 + $0x34] sm:$0xf]
      %v3434 = vld [vmem:[%s200 + $0x38] sm:$0xf]
      %v3435 = vld [vmem:[%s200 + $0x3c] sm:$0xf]
      %v3436 = vld [vmem:[%s200 + $0x40] sm:$0xf]
      %v3437 = vld [vmem:[%s200 + $0x44] sm:$0xf]
      %v3438 = vld [vmem:[%s200 + $0x48] sm:$0xf]
      %v3439 = vld [vmem:[%s200 + $0x4c] sm:$0xf]
      %v3440 = vld [vmem:[%s200 + $0x50] sm:$0xf]
      %v3441 = vld [vmem:[%s200 + $0x54] sm:$0xf]
      %v3442 = vld [vmem:[%s200 + $0x58] sm:$0xf]
      %v3443 = vld [vmem:[%s200 + $0x5c] sm:$0xf]
      %v3444 = vld [vmem:[%s200 + $0x60] sm:$0xf]
      %v3445 = vld [vmem:[%s200 + $0x64] sm:$0xf]
      %v3446 = vld [vmem:[%s200 + $0x68] sm:$0xf]
      %v3447 = vld [vmem:[%s200 + $0x6c] sm:$0xf]
      %v3448 = vld [vmem:[%s200 + $0x70] sm:$0xf]
      %v3449 = vld [vmem:[%s200 + $0x74] sm:$0xf]
      %v3450 = vld [vmem:[%s200 + $0x78] sm:$0xf]
      %v3451 = vld [vmem:[%s200 + $0x7c] sm:$0xf]
      %v3484 = vunpack.c.l.b16 %v3420
      %v3485 = vunpack.c.l.b16 %v3421
      %v3486 = vunpack.c.l.b16 %v3422
      %v3487 = vunpack.c.l.b16 %v3423
      %v3488 = vunpack.c.l.b16 %v3424
      %v3489 = vunpack.c.l.b16 %v3425
      %v3490 = vunpack.c.l.b16 %v3426
      %v3491 = vunpack.c.l.b16 %v3427
      %v3492 = vunpack.c.l.b16 %v3428
      %v3493 = vunpack.c.l.b16 %v3429
      %v3494 = vunpack.c.l.b16 %v3430
      %v3495 = vunpack.c.l.b16 %v3431
      %v3496 = vunpack.c.l.b16 %v3432
      %v3497 = vunpack.c.l.b16 %v3433
      %v3498 = vunpack.c.l.b16 %v3434
      %v3499 = vunpack.c.l.b16 %v3435
      %v3500 = vunpack.c.l.b16 %v3436
      %v3501 = vunpack.c.l.b16 %v3437
      %v3502 = vunpack.c.l.b16 %v3438
      %v3503 = vunpack.c.l.b16 %v3439
      %v3504 = vunpack.c.l.b16 %v3440
      %v3505 = vunpack.c.l.b16 %v3441
      %v3506 = vunpack.c.l.b16 %v3442
      %v3507 = vunpack.c.l.b16 %v3443
      %v3508 = vunpack.c.l.b16 %v3444
      %v3509 = vunpack.c.l.b16 %v3445
      %v3510 = vunpack.c.l.b16 %v3446
      %v3511 = vunpack.c.l.b16 %v3447
      %v3512 = vunpack.c.l.b16 %v3448
      %v3513 = vunpack.c.l.b16 %v3449
      %v3514 = vunpack.c.l.b16 %v3450
      %v3515 = vunpack.c.l.b16 %v3451
      %v3516 = vpack.c.b16 %v3485, %v3484
      %v3517 = vpack.c.b16 %v3487, %v3486
      %v3518 = vpack.c.b16 %v3489, %v3488
      %v3519 = vpack.c.b16 %v3491, %v3490
      %v3520 = vpack.c.b16 %v3493, %v3492
      %v3521 = vpack.c.b16 %v3495, %v3494
      %v3522 = vpack.c.b16 %v3497, %v3496
      %v3523 = vpack.c.b16 %v3499, %v3498
      %v3524 = vpack.c.b16 %v3501, %v3500
      %v3525 = vpack.c.b16 %v3503, %v3502
      %v3526 = vpack.c.b16 %v3505, %v3504
      %v3527 = vpack.c.b16 %v3507, %v3506
      %v3528 = vpack.c.b16 %v3509, %v3508
      %v3529 = vpack.c.b16 %v3511, %v3510
      %v3530 = vpack.c.b16 %v3513, %v3512
      %v3531 = vpack.c.b16 %v3515, %v3514
      %3548 = vmatprep.subr.bf16.mxu0 0
      %3549 = vmatpush1.bf16.msra.mxu0 %v3516
      %3550 = vmatprep.subr.bf16.mxu0 0
      %3551 = vmatpush1.bf16.msra.mxu0 %v3517
      %3552 = vmatprep.subr.bf16.mxu0 0
      %3553 = vmatpush1.bf16.msra.mxu0 %v3518
      %3554 = vmatprep.subr.bf16.mxu0 0
      %3555 = vmatpush1.bf16.msra.mxu0 %v3519
      %3556 = vmatprep.subr.bf16.mxu0 0
      %3557 = vmatpush1.bf16.msra.mxu0 %v3520
      %3558 = vmatprep.subr.bf16.mxu0 0
      %3559 = vmatpush1.bf16.msra.mxu0 %v3521
      %3560 = vmatprep.subr.bf16.mxu0 0
      %3561 = vmatpush1.bf16.msra.mxu0 %v3522
      %3562 = vmatprep.subr.bf16.mxu0 0
      %3563 = vmatpush1.bf16.msra.mxu0 %v3523
      %3564 = vmatprep.subr.bf16.mxu0 0
      %3565 = vmatpush1.bf16.msra.mxu0 %v3524
      %3566 = vmatprep.subr.bf16.mxu0 0
      %3567 = vmatpush1.bf16.msra.mxu0 %v3525
      %3568 = vmatprep.subr.bf16.mxu0 0
      %3569 = vmatpush1.bf16.msra.mxu0 %v3526
      %3570 = vmatprep.subr.bf16.mxu0 0
      %3571 = vmatpush1.bf16.msra.mxu0 %v3527
      %3572 = vmatprep.subr.bf16.mxu0 0
      %3573 = vmatpush1.bf16.msra.mxu0 %v3528
      %3574 = vmatprep.subr.bf16.mxu0 0
      %3575 = vmatpush1.bf16.msra.mxu0 %v3529
      %3576 = vmatprep.subr.bf16.mxu0 0
      %3577 = vmatpush1.bf16.msra.mxu0 %v3530
      %3578 = vmatprep.subr.bf16.mxu0 0
      %3579 = vmatpush1.bf16.msra.mxu0 %v3531
      %3580 = vmatprep.mubr.bf16.mxu0 %v3371
      %3581 = vmatmul.mubr.bf16.gmra.mrb[0].mxu0 %v3370
      %v3582 = vpop.f32.mrb[0].mxu0
      %v3583 = vadd.f32 0.0, %v3582
      %v3584 = vpop.f32.mrb[0].mxu0
      %v3585 = vpop.f32.mrb[0].mxu0
      %v3586 = vadd.f32 0.0, %v3585
      %v3587 = vpop.f32.mrb[0].mxu0
      %3588 = vmatprep.mubr.bf16.mxu0 %v3373
      %3589 = vmatmul.mubr.bf16.gmra.mrb[0].mxu0 %v3372
      %v3590 = vpop.f32.mrb[0].mxu0
      %v3591 = vadd.f32 0.0, %v3590
      %v3592 = vpop.f32.mrb[0].mxu0
      %v3593 = vpop.f32.mrb[0].mxu0
      %v3594 = vadd.f32 0.0, %v3593
      %v3595 = vpop.f32.mrb[0].mxu0
      %3596 = vmatprep.mubr.bf16.mxu0 %v3375
      %3597 = vmatmul.mubr.bf16.gmra.mrb[0].mxu0 %v3374
      %v3598 = vpop.f32.mrb[0].mxu0
      %v3599 = vadd.f32 0.0, %v3598
      %v3600 = vpop.f32.mrb[0].mxu0
      %v3601 = vpop.f32.mrb[0].mxu0
      %v3602 = vadd.f32 0.0, %v3601
      %v3603 = vpop.f32.mrb[0].mxu0
      %3604 = vmatprep.mubr.bf16.mxu0 %v3377
      %3605 = vmatmul.mubr.bf16.gmra.mrb[0].mxu0 %v3376
      %v3606 = vpop.f32.mrb[0].mxu0
      %v3607 = vadd.f32 0.0, %v3606
      %v3608 = vpop.f32.mrb[0].mxu0
      %v3609 = vpop.f32.mrb[0].mxu0
      %v3610 = vadd.f32 0.0, %v3609
      %v3611 = vpop.f32.mrb[0].mxu0
      %3612 = vmatprep.mubr.bf16.mxu0 %v3379
      %3613 = vmatmul.mubr.bf16.gmra.mrb[0].mxu0 %v3378
      %v3614 = vpop.f32.mrb[0].mxu0
      %v3615 = vadd.f32 0.0, %v3614
      %v3616 = vpop.f32.mrb[0].mxu0
      %v3617 = vpop.f32.mrb[0].mxu0
      %v3618 = vadd.f32 0.0, %v3617
      %v3619 = vpop.f32.mrb[0].mxu0
      %3620 = vmatprep.mubr.bf16.mxu0 %v3381
      %3621 = vmatmul.mubr.bf16.gmra.mrb[0].mxu0 %v3380
      %v3622 = vpop.f32.mrb[0].mxu0
      %v3623 = vadd.f32 0.0, %v3622
      %v3624 = vpop.f32.mrb[0].mxu0
      %v3625 = vpop.f32.mrb[0].mxu0
      %v3626 = vadd.f32 0.0, %v3625
      %v3627 = vpop.f32.mrb[0].mxu0
      %3628 = vmatprep.mubr.bf16.mxu0 %v3383
      %3629 = vmatmul.mubr.bf16.gmra.mrb[0].mxu0 %v3382
      %v3630 = vpop.f32.mrb[0].mxu0
      %v3631 = vadd.f32 0.0, %v3630
      %v3632 = vpop.f32.mrb[0].mxu0
      %v3633 = vpop.f32.mrb[0].mxu0
      %v3634 = vadd.f32 0.0, %v3633
      %v3635 = vpop.f32.mrb[0].mxu0
      %3636 = vmatprep.mubr.bf16.mxu0 %v3385
      %3637 = vmatmul.mubr.bf16.gmra.mrb[0].mxu0 %v3384
      %v3638 = vpop.f32.mrb[0].mxu0
      %v3639 = vadd.f32 0.0, %v3638
      %v3640 = vpop.f32.mrb[0].mxu0
      %v3641 = vpop.f32.mrb[0].mxu0
      %v3642 = vadd.f32 0.0, %v3641
      %v3643 = vpop.f32.mrb[0].mxu0
      %3644 = vmatprep.mubr.bf16.mxu0 %v3387
      %3645 = vmatmul.mubr.bf16.gmra.mrb[0].mxu0 %v3386
      %v3646 = vpop.f32.mrb[0].mxu0
      %v3647 = vadd.f32 0.0, %v3646
      %v3648 = vpop.f32.mrb[0].mxu0
      %v3649 = vpop.f32.mrb[0].mxu0
      %v3650 = vadd.f32 0.0, %v3649
      %v3651 = vpop.f32.mrb[0].mxu0
      %3652 = vmatprep.mubr.bf16.mxu0 %v3389
      %3653 = vmatmul.mubr.bf16.gmra.mrb[0].mxu0 %v3388
      %v3654 = vpop.f32.mrb[0].mxu0
      %v3655 = vadd.f32 0.0, %v3654
      %v3656 = vpop.f32.mrb[0].mxu0
      %v3657 = vpop.f32.mrb[0].mxu0
      %v3658 = vadd.f32 0.0, %v3657
      %v3659 = vpop.f32.mrb[0].mxu0
      %3660 = vmatprep.mubr.bf16.mxu0 %v3391
      %3661 = vmatmul.mubr.bf16.gmra.mrb[0].mxu0 %v3390
      %v3662 = vpop.f32.mrb[0].mxu0
      %v3663 = vadd.f32 0.0, %v3662
      %v3664 = vpop.f32.mrb[0].mxu0
      %v3665 = vpop.f32.mrb[0].mxu0
      %v3666 = vadd.f32 0.0, %v3665
      %v3667 = vpop.f32.mrb[0].mxu0
      %3668 = vmatprep.mubr.bf16.mxu0 %v3393
      %3669 = vmatmul.mubr.bf16.gmra.mrb[0].mxu0 %v3392
      %v3670 = vpop.f32.mrb[0].mxu0
      %v3671 = vadd.f32 0.0, %v3670
      %v3672 = vpop.f32.mrb[0].mxu0
      %v3673 = vpop.f32.mrb[0].mxu0
      %v3674 = vadd.f32 0.0, %v3673
      %v3675 = vpop.f32.mrb[0].mxu0
      %3676 = vmatprep.mubr.bf16.mxu0 %v3395
      %3677 = vmatmul.mubr.bf16.gmra.mrb[0].mxu0 %v3394
      %v3678 = vpop.f32.mrb[0].mxu0
      %v3679 = vadd.f32 0.0, %v3678
      %v3680 = vpop.f32.mrb[0].mxu0
      %v3681 = vpop.f32.mrb[0].mxu0
      %v3682 = vadd.f32 0.0, %v3681
      %v3683 = vpop.f32.mrb[0].mxu0
      %3684 = vmatprep.mubr.bf16.mxu0 %v3397
      %3685 = vmatmul.mubr.bf16.gmra.mrb[0].mxu0 %v3396
      %v3686 = vpop.f32.mrb[0].mxu0
      %v3687 = vadd.f32 0.0, %v3686
      %v3688 = vpop.f32.mrb[0].mxu0
      %v3689 = vpop.f32.mrb[0].mxu0
      %v3690 = vadd.f32 0.0, %v3689
      %v3691 = vpop.f32.mrb[0].mxu0
      %3692 = vmatprep.mubr.bf16.mxu0 %v3399
      %3693 = vmatmul.mubr.bf16.gmra.mrb[0].mxu0 %v3398
      %v3694 = vpop.f32.mrb[0].mxu0
      %v3695 = vadd.f32 0.0, %v3694
      %v3696 = vpop.f32.mrb[0].mxu0
      %v3697 = vpop.f32.mrb[0].mxu0
      %v3698 = vadd.f32 0.0, %v3697
      %v3699 = vpop.f32.mrb[0].mxu0
      %3700 = vmatprep.mubr.bf16.mxu0 %v3401
      %3701 = vmatmul.mubr.bf16.gmra.mrb[0].mxu0 %v3400
      %v3702 = vpop.f32.mrb[0].mxu0
      %v3703 = vadd.f32 0.0, %v3702
      %v3704 = vpop.f32.mrb[0].mxu0
      %v3705 = vpop.f32.mrb[0].mxu0
      %v3706 = vadd.f32 0.0, %v3705
      %v3707 = vpop.f32.mrb[0].mxu0
      %3708 = vmatprep.mubr.bf16.mxu0 %v3403
      %3709 = vmatmul.mubr.bf16.gmra.mrb[0].mxu0 %v3402
      %v3710 = vpop.f32.mrb[0].mxu0
      %v3711 = vadd.f32 0.0, %v3710
      %v3712 = vpop.f32.mrb[0].mxu0
      %v3713 = vpop.f32.mrb[0].mxu0
      %v3714 = vadd.f32 0.0, %v3713
      %v3715 = vpop.f32.mrb[0].mxu0
      %3716 = vmatprep.mubr.bf16.mxu0 %v3405
      %3717 = vmatmul.mubr.bf16.gmra.mrb[0].mxu0 %v3404
      %v3718 = vpop.f32.mrb[0].mxu0
      %v3719 = vadd.f32 0.0, %v3718
      %v3720 = vpop.f32.mrb[0].mxu0
      %v3721 = vpop.f32.mrb[0].mxu0
      %v3722 = vadd.f32 0.0, %v3721
      %v3723 = vpop.f32.mrb[0].mxu0
      %3724 = vmatprep.mubr.bf16.mxu0 %v3407
      %3725 = vmatmul.mubr.bf16.gmra.mrb[0].mxu0 %v3406
      %v3726 = vpop.f32.mrb[0].mxu0
      %v3727 = vadd.f32 0.0, %v3726
      %v3728 = vpop.f32.mrb[0].mxu0
      %v3729 = vpop.f32.mrb[0].mxu0
      %v3730 = vadd.f32 0.0, %v3729
      %v3731 = vpop.f32.mrb[0].mxu0
      %3732 = vmatprep.mubr.bf16.mxu0 %v3409
      %3733 = vmatmul.mubr.bf16.gmra.mrb[0].mxu0 %v3408
      %v3734 = vpop.f32.mrb[0].mxu0
      %v3735 = vadd.f32 0.0, %v3734
      %v3736 = vpop.f32.mrb[0].mxu0
      %v3737 = vpop.f32.mrb[0].mxu0
      %v3738 = vadd.f32 0.0, %v3737
      %v3739 = vpop.f32.mrb[0].mxu0
      %3740 = vmatprep.mubr.bf16.mxu0 %v3411
      %3741 = vmatmul.mubr.bf16.gmra.mrb[0].mxu0 %v3410
      %v3742 = vpop.f32.mrb[0].mxu0
      %v3743 = vadd.f32 0.0, %v3742
      %v3744 = vpop.f32.mrb[0].mxu0
      %v3745 = vpop.f32.mrb[0].mxu0
      %v3746 = vadd.f32 0.0, %v3745
      %v3747 = vpop.f32.mrb[0].mxu0
      %3748 = vmatprep.mubr.bf16.mxu0 %v3413
      %3749 = vmatmul.mubr.bf16.gmra.mrb[0].mxu0 %v3412
      %v3750 = vpop.f32.mrb[0].mxu0
      %v3751 = vadd.f32 0.0, %v3750
      %v3752 = vpop.f32.mrb[0].mxu0
      %v3753 = vpop.f32.mrb[0].mxu0
      %v3754 = vadd.f32 0.0, %v3753
      %v3755 = vpop.f32.mrb[0].mxu0
      %3756 = vmatprep.mubr.bf16.mxu0 %v3415
      %3757 = vmatmul.mubr.bf16.gmra.mrb[0].mxu0 %v3414
      %v3758 = vpop.f32.mrb[0].mxu0
      %v3759 = vadd.f32 0.0, %v3758
      %v3760 = vpop.f32.mrb[0].mxu0
      %v3761 = vpop.f32.mrb[0].mxu0
      %v3762 = vadd.f32 0.0, %v3761
      %v3763 = vpop.f32.mrb[0].mxu0
      %3764 = vmatprep.mubr.bf16.mxu0 %v3417
      %3765 = vmatmul.mubr.bf16.gmra.mrb[0].mxu0 %v3416
      %v3766 = vpop.f32.mrb[0].mxu0
      %v3767 = vadd.f32 0.0, %v3766
      %v3768 = vpop.f32.mrb[0].mxu0
      %v3769 = vpop.f32.mrb[0].mxu0
      %v3770 = vadd.f32 0.0, %v3769
      %v3771 = vpop.f32.mrb[0].mxu0
      %3772 = vmatprep.mubr.bf16.mxu0 %v3419
      %3773 = vmatmul.mubr.bf16.gmra.mrb[0].mxu0 %v3418
      %v3774 = vpop.f32.mrb[0].mxu0
      %v3775 = vadd.f32 0.0, %v3774
      %v3776 = vpop.f32.mrb[0].mxu0
      %v3777 = vpop.f32.mrb[0].mxu0
      %v3778 = vpop.f32.mrb[0].mxu0
      %3779 = vdwg.mxu0
      %vm3780 = vcmask 64512
      %3781 = vst.msk [vmem:[%s206] sm:$0xff] %vm3780, %v3583
      %3782 = vst.msk [vmem:[%s206 + $0x8] sm:$0xff] %vm3780, %v3586
      %3783 = vst.msk [vmem:[%s206 + $0x10] sm:$0xff] %vm3780, %v3591
      %3784 = vst.msk [vmem:[%s206 + $0x18] sm:$0xff] %vm3780, %v3594
      %3785 = vst.msk [vmem:[%s206 + $0x20] sm:$0xff] %vm3780, %v3599
      %3786 = vst.msk [vmem:[%s206 + $0x28] sm:$0xff] %vm3780, %v3602
      %3787 = vst.msk [vmem:[%s206 + $0x30] sm:$0xff] %vm3780, %v3607
      %3788 = vst.msk [vmem:[%s206 + $0x38] sm:$0xff] %vm3780, %v3610
      %3789 = vst.msk [vmem:[%s206 + $0x40] sm:$0xff] %vm3780, %v3615
      %3790 = vst.msk [vmem:[%s206 + $0x48] sm:$0xff] %vm3780, %v3618
      %3791 = vst.msk [vmem:[%s206 + $0x50] sm:$0xff] %vm3780, %v3623
      %3792 = vst.msk [vmem:[%s206 + $0x58] sm:$0xff] %vm3780, %v3626
      %3793 = vst.msk [vmem:[%s206 + $0x60] sm:$0xff] %vm3780, %v3631
      %3794 = vst.msk [vmem:[%s206 + $0x68] sm:$0xff] %vm3780, %v3634
      %3795 = vst.msk [vmem:[%s206 + $0x70] sm:$0xff] %vm3780, %v3639
      %3796 = vst.msk [vmem:[%s206 + $0x78] sm:$0xff] %vm3780, %v3642
      %3797 = vst.msk [vmem:[%s206 + $0x80] sm:$0xff] %vm3780, %v3647
      %3798 = vst.msk [vmem:[%s206 + $0x88] sm:$0xff] %vm3780, %v3650
      %3799 = vst.msk [vmem:[%s206 + $0x90] sm:$0xff] %vm3780, %v3655
      %3800 = vst.msk [vmem:[%s206 + $0x98] sm:$0xff] %vm3780, %v3658
      %3801 = vst.msk [vmem:[%s206 + $0xa0] sm:$0xff] %vm3780, %v3663
      %3802 = vst.msk [vmem:[%s206 + $0xa8] sm:$0xff] %vm3780, %v3666
      %3803 = vst.msk [vmem:[%s206 + $0xb0] sm:$0xff] %vm3780, %v3671
      %3804 = vst.msk [vmem:[%s206 + $0xb8] sm:$0xff] %vm3780, %v3674
      %3805 = vst.msk [vmem:[%s206 + $0xc0] sm:$0xff] %vm3780, %v3679
      %3806 = vst.msk [vmem:[%s206 + $0xc8] sm:$0xff] %vm3780, %v3682
      %3807 = vst.msk [vmem:[%s206 + $0xd0] sm:$0xff] %vm3780, %v3687
      %3808 = vst.msk [vmem:[%s206 + $0xd8] sm:$0xff] %vm3780, %v3690
      %3809 = vst.msk [vmem:[%s206 + $0xe0] sm:$0xff] %vm3780, %v3695
      %3810 = vst.msk [vmem:[%s206 + $0xe8] sm:$0xff] %vm3780, %v3698
      %3811 = vst.msk [vmem:[%s206 + $0xf0] sm:$0xff] %vm3780, %v3703
      %3812 = vst.msk [vmem:[%s206 + $0xf8] sm:$0xff] %vm3780, %v3706
      %3813 = vst.msk [vmem:[%s206 + $0x100] sm:$0xff] %vm3780, %v3711
      %3814 = vst.msk [vmem:[%s206 + $0x108] sm:$0xff] %vm3780, %v3714
      %3815 = vst.msk [vmem:[%s206 + $0x110] sm:$0xff] %vm3780, %v3719
      %3816 = vst.msk [vmem:[%s206 + $0x118] sm:$0xff] %vm3780, %v3722
      %3817 = vst.msk [vmem:[%s206 + $0x120] sm:$0xff] %vm3780, %v3727
      %3818 = vst.msk [vmem:[%s206 + $0x128] sm:$0xff] %vm3780, %v3730
      %3819 = vst.msk [vmem:[%s206 + $0x130] sm:$0xff] %vm3780, %v3735
      %3820 = vst.msk [vmem:[%s206 + $0x138] sm:$0xff] %vm3780, %v3738
      %3821 = vst.msk [vmem:[%s206 + $0x140] sm:$0xff] %vm3780, %v3743
      %3822 = vst.msk [vmem:[%s206 + $0x148] sm:$0xff] %vm3780, %v3746
      %3823 = vst.msk [vmem:[%s206 + $0x150] sm:$0xff] %vm3780, %v3751
      %3824 = vst.msk [vmem:[%s206 + $0x158] sm:$0xff] %vm3780, %v3754
      %3825 = vst.msk [vmem:[%s206 + $0x160] sm:$0xff] %vm3780, %v3759
      %3826 = vst.msk [vmem:[%s206 + $0x168] sm:$0xff] %vm3780, %v3762
      %3827 = vst.msk [vmem:[%s206 + $0x170] sm:$0xff] %vm3780, %v3767
      %3828 = vst.msk [vmem:[%s206 + $0x178] sm:$0xff] %vm3780, %v3770
      %3829 = vst.msk [vmem:[%s206 + $0x180] sm:$0xff] %vm3780, %v3775
      %s3830 = smul.u32 49, %s21
      %p3831 = scmp.lt.s32.totalorder %s3830, 97
      %s3832 = scalar_select %p3831, %s3830, 97
      %s3833 = smul.addr %s3832, 8
      %s3834 = scalar_lea.vmem %s4, %s3833
      // Predicated region
      $region33: #{tpu_custom_call.1} parent=31 // pred_check
        %p3835 = pneg %p114
      $region34: #{tpu_custom_call.1} parent=31 // pred_check_branch
        %3837 = sbr.rel (%p3835) target = $region36
      $region35: #{tpu_custom_call.1} parent=31 // pred_region
        %s3838 = smul.u32 49, %s21
      $region36: #{tpu_custom_call.1} parent=31 // pred_fallthru
        _
    $region32: #{tpu_custom_call.1} parent=5 // pred_fallthru
      _
    %p3839 = scmp.le.s32.totalorder 2, %s16
    // Predicated region
    $region37: #{tpu_custom_call.1} parent=5 // pred_check
      %p3840 = pneg %p3839
    $region38: #{tpu_custom_call.1} parent=5 // pred_check_branch
      %3842 = sbr.rel (%p3840) target = $region40
    $region39: #{tpu_custom_call.1} parent=5 // pred_region
      %s3843 = ssub.s32 %s16, 2
      // Predicated region
      $region41: #{tpu_custom_call.1} parent=39 // pred_check
        %p3844 = pneg %p120
      $region42: #{tpu_custom_call.1} parent=39 // pred_check_branch
        %3846 = sbr.rel (%p3844) target = $region44
      $region43: #{tpu_custom_call.1} parent=39 // pred_region
        %s3847 = smul.u32 49, %s22
        %p3848 = scmp.lt.s32.totalorder %s3847, 97
        %s3849 = scalar_select %p3848, %s3847, 97
        %s3850 = smul.addr %s3849, 8
        %s3851 = scalar_lea.vmem %s4, %s3850
      $region44: #{tpu_custom_call.1} parent=39 // pred_fallthru
        _
    $region40: #{tpu_custom_call.1} parent=5 // pred_fallthru
      _
  $region6: #{tpu_custom_call.1} parent=0 // loop_footer
    %s20 = sadd.s32 1, %s16
  $region7: #{tpu_custom_call.1} parent=0 // loop_footer_branch
    %15 = sbr.rel target = $region3
  $region8: #{tpu_custom_call.1} parent=0 // loop_exit
    _

</llo_original>
